<compile_context>
chip_gen: v7x
topology: tpu7x:2x2x1
jax: 0.10.0
libtpu: 0.0.40
codegen_flags: <defaults>
</compile_context>

<pallas_src>
import functools
import math

import numpy as np
import jax
import jax.numpy as jnp
from jax import lax
from jax.experimental import pallas as pl
from jax.experimental.pallas import tpu as pltpu

VMEM_LIMIT = 32 * 1024 * 1024   # safe explicit scoped-VMEM limit on v5e/v6e/v7x


def _round_up(x, m):
    return ((x + m - 1) // m) * m


# -----------------------------------------------------------------------------
# Generic tiled projection matmul (1x1 conv / linear), bias + optional ReLU fused
# -----------------------------------------------------------------------------
def _proj_kernel(x_ref, w_ref, b_ref, o_ref, *, apply_relu):
    acc = jnp.dot(x_ref[...], w_ref[...], preferred_element_type=jnp.float32)
    acc = acc + b_ref[...]
    if apply_relu:
        acc = jnp.maximum(acc, 0.0)
    o_ref[...] = acc


def matmul_bias(x, w, b, *, apply_relu=False, tile_m=1024):
    """[M, K] @ [K, N] + b, bf16 operands / f32 accumulation, tiled over M."""
    m, k = x.shape
    n = w.shape[1]
    tm = _round_up(m, 8) if m <= tile_m else tile_m
    m_pad = _round_up(m, tm)
    xp = x if m_pad == m else jnp.pad(x, ((0, m_pad - m), (0, 0)))
    out = pl.pallas_call(
        functools.partial(_proj_kernel, apply_relu=apply_relu),
        out_shape=jax.ShapeDtypeStruct((m_pad, n), jnp.float32),
        grid=(m_pad // tm,),
        in_specs=[
            pl.BlockSpec((tm, k), lambda i: (i, 0)),
            pl.BlockSpec((k, n), lambda i: (0, 0)),
            pl.BlockSpec((1, n), lambda i: (0, 0)),
        ],
        out_specs=pl.BlockSpec((tm, n), lambda i: (i, 0)),
        compiler_params=pltpu.CompilerParams(
            dimension_semantics=("parallel",),
            vmem_limit_bytes=VMEM_LIMIT),
    )(xp.astype(jnp.bfloat16), w.astype(jnp.bfloat16),
      b.reshape(1, n).astype(jnp.float32))
    return out[:m]


# -----------------------------------------------------------------------------
# AFP masked cross-attention (whole batch in one kernel, geo add fused)
# -----------------------------------------------------------------------------
def _afp_kernel(qry_ref, geo_ref, kv_ref, m_ref, o_ref, *, scale):
    # qry: [1, Nq, D] f32, geo: [B, 1, D] f32, kv: [B, L, D] bf16, m: [B, 1, L]
    q = qry_ref[...] + geo_ref[...]                                   # [B, Nq, D]
    kv = kv_ref[...]
    s = lax.dot_general(q.astype(jnp.bfloat16), kv,
                        (((2,), (2,)), ((0,), (0,))),
                        preferred_element_type=jnp.float32) * scale   # [B, Nq, L]
    # NOTE: additive mask; an all-masked row gives a uniform softmax instead of
    # PyTorch's masked_fill(-inf) NaN (never happens for non-constant images).
    s = s + (m_ref[...] - 1.0) * 1e9
    s = s - jnp.max(s, axis=-1, keepdims=True)
    e = jnp.exp(s)
    denom = jnp.sum(e, axis=-1, keepdims=True)
    o = lax.dot_general(e.astype(jnp.bfloat16), kv,
                        (((2,), (1,)), ((0,), (0,))),
                        preferred_element_type=jnp.float32)           # [B, Nq, D]
    o_ref[...] = o * pl.reciprocal(denom, approx=True)


def afp_attention(queries, geo_emb, kv, mask):
    # TODO(synk): for very large key counts (L), tile the key axis with an
    # online-softmax accumulator; L fits comfortably in VMEM at these scales.
    bsz, l, d = kv.shape
    nq = queries.shape[0]
    scale = 1.0 / math.sqrt(d)
    return pl.pallas_call(
        functools.partial(_afp_kernel, scale=scale),
        out_shape=jax.ShapeDtypeStruct((bsz, nq, d), jnp.float32),
        compiler_params=pltpu.CompilerParams(vmem_limit_bytes=VMEM_LIMIT),
    )(queries.reshape(1, nq, d).astype(jnp.float32),
      geo_emb.reshape(bsz, 1, d).astype(jnp.float32),
      kv.astype(jnp.bfloat16),
      mask.astype(jnp.float32))


# -----------------------------------------------------------------------------
# Fused ISD per-scale kernel: (tokens + geo) -> cross-attn on IDRs -> residual
# -> 1-channel head, with a lane-dense [B, L] output.  Tiled over tokens.
# -----------------------------------------------------------------------------
def _isd_kernel(tok_ref, geo_ref, idr_ref, hw_ref, hb_ref, o_ref, *, scale):
    p = tok_ref[...].astype(jnp.float32) + geo_ref[...]               # [B, TL, D]
    idr = idr_ref[...]                                                # [B, Nq, D] bf16
    s = lax.dot_general(p.astype(jnp.bfloat16), idr,
                        (((2,), (2,)), ((0,), (0,))),
                        preferred_element_type=jnp.float32) * scale   # [B, TL, Nq]
    s = s - jnp.max(s, axis=-1, keepdims=True)
    e = jnp.exp(s)
    denom = jnp.sum(e, axis=-1, keepdims=True)
    attn = lax.dot_general(e.astype(jnp.bfloat16), idr,
                           (((2,), (1,)), ((0,), (0,))),
                           preferred_element_type=jnp.float32)        # [B, TL, D]
    attn = attn * pl.reciprocal(denom, approx=True)
    hfeat = p + attn
    # head: reduction over D -> lane-dense [B, TL] store (no N=1 matmul output)
    o = jnp.sum(hfeat * hw_ref[...][None, :, :], axis=-1)             # [B, TL]
    o_ref[...] = o + hb_ref[...]


def isd_fused(tok, geo_emb, idr, head_w, head_b, *, tile_l=2048):
    bsz, l, d = tok.shape
    nq = idr.shape[1]
    tl = _round_up(l, 8) if l <= tile_l else tile_l       # 2048 is a 128-multiple
    l_pad = _round_up(l, tl)
    tokp = tok if l_pad == l else jnp.pad(tok, ((0, 0), (0, l_pad - l), (0, 0)))
    scale = 1.0 / math.sqrt(d)
    out = pl.pallas_call(
        functools.partial(_isd_kernel, scale=scale),
        out_shape=jax.ShapeDtypeStruct((bsz, l_pad), jnp.float32),
        grid=(l_pad // tl,),
        in_specs=[
            pl.BlockSpec((bsz, tl, d), lambda i: (0, i, 0)),
            pl.BlockSpec((bsz, 1, d), lambda i: (0, 0, 0)),
            pl.BlockSpec((bsz, nq, d), lambda i: (0, 0, 0)),
            pl.BlockSpec((1, d), lambda i: (0, 0)),
            pl.BlockSpec((1, 1), lambda i: (0, 0)),
        ],
        out_specs=pl.BlockSpec((bsz, tl), lambda i: (0, i)),
        compiler_params=pltpu.CompilerParams(
            dimension_semantics=("parallel",),
            vmem_limit_bytes=VMEM_LIMIT),
    )(tokp.astype(jnp.bfloat16),
      geo_emb.reshape(bsz, 1, d).astype(jnp.float32),
      idr.astype(jnp.bfloat16),
      head_w.reshape(1, d).astype(jnp.float32),
      head_b.reshape(1, 1).astype(jnp.float32))
    return out[:, :l]


# -----------------------------------------------------------------------------
# attn_mask = image[:, :1] > image[:, :1].min()   (global min, as in PyTorch)
# -----------------------------------------------------------------------------
def _gt_min_mask_kernel(x_ref, o_ref):
    x = x_ref[...]
    mn = jnp.min(x)
    o_ref[...] = (x > mn).astype(jnp.float32)


def gt_min_mask(x_b_hw):
    return pl.pallas_call(
        _gt_min_mask_kernel,
        out_shape=jax.ShapeDtypeStruct(x_b_hw.shape, jnp.float32),
        compiler_params=pltpu.CompilerParams(vmem_limit_bytes=VMEM_LIMIT),
    )(x_b_hw.astype(jnp.float32))


# -----------------------------------------------------------------------------
# Separable align-corners bilinear resize (exp fused into the H-side matmul).
# -----------------------------------------------------------------------------
def _hresize_kernel(a_ref, x_ref, o_ref, *, apply_exp):
    x = x_ref[...]                             # [Hi, tn] f32
    if apply_exp:
        x = jnp.exp(x)
    o_ref[...] = jnp.dot(a_ref[...], x.astype(jnp.bfloat16),
                         preferred_element_type=jnp.float32)


def _bilinear_matrix(n_out, n_in):
    """Interpolation matrix matching F.interpolate(bilinear, align_corners=True)."""
    a = np.zeros((n_out, n_in), np.float32)
    for i in range(n_out):
        src = i * (n_in - 1) / (n_out - 1) if n_out > 1 else 0.0
        i0 = min(int(np.floor(src)), n_in - 1)
        i1 = min(i0 + 1, n_in - 1)
        w1 = src - i0
        a[i, i0] += 1.0 - w1
        a[i, i1] += w1
    return jnp.asarray(a)


def _hresize(a_mat, x1, apply_exp, *, tile_n=4096):
    ho, hi = a_mat.shape
    _, ncols = x1.shape
    tn = _round_up(ncols, 128) if ncols <= tile_n else tile_n
    n_pad = _round_up(ncols, tn)
    xp = x1 if n_pad == ncols else jnp.pad(x1, ((0, 0), (0, n_pad - ncols)))
    out = pl.pallas_call(
        functools.partial(_hresize_kernel, apply_exp=apply_exp),
        out_shape=jax.ShapeDtypeStruct((ho, n_pad), jnp.float32),
        grid=(n_pad // tn,),
        in_specs=[
            pl.BlockSpec((ho, hi), lambda i: (0, 0)),
            pl.BlockSpec((hi, tn), lambda i: (0, i)),
        ],
        out_specs=pl.BlockSpec((ho, tn), lambda i: (0, i)),
        compiler_params=pltpu.CompilerParams(
            dimension_semantics=("parallel",),
            vmem_limit_bytes=VMEM_LIMIT),
    )(a_mat.astype(jnp.bfloat16), xp.astype(jnp.float32))
    return out[:, :ncols]


def resize_bilinear(x, out_hw, apply_exp=False):
    """x: [B, C, Hi, Wi] -> [B, C, Ho, Wo], align_corners=True bilinear."""
    b, c, hi, wi = x.shape
    ho, wo = out_hw
    bc = b * c
    a_mat = _bilinear_matrix(ho, hi)                  # [Ho, Hi]
    b_mat = _bilinear_matrix(wo, wi)                  # [Wo, Wi]
    # H-side: fold B*C*Wi into the lane axis -> single wide matmul, exp fused.
    x1 = jnp.transpose(x, (2, 0, 1, 3)).reshape(hi, bc * wi)
    t = _hresize(a_mat, x1, apply_exp)                # [Ho, BC*Wi]
    # W-side: [BC*Ho, Wi] @ [Wi, Wo] through the generic tiled matmul
    # (weight pre-transposed; zero bias, no relu).
    t2 = jnp.transpose(t.reshape(ho, bc, wi), (1, 0, 2)).reshape(bc * ho, wi)
    y = matmul_bias(t2, jnp.transpose(b_mat), jnp.zeros((wo,), jnp.float32))
    return y.reshape(b, c, ho, wo)


# -----------------------------------------------------------------------------
# JAX glue (pooling / nearest gather / layout transposes / parameter setup)
# -----------------------------------------------------------------------------
def conv1x1(x, w, b, *, relu=False):
    """1x1 conv on NCHW via the tiled Pallas matmul (ReLU fused in-kernel)."""
    bsz, cin, h, wdt = x.shape
    xm = jnp.transpose(x, (0, 2, 3, 1)).reshape(bsz * h * wdt, cin)
    y = matmul_bias(xm, w, b, apply_relu=relu)
    return jnp.transpose(y.reshape(bsz, h, wdt, -1), (0, 3, 1, 2))


def avgpool2(x):
    bsz, c, h, w = x.shape
    return x.reshape(bsz, c, h // 2, 2, w // 2, 2).mean(axis=(3, 5))


def nearest_resize(x, out_hw):
    """F.interpolate(mode='nearest') equivalent (pure gather glue)."""
    _, _, hi, wi = x.shape
    ho, wo = out_hw
    ri = (jnp.arange(ho) * hi // ho).astype(jnp.int32)
    ci = (jnp.arange(wo) * wi // wo).astype(jnp.int32)
    return x[:, :, ri][:, :, :, ci]


# ----------------------- synthetic sub-modules -------------------------------
EMBED_DIMS = (8, 16, 32)   # encoder channels at /2, /4, /8
HIDDEN = 32                # decoder / AFP / ISD hidden dim
NUM_QUERIES = 8
AFP_MIN_RESOLUTION = 1     # len(embed_dims) - num_resolutions


def init_params(key):
    p = {}

    def lin(key, cin, cout, scale=0.1):
        k1, k2 = jax.random.split(key)
        return (scale * jax.random.normal(k1, (cin, cout), jnp.float32),
                scale * jax.random.normal(k2, (cout,), jnp.float32))

    keys = jax.random.split(key, 32)
    ki = iter(keys)
    cin = 3
    p["enc"] = []
    for c in EMBED_DIMS:
        p["enc"].append(lin(next(ki), cin, c))
        cin = c
    p["dec_proj"] = [lin(next(ki), c, HIDDEN) for c in EMBED_DIMS[::-1]]
    p["fpn_proj"] = [lin(next(ki), c, HIDDEN) for c in EMBED_DIMS[::-1]]
    p["queries"] = [
        0.1 * jax.random.normal(next(ki), (NUM_QUERIES, HIDDEN), jnp.float32)
        for _ in range(len(EMBED_DIMS) - AFP_MIN_RESOLUTION)
    ]
    p["afp_geo"] = lin(next(ki), 4, HIDDEN)
    p["isd_geo"] = lin(next(ki), 4, HIDDEN)
    p["head"] = [
        lin(next(ki), HIDDEN, 1)
        for _ in range(len(EMBED_DIMS) - AFP_MIN_RESOLUTION)
    ]
    return p


def pixel_encoder(image, params):
    feats = []
    x = image
    for (w, b) in params["enc"]:
        x = avgpool2(x)
        x = conv1x1(x, w, b, relu=True)        # ReLU fused in the Pallas kernel
        feats.append(x)
    return tuple(feats)   # fine -> coarse (inverted by IDiscERP.forward)


def pixel_decoder(encoder_outputs, params):
    fpn_outputs, decoder_outputs = [], []
    for i, f in enumerate(encoder_outputs):    # coarse -> fine
        wd, bd = params["dec_proj"][i]
        wf, bf = params["fpn_proj"][i]
        decoder_outputs.append(conv1x1(f, wd, bd, relu=True))
        fpn_outputs.append(conv1x1(f, wf, bf, relu=True))
    return tuple(fpn_outputs), tuple(decoder_outputs)


def afp(decoder_outputs, lat_range, long_range, attn_masks, params):
    geo = jnp.concatenate([lat_range, long_range], axis=-1)          # [B, 4]
    gw, gb = params["afp_geo"]
    geo_emb = matmul_bias(geo, gw, gb)                               # [B, D]
    idrs = []
    for i, f in enumerate(decoder_outputs):
        bsz, d, h, w = f.shape
        kv = jnp.transpose(f, (0, 2, 3, 1)).reshape(bsz, h * w, d)
        if attn_masks is not None:
            m = attn_masks[i].reshape(bsz, 1, h * w)
        else:
            m = jnp.ones((bsz, 1, h * w), jnp.float32)
        idrs.append(afp_attention(params["queries"][i], geo_emb, kv, m))
    return tuple(idrs)


def isd(fpn_outputs, idrs, lat_range, long_range, params):
    geo = jnp.concatenate([lat_range, long_range], axis=-1)
    gw, gb = params["isd_geo"]
    geo_emb = matmul_bias(geo, gw, gb)                               # [B, D]
    outs = []
    for i, f in enumerate(fpn_outputs):
        bsz, d, h, w = f.shape
        tok = jnp.transpose(f, (0, 2, 3, 1)).reshape(bsz, h * w, d)
        hw_, hb_ = params["head"][i]
        y = isd_fused(tok, geo_emb, idrs[i], hw_, hb_)               # [B, H*W]
        outs.append(y.reshape(bsz, 1, h, w))
    return outs


# -----------------------------------------------------------------------------
# IDiscERP.forward (gt=None, apply_attn_mask=True, depth / C==1 branch)
# -----------------------------------------------------------------------------
def idisc_erp_forward(image, lat_range, long_range, params):
    losses = {"opt": {}, "stat": {}}
    original_shape = image.shape[-2:]

    encoder_outputs = pixel_encoder(image, params)
    encoder_outputs = tuple(encoder_outputs[::-1])                   # invert order
    fpn_outputs, decoder_outputs = pixel_decoder(encoder_outputs, params)
    decoder_outputs = tuple(decoder_outputs[AFP_MIN_RESOLUTION:])    # filter
    fpn_outputs = tuple(fpn_outputs[AFP_MIN_RESOLUTION:])

    # attn_mask = image[:, :1] > image[:, :1].min()  (global min, Pallas kernel)
    bsz, _, h, w = image.shape
    mask_flat = gt_min_mask(image[:, 0].reshape(bsz, h * w))
    attn_mask = mask_flat.reshape(bsz, 1, h, w)
    attn_masks = [nearest_resize(attn_mask, o.shape[-2:]) for o in decoder_outputs]

    idrs = afp(decoder_outputs, lat_range, long_range, attn_masks, params)
    outs = isd(fpn_outputs, idrs, lat_range, long_range, params)

    target_hw = outs[-1].shape[-2:]
    out_lst = []
    for o in outs:
        # out.shape[1] == 1  ->  interpolate(exp(out), bilinear, align_corners=True)
        out_lst.append(resize_bilinear(o, target_hw, apply_exp=True))
    # TODO(synk): the C==4 branch (normalize_normals + bicubic final resize) is
    # not exercised because the synthetic ISD head emits 1 channel (depth).
    out = jnp.mean(jnp.stack(out_lst, axis=0), axis=0)
    out = resize_bilinear(out, original_shape, apply_exp=False)      # bilinear, C==1

    # gt is None -> loss module is never evaluated; losses['opt'] stays empty.
    return out, losses, {"outs": outs, "queries": idrs}


# -----------------------------------------------------------------------------
if __name__ == "__main__":
    key = jax.random.PRNGKey(0)
    k_img, k_lat, k_long, k_par = jax.random.split(key, 4)

    B, C, H, W = 2, 3, 16, 16
    image = jax.random.normal(k_img, (B, C, H, W), jnp.float32)
    lat_range = jax.random.uniform(k_lat, (B, 2), jnp.float32, -1.0, 1.0)
    long_range = jax.random.uniform(k_long, (B, 2), jnp.float32, -1.0, 1.0)

    params = init_params(k_par)

    forward = jax.jit(idisc_erp_forward)
    out, losses, aux = forward(image, lat_range, long_range, params)
    out = jax.block_until_ready(out)

    assert out.shape == (B, 1, H, W), out.shape
    assert bool(jnp.all(jnp.isfinite(out)))
    print("KERNEL_OK")
</pallas_src>

<mosaic_0001>
module attributes {stable_mosaic.version = 11 : i64} {
  func.func @_proj_kernel(%arg0: i32, %arg1: memref<128x3xbf16, #tpu.memory_space<vmem>>, %arg2: memref<3x8xbf16, #tpu.memory_space<vmem>>, %arg3: memref<1x8xf32, #tpu.memory_space<vmem>>, %arg4: memref<128x8xf32, #tpu.memory_space<vmem>>) attributes {dimension_semantics = [#tpu.dimension_semantics<parallel>], iteration_bounds = array<i64: 1>, scalar_prefetch = 0 : i64, scratch_operands = 0 : i64, tpu.core_type = #tpu.core_type<tc>, window_params = [{transform_indices = @transform_0, window_bounds = array<i64: 128, 3>}, {pipeline_mode = #tpu.pipeline_mode<synchronous>, transform_indices = @transform_1, window_bounds = array<i64: 3, 8>}, {pipeline_mode = #tpu.pipeline_mode<synchronous>, transform_indices = @transform_2, window_bounds = array<i64: 1, 8>}, {transform_indices = @transform_3, window_bounds = array<i64: 128, 8>}]} {
    %c0 = arith.constant 0 : index
    %c0_0 = arith.constant 0 : index
    %0 = vector.load %arg1[%c0, %c0_0] : memref<128x3xbf16, #tpu.memory_space<vmem>>, vector<128x3xbf16>
    %c0_1 = arith.constant 0 : index
    %c0_2 = arith.constant 0 : index
    %1 = vector.load %arg2[%c0_1, %c0_2] : memref<3x8xbf16, #tpu.memory_space<vmem>>, vector<3x8xbf16>
    %cst = arith.constant dense<0.000000e+00> : vector<128x8xf32>
    %2 = tpu.matmul %0, %1, %cst {dimension_numbers = #tpu.dot_dimension_numbers<[1], [0], [0], [1], [0, 0, 1, 1], [], []>} : vector<128x3xbf16>, vector<3x8xbf16>, vector<128x8xf32> -> vector<128x8xf32>
    %c0_3 = arith.constant 0 : index
    %c0_4 = arith.constant 0 : index
    %3 = vector.load %arg3[%c0_3, %c0_4] : memref<1x8xf32, #tpu.memory_space<vmem>>, vector<1x8xf32>
    %4 = vector.broadcast %3 : vector<1x8xf32> to vector<128x8xf32>
    %5 = arith.addf %2, %4 : vector<128x8xf32>
    %cst_5 = arith.constant 0.000000e+00 : f32
    %6 = vector.broadcast %cst_5 : f32 to vector<128x8xf32>
    %7 = arith.maximumf %5, %6 : vector<128x8xf32>
    %c0_6 = arith.constant 0 : index
    %c0_7 = arith.constant 0 : index
    %8 = vector.load %arg4[%c0_6, %c0_7] : memref<128x8xf32, #tpu.memory_space<vmem>>, vector<128x8xf32>
    tpu.vector_store %arg4[%c0_6, %c0_7], %7 {strides = array<i32>} : memref<128x8xf32, #tpu.memory_space<vmem>>, vector<128x8xf32>,
    return
  }
  func.func @transform_0(%arg0: i32) -> (i32, i32) {
    %c0_i32 = arith.constant 0 : i32
    %c0_i32_0 = arith.constant 0 : i32
    return %arg0, %c0_i32 : i32, i32
  }
  func.func @transform_1(%arg0: i32) -> (i32, i32) {
    %c0_i32 = arith.constant 0 : i32
    %c0_i32_0 = arith.constant 0 : i32
    %c0_i32_1 = arith.constant 0 : i32
    return %c0_i32, %c0_i32_0 : i32, i32
  }
  func.func @transform_2(%arg0: i32) -> (i32, i32) {
    %c0_i32 = arith.constant 0 : i32
    %c0_i32_0 = arith.constant 0 : i32
    %c0_i32_1 = arith.constant 0 : i32
    return %c0_i32, %c0_i32_0 : i32, i32
  }
  func.func @transform_3(%arg0: i32) -> (i32, i32) {
    %c0_i32 = arith.constant 0 : i32
    %c0_i32_0 = arith.constant 0 : i32
    return %arg0, %c0_i32 : i32, i32
  }
}

module attributes {stable_mosaic.version = 11 : i64} {
  func.func @_proj_kernel(%arg0: i32, %arg1: memref<32x8xbf16, #tpu.memory_space<vmem>>, %arg2: memref<8x16xbf16, #tpu.memory_space<vmem>>, %arg3: memref<1x16xf32, #tpu.memory_space<vmem>>, %arg4: memref<32x16xf32, #tpu.memory_space<vmem>>) attributes {dimension_semantics = [#tpu.dimension_semantics<parallel>], iteration_bounds = array<i64: 1>, scalar_prefetch = 0 : i64, scratch_operands = 0 : i64, tpu.core_type = #tpu.core_type<tc>, window_params = [{transform_indices = @transform_0, window_bounds = array<i64: 32, 8>}, {pipeline_mode = #tpu.pipeline_mode<synchronous>, transform_indices = @transform_1, window_bounds = array<i64: 8, 16>}, {pipeline_mode = #tpu.pipeline_mode<synchronous>, transform_indices = @transform_2, window_bounds = array<i64: 1, 16>}, {transform_indices = @transform_3, window_bounds = array<i64: 32, 16>}]} {
    %c0 = arith.constant 0 : index
    %c0_0 = arith.constant 0 : index
    %0 = vector.load %arg1[%c0, %c0_0] : memref<32x8xbf16, #tpu.memory_space<vmem>>, vector<32x8xbf16>
    %c0_1 = arith.constant 0 : index
    %c0_2 = arith.constant 0 : index
    %1 = vector.load %arg2[%c0_1, %c0_2] : memref<8x16xbf16, #tpu.memory_space<vmem>>, vector<8x16xbf16>
    %cst = arith.constant dense<0.000000e+00> : vector<32x16xf32>
    %2 = tpu.matmul %0, %1, %cst {dimension_numbers = #tpu.dot_dimension_numbers<[1], [0], [0], [1], [0, 0, 1, 1], [], []>} : vector<32x8xbf16>, vector<8x16xbf16>, vector<32x16xf32> -> vector<32x16xf32>
    %c0_3 = arith.constant 0 : index
    %c0_4 = arith.constant 0 : index
    %3 = vector.load %arg3[%c0_3, %c0_4] : memref<1x16xf32, #tpu.memory_space<vmem>>, vector<1x16xf32>
    %4 = vector.broadcast %3 : vector<1x16xf32> to vector<32x16xf32>
    %5 = arith.addf %2, %4 : vector<32x16xf32>
    %cst_5 = arith.constant 0.000000e+00 : f32
    %6 = vector.broadcast %cst_5 : f32 to vector<32x16xf32>
    %7 = arith.maximumf %5, %6 : vector<32x16xf32>
    %c0_6 = arith.constant 0 : index
    %c0_7 = arith.constant 0 : index
    %8 = vector.load %arg4[%c0_6, %c0_7] : memref<32x16xf32, #tpu.memory_space<vmem>>, vector<32x16xf32>
    tpu.vector_store %arg4[%c0_6, %c0_7], %7 {strides = array<i32>} : memref<32x16xf32, #tpu.memory_space<vmem>>, vector<32x16xf32>,
    return
  }
  func.func @transform_0(%arg0: i32) -> (i32, i32) {
    %c0_i32 = arith.constant 0 : i32
    %c0_i32_0 = arith.constant 0 : i32
    return %arg0, %c0_i32 : i32, i32
  }
  func.func @transform_1(%arg0: i32) -> (i32, i32) {
    %c0_i32 = arith.constant 0 : i32
    %c0_i32_0 = arith.constant 0 : i32
    %c0_i32_1 = arith.constant 0 : i32
    return %c0_i32, %c0_i32_0 : i32, i32
  }
  func.func @transform_2(%arg0: i32) -> (i32, i32) {
    %c0_i32 = arith.constant 0 : i32
    %c0_i32_0 = arith.constant 0 : i32
    %c0_i32_1 = arith.constant 0 : i32
    return %c0_i32, %c0_i32_0 : i32, i32
  }
  func.func @transform_3(%arg0: i32) -> (i32, i32) {
    %c0_i32 = arith.constant 0 : i32
    %c0_i32_0 = arith.constant 0 : i32
    return %arg0, %c0_i32 : i32, i32
  }
}

module attributes {stable_mosaic.version = 11 : i64} {
  func.func @_proj_kernel(%arg0: i32, %arg1: memref<32x16xbf16, #tpu.memory_space<vmem>>, %arg2: memref<16x32xbf16, #tpu.memory_space<vmem>>, %arg3: memref<1x32xf32, #tpu.memory_space<vmem>>, %arg4: memref<32x32xf32, #tpu.memory_space<vmem>>) attributes {dimension_semantics = [#tpu.dimension_semantics<parallel>], iteration_bounds = array<i64: 1>, scalar_prefetch = 0 : i64, scratch_operands = 0 : i64, tpu.core_type = #tpu.core_type<tc>, window_params = [{transform_indices = @transform_0, window_bounds = array<i64: 32, 16>}, {pipeline_mode = #tpu.pipeline_mode<synchronous>, transform_indices = @transform_1, window_bounds = array<i64: 16, 32>}, {pipeline_mode = #tpu.pipeline_mode<synchronous>, transform_indices = @transform_2, window_bounds = array<i64: 1, 32>}, {transform_indices = @transform_3, window_bounds = array<i64: 32, 32>}]} {
    %c0 = arith.constant 0 : index
    %c0_0 = arith.constant 0 : index
    %0 = vector.load %arg1[%c0, %c0_0] : memref<32x16xbf16, #tpu.memory_space<vmem>>, vector<32x16xbf16>
    %c0_1 = arith.constant 0 : index
    %c0_2 = arith.constant 0 : index
    %1 = vector.load %arg2[%c0_1, %c0_2] : memref<16x32xbf16, #tpu.memory_space<vmem>>, vector<16x32xbf16>
    %cst = arith.constant dense<0.000000e+00> : vector<32x32xf32>
    %2 = tpu.matmul %0, %1, %cst {dimension_numbers = #tpu.dot_dimension_numbers<[1], [0], [0], [1], [0, 0, 1, 1], [], []>} : vector<32x16xbf16>, vector<16x32xbf16>, vector<32x32xf32> -> vector<32x32xf32>
    %c0_3 = arith.constant 0 : index
    %c0_4 = arith.constant 0 : index
    %3 = vector.load %arg3[%c0_3, %c0_4] : memref<1x32xf32, #tpu.memory_space<vmem>>, vector<1x32xf32>
    %4 = vector.broadcast %3 : vector<1x32xf32> to vector<32x32xf32>
    %5 = arith.addf %2, %4 : vector<32x32xf32>
    %cst_5 = arith.constant 0.000000e+00 : f32
    %6 = vector.broadcast %cst_5 : f32 to vector<32x32xf32>
    %7 = arith.maximumf %5, %6 : vector<32x32xf32>
    %c0_6 = arith.constant 0 : index
    %c0_7 = arith.constant 0 : index
    %8 = vector.load %arg4[%c0_6, %c0_7] : memref<32x32xf32, #tpu.memory_space<vmem>>, vector<32x32xf32>
    tpu.vector_store %arg4[%c0_6, %c0_7], %7 {strides = array<i32>} : memref<32x32xf32, #tpu.memory_space<vmem>>, vector<32x32xf32>,
    return
  }
  func.func @transform_0(%arg0: i32) -> (i32, i32) {
    %c0_i32 = arith.constant 0 : i32
    %c0_i32_0 = arith.constant 0 : i32
    return %arg0, %c0_i32 : i32, i32
  }
  func.func @transform_1(%arg0: i32) -> (i32, i32) {
    %c0_i32 = arith.constant 0 : i32
    %c0_i32_0 = arith.constant 0 : i32
    %c0_i32_1 = arith.constant 0 : i32
    return %c0_i32, %c0_i32_0 : i32, i32
  }
  func.func @transform_2(%arg0: i32) -> (i32, i32) {
    %c0_i32 = arith.constant 0 : i32
    %c0_i32_0 = arith.constant 0 : i32
    %c0_i32_1 = arith.constant 0 : i32
    return %c0_i32, %c0_i32_0 : i32, i32
  }
  func.func @transform_3(%arg0: i32) -> (i32, i32) {
    %c0_i32 = arith.constant 0 : i32
    %c0_i32_0 = arith.constant 0 : i32
    return %arg0, %c0_i32 : i32, i32
  }
}

module attributes {stable_mosaic.version = 11 : i64} {
  func.func @_proj_kernel(%arg0: i32, %arg1: memref<8x4xbf16, #tpu.memory_space<vmem>>, %arg2: memref<4x32xbf16, #tpu.memory_space<vmem>>, %arg3: memref<1x32xf32, #tpu.memory_space<vmem>>, %arg4: memref<8x32xf32, #tpu.memory_space<vmem>>) attributes {dimension_semantics = [#tpu.dimension_semantics<parallel>], iteration_bounds = array<i64: 1>, scalar_prefetch = 0 : i64, scratch_operands = 0 : i64, tpu.core_type = #tpu.core_type<tc>, window_params = [{transform_indices = @transform_0, window_bounds = array<i64: 8, 4>}, {pipeline_mode = #tpu.pipeline_mode<synchronous>, transform_indices = @transform_1, window_bounds = array<i64: 4, 32>}, {pipeline_mode = #tpu.pipeline_mode<synchronous>, transform_indices = @transform_2, window_bounds = array<i64: 1, 32>}, {transform_indices = @transform_3, window_bounds = array<i64: 8, 32>}]} {
    %c0 = arith.constant 0 : index
    %c0_0 = arith.constant 0 : index
    %0 = vector.load %arg1[%c0, %c0_0] : memref<8x4xbf16, #tpu.memory_space<vmem>>, vector<8x4xbf16>
    %c0_1 = arith.constant 0 : index
    %c0_2 = arith.constant 0 : index
    %1 = vector.load %arg2[%c0_1, %c0_2] : memref<4x32xbf16, #tpu.memory_space<vmem>>, vector<4x32xbf16>
    %cst = arith.constant dense<0.000000e+00> : vector<8x32xf32>
    %2 = tpu.matmul %0, %1, %cst {dimension_numbers = #tpu.dot_dimension_numbers<[1], [0], [0], [1], [0, 0, 1, 1], [], []>} : vector<8x4xbf16>, vector<4x32xbf16>, vector<8x32xf32> -> vector<8x32xf32>
    %c0_3 = arith.constant 0 : index
    %c0_4 = arith.constant 0 : index
    %3 = vector.load %arg3[%c0_3, %c0_4] : memref<1x32xf32, #tpu.memory_space<vmem>>, vector<1x32xf32>
    %4 = vector.broadcast %3 : vector<1x32xf32> to vector<8x32xf32>
    %5 = arith.addf %2, %4 : vector<8x32xf32>
    %c0_5 = arith.constant 0 : index
    %c0_6 = arith.constant 0 : index
    %6 = vector.load %arg4[%c0_5, %c0_6] : memref<8x32xf32, #tpu.memory_space<vmem>>, vector<8x32xf32>
    tpu.vector_store %arg4[%c0_5, %c0_6], %5 {strides = array<i32>} : memref<8x32xf32, #tpu.memory_space<vmem>>, vector<8x32xf32>,
    return
  }
  func.func @transform_0(%arg0: i32) -> (i32, i32) {
    %c0_i32 = arith.constant 0 : i32
    %c0_i32_0 = arith.constant 0 : i32
    return %arg0, %c0_i32 : i32, i32
  }
  func.func @transform_1(%arg0: i32) -> (i32, i32) {
    %c0_i32 = arith.constant 0 : i32
    %c0_i32_0 = arith.constant 0 : i32
    %c0_i32_1 = arith.constant 0 : i32
    return %c0_i32, %c0_i32_0 : i32, i32
  }
  func.func @transform_2(%arg0: i32) -> (i32, i32) {
    %c0_i32 = arith.constant 0 : i32
    %c0_i32_0 = arith.constant 0 : i32
    %c0_i32_1 = arith.constant 0 : i32
    return %c0_i32, %c0_i32_0 : i32, i32
  }
  func.func @transform_3(%arg0: i32) -> (i32, i32) {
    %c0_i32 = arith.constant 0 : i32
    %c0_i32_0 = arith.constant 0 : i32
    return %arg0, %c0_i32 : i32, i32
  }
}

module attributes {stable_mosaic.version = 11 : i64} {
  func.func @_gt_min_mask_kernel(%arg0: memref<2x256xf32, #tpu.memory_space<vmem>>, %arg1: memref<2x256xf32, #tpu.memory_space<vmem>>) attributes {dimension_semantics = [], scalar_prefetch = 0 : i64, scratch_operands = 0 : i64, tpu.core_type = #tpu.core_type<tc>} {
    %c0 = arith.constant 0 : index
    %c0_0 = arith.constant 0 : index
    %0 = vector.load %arg0[%c0, %c0_0] : memref<2x256xf32, #tpu.memory_space<vmem>>, vector<2x256xf32>
    %1 = vector.shape_cast %0 : vector<2x256xf32> to vector<1x2x256xf32>
    %cst = arith.constant dense<0x7F800000> : vector<1xf32>
    %2 = vector.multi_reduction <minimumf>, %1, %cst [1, 2] : vector<1x2x256xf32> to vector<1xf32>
    %3 = vector.shape_cast %2 : vector<1xf32> to vector<1x1x1xf32>
    %4 = vector.extract %3[0, 0, 0] : f32 from vector<1x1x1xf32>
    %5 = vector.broadcast %4 : f32 to vector<2x256xf32>
    %6 = arith.cmpf ogt, %0, %5 : vector<2x256xf32>
    %7 = arith.extui %6 : vector<2x256xi1> to vector<2x256xi32>
    %8 = arith.sitofp %7 : vector<2x256xi32> to vector<2x256xf32>
    %c0_1 = arith.constant 0 : index
    %c0_2 = arith.constant 0 : index
    %9 = vector.load %arg1[%c0_1, %c0_2] : memref<2x256xf32, #tpu.memory_space<vmem>>, vector<2x256xf32>
    tpu.vector_store %arg1[%c0_1, %c0_2], %8 {strides = array<i32>} : memref<2x256xf32, #tpu.memory_space<vmem>>, vector<2x256xf32>,
    return
  }
}

module attributes {stable_mosaic.version = 11 : i64} {
  func.func @_afp_kernel(%arg0: memref<1x8x32xf32, #tpu.memory_space<vmem>>, %arg1: memref<2x1x32xf32, #tpu.memory_space<vmem>>, %arg2: memref<2x16x32xbf16, #tpu.memory_space<vmem>>, %arg3: memref<2x1x16xf32, #tpu.memory_space<vmem>>, %arg4: memref<2x8x32xf32, #tpu.memory_space<vmem>>) attributes {dimension_semantics = [], scalar_prefetch = 0 : i64, scratch_operands = 0 : i64, tpu.core_type = #tpu.core_type<tc>} {
    %c0 = arith.constant 0 : index
    %c0_0 = arith.constant 0 : index
    %c0_1 = arith.constant 0 : index
    %0 = vector.load %arg0[%c0, %c0_0, %c0_1] : memref<1x8x32xf32, #tpu.memory_space<vmem>>, vector<1x8x32xf32>
    %c0_2 = arith.constant 0 : index
    %c0_3 = arith.constant 0 : index
    %c0_4 = arith.constant 0 : index
    %1 = vector.load %arg1[%c0_2, %c0_3, %c0_4] : memref<2x1x32xf32, #tpu.memory_space<vmem>>, vector<2x1x32xf32>
    %2 = vector.broadcast %0 : vector<1x8x32xf32> to vector<2x8x32xf32>
    %3 = vector.broadcast %1 : vector<2x1x32xf32> to vector<2x8x32xf32>
    %4 = arith.addf %2, %3 : vector<2x8x32xf32>
    %c0_5 = arith.constant 0 : index
    %c0_6 = arith.constant 0 : index
    %c0_7 = arith.constant 0 : index
    %5 = vector.load %arg2[%c0_5, %c0_6, %c0_7] : memref<2x16x32xbf16, #tpu.memory_space<vmem>>, vector<2x16x32xbf16>
    %6 = arith.truncf %4 : vector<2x8x32xf32> to vector<2x8x32xbf16>
    %cst = arith.constant dense<0.000000e+00> : vector<2x8x16xf32>
    %7 = tpu.matmul %6, %5, %cst {dimension_numbers = #tpu.dot_dimension_numbers<[2], [2], [1], [1], [0, 0, 0, 1, 1, 1], [0], [0]>} : vector<2x8x32xbf16>, vector<2x16x32xbf16>, vector<2x8x16xf32> -> vector<2x8x16xf32>
    %cst_8 = arith.constant 0.176776692 : f32
    %8 = vector.broadcast %cst_8 : f32 to vector<2x8x16xf32>
    %9 = arith.mulf %7, %8 : vector<2x8x16xf32>
    %c0_9 = arith.constant 0 : index
    %c0_10 = arith.constant 0 : index
    %c0_11 = arith.constant 0 : index
    %10 = vector.load %arg3[%c0_9, %c0_10, %c0_11] : memref<2x1x16xf32, #tpu.memory_space<vmem>>, vector<2x1x16xf32>
    %cst_12 = arith.constant 1.000000e+00 : f32
    %11 = vector.broadcast %cst_12 : f32 to vector<2x1x16xf32>
    %12 = arith.subf %10, %11 : vector<2x1x16xf32>
    %cst_13 = arith.constant 1.000000e+09 : f32
    %13 = vector.broadcast %cst_13 : f32 to vector<2x1x16xf32>
    %14 = arith.mulf %12, %13 : vector<2x1x16xf32>
    %15 = vector.broadcast %14 : vector<2x1x16xf32> to vector<2x8x16xf32>
    %16 = arith.addf %9, %15 : vector<2x8x16xf32>
    %cst_14 = arith.constant dense<0xFF800000> : vector<2x8xf32>
    %17 = vector.multi_reduction <maximumf>, %16, %cst_14 [2] : vector<2x8x16xf32> to vector<2x8xf32>
    %18 = vector.shape_cast %17 : vector<2x8xf32> to vector<2x8x1xf32>
    %19 = vector.broadcast %18 : vector<2x8x1xf32> to vector<2x8x16xf32>
    %20 = arith.subf %16, %19 : vector<2x8x16xf32>
    %21 = math.exp %20 : vector<2x8x16xf32>
    %cst_15 = arith.constant dense<0.000000e+00> : vector<2x8xf32>
    %22 = vector.multi_reduction <add>, %21, %cst_15 [2] : vector<2x8x16xf32> to vector<2x8xf32>
    %23 = vector.shape_cast %22 : vector<2x8xf32> to vector<2x8x1xf32>
    %24 = arith.truncf %21 : vector<2x8x16xf32> to vector<2x8x16xbf16>
    %cst_16 = arith.constant dense<0.000000e+00> : vector<2x8x32xf32>
    %25 = tpu.matmul %24, %5, %cst_16 {dimension_numbers = #tpu.dot_dimension_numbers<[2], [1], [1], [2], [0, 0, 0, 1, 1, 2], [0], [0]>} : vector<2x8x16xbf16>, vector<2x16x32xbf16>, vector<2x8x32xf32> -> vector<2x8x32xf32>
    %26 = tpu.reciprocal %23 {approx = true} : vector<2x8x1xf32> -> vector<2x8x1xf32>
    %27 = vector.broadcast %26 : vector<2x8x1xf32> to vector<2x8x32xf32>
    %28 = arith.mulf %25, %27 : vector<2x8x32xf32>
    %c0_17 = arith.constant 0 : index
    %c0_18 = arith.constant 0 : index
    %c0_19 = arith.constant 0 : index
    %29 = vector.load %arg4[%c0_17, %c0_18, %c0_19] : memref<2x8x32xf32, #tpu.memory_space<vmem>>, vector<2x8x32xf32>
    tpu.vector_store %arg4[%c0_17, %c0_18, %c0_19], %28 {strides = array<i32>} : memref<2x8x32xf32, #tpu.memory_space<vmem>>, vector<2x8x32xf32>,
    return
  }
}

module attributes {stable_mosaic.version = 11 : i64} {
  func.func @_isd_kernel(%arg0: i32, %arg1: memref<2x16x32xbf16, #tpu.memory_space<vmem>>, %arg2: memref<2x1x32xf32, #tpu.memory_space<vmem>>, %arg3: memref<2x8x32xbf16, #tpu.memory_space<vmem>>, %arg4: memref<1x32xf32, #tpu.memory_space<vmem>>, %arg5: memref<1x1xf32, #tpu.memory_space<vmem>>, %arg6: memref<2x16xf32, #tpu.memory_space<vmem>>) attributes {dimension_semantics = [#tpu.dimension_semantics<parallel>], iteration_bounds = array<i64: 1>, scalar_prefetch = 0 : i64, scratch_operands = 0 : i64, tpu.core_type = #tpu.core_type<tc>, window_params = [{transform_indices = @transform_0, window_bounds = array<i64: 2, 16, 32>}, {pipeline_mode = #tpu.pipeline_mode<synchronous>, transform_indices = @transform_1, window_bounds = array<i64: 2, 1, 32>}, {pipeline_mode = #tpu.pipeline_mode<synchronous>, transform_indices = @transform_2, window_bounds = array<i64: 2, 8, 32>}, {pipeline_mode = #tpu.pipeline_mode<synchronous>, transform_indices = @transform_3, window_bounds = array<i64: 1, 32>}, {pipeline_mode = #tpu.pipeline_mode<synchronous>, transform_indices = @transform_4, window_bounds = array<i64: 1, 1>}, {transform_indices = @transform_5, window_bounds = array<i64: 2, 16>}]} {
    %c0 = arith.constant 0 : index
    %c0_0 = arith.constant 0 : index
    %c0_1 = arith.constant 0 : index
    %0 = vector.load %arg1[%c0, %c0_0, %c0_1] : memref<2x16x32xbf16, #tpu.memory_space<vmem>>, vector<2x16x32xbf16>
    %1 = arith.extf %0 : vector<2x16x32xbf16> to vector<2x16x32xf32>
    %c0_2 = arith.constant 0 : index
    %c0_3 = arith.constant 0 : index
    %c0_4 = arith.constant 0 : index
    %2 = vector.load %arg2[%c0_2, %c0_3, %c0_4] : memref<2x1x32xf32, #tpu.memory_space<vmem>>, vector<2x1x32xf32>
    %3 = vector.broadcast %2 : vector<2x1x32xf32> to vector<2x16x32xf32>
    %4 = arith.addf %1, %3 : vector<2x16x32xf32>
    %c0_5 = arith.constant 0 : index
    %c0_6 = arith.constant 0 : index
    %c0_7 = arith.constant 0 : index
    %5 = vector.load %arg3[%c0_5, %c0_6, %c0_7] : memref<2x8x32xbf16, #tpu.memory_space<vmem>>, vector<2x8x32xbf16>
    %6 = arith.truncf %4 : vector<2x16x32xf32> to vector<2x16x32xbf16>
    %cst = arith.constant dense<0.000000e+00> : vector<2x16x8xf32>
    %7 = tpu.matmul %6, %5, %cst {dimension_numbers = #tpu.dot_dimension_numbers<[2], [2], [1], [1], [0, 0, 0, 1, 1, 1], [0], [0]>} : vector<2x16x32xbf16>, vector<2x8x32xbf16>, vector<2x16x8xf32> -> vector<2x16x8xf32>
    %cst_8 = arith.constant 0.176776692 : f32
    %8 = vector.broadcast %cst_8 : f32 to vector<2x16x8xf32>
    %9 = arith.mulf %7, %8 : vector<2x16x8xf32>
    %cst_9 = arith.constant dense<0xFF800000> : vector<2x16xf32>
    %10 = vector.multi_reduction <maximumf>, %9, %cst_9 [2] : vector<2x16x8xf32> to vector<2x16xf32>
    %11 = vector.shape_cast %10 : vector<2x16xf32> to vector<2x16x1xf32>
    %12 = vector.broadcast %11 : vector<2x16x1xf32> to vector<2x16x8xf32>
    %13 = arith.subf %9, %12 : vector<2x16x8xf32>
    %14 = math.exp %13 : vector<2x16x8xf32>
    %cst_10 = arith.constant dense<0.000000e+00> : vector<2x16xf32>
    %15 = vector.multi_reduction <add>, %14, %cst_10 [2] : vector<2x16x8xf32> to vector<2x16xf32>
    %16 = vector.shape_cast %15 : vector<2x16xf32> to vector<2x16x1xf32>
    %17 = arith.truncf %14 : vector<2x16x8xf32> to vector<2x16x8xbf16>
    %cst_11 = arith.constant dense<0.000000e+00> : vector<2x16x32xf32>
    %18 = tpu.matmul %17, %5, %cst_11 {dimension_numbers = #tpu.dot_dimension_numbers<[2], [1], [1], [2], [0, 0, 0, 1, 1, 2], [0], [0]>} : vector<2x16x8xbf16>, vector<2x8x32xbf16>, vector<2x16x32xf32> -> vector<2x16x32xf32>
    %19 = tpu.reciprocal %16 {approx = true} : vector<2x16x1xf32> -> vector<2x16x1xf32>
    %20 = vector.broadcast %19 : vector<2x16x1xf32> to vector<2x16x32xf32>
    %21 = arith.mulf %18, %20 : vector<2x16x32xf32>
    %22 = arith.addf %4, %21 : vector<2x16x32xf32>
    %c0_12 = arith.constant 0 : index
    %c0_13 = arith.constant 0 : index
    %23 = vector.load %arg4[%c0_12, %c0_13] : memref<1x32xf32, #tpu.memory_space<vmem>>, vector<1x32xf32>
    %24 = vector.shape_cast %23 : vector<1x32xf32> to vector<1x1x32xf32>
    %25 = vector.broadcast %24 : vector<1x1x32xf32> to vector<2x16x32xf32>
    %26 = arith.mulf %22, %25 : vector<2x16x32xf32>
    %cst_14 = arith.constant dense<0.000000e+00> : vector<2x16xf32>
    %27 = vector.multi_reduction <add>, %26, %cst_14 [2] : vector<2x16x32xf32> to vector<2x16xf32>
    %c0_15 = arith.constant 0 : index
    %c0_16 = arith.constant 0 : index
    %28 = vector.load %arg5[%c0_15, %c0_16] : memref<1x1xf32, #tpu.memory_space<vmem>>, vector<1x1xf32>
    %29 = vector.broadcast %28 : vector<1x1xf32> to vector<2x16xf32>
    %30 = arith.addf %27, %29 : vector<2x16xf32>
    %c0_17 = arith.constant 0 : index
    %c0_18 = arith.constant 0 : index
    %31 = vector.load %arg6[%c0_17, %c0_18] : memref<2x16xf32, #tpu.memory_space<vmem>>, vector<2x16xf32>
    tpu.vector_store %arg6[%c0_17, %c0_18], %30 {strides = array<i32>} : memref<2x16xf32, #tpu.memory_space<vmem>>, vector<2x16xf32>,
    return
  }
  func.func @transform_0(%arg0: i32) -> (i32, i32, i32) {
    %c0_i32 = arith.constant 0 : i32
    %c0_i32_0 = arith.constant 0 : i32
    %c0_i32_1 = arith.constant 0 : i32
    return %c0_i32, %arg0, %c0_i32_0 : i32, i32, i32
  }
  func.func @transform_1(%arg0: i32) -> (i32, i32, i32) {
    %c0_i32 = arith.constant 0 : i32
    %c0_i32_0 = arith.constant 0 : i32
    %c0_i32_1 = arith.constant 0 : i32
    %c0_i32_2 = arith.constant 0 : i32
    return %c0_i32, %c0_i32_0, %c0_i32_1 : i32, i32, i32
  }
  func.func @transform_2(%arg0: i32) -> (i32, i32, i32) {
    %c0_i32 = arith.constant 0 : i32
    %c0_i32_0 = arith.constant 0 : i32
    %c0_i32_1 = arith.constant 0 : i32
    %c0_i32_2 = arith.constant 0 : i32
    return %c0_i32, %c0_i32_0, %c0_i32_1 : i32, i32, i32
  }
  func.func @transform_3(%arg0: i32) -> (i32, i32) {
    %c0_i32 = arith.constant 0 : i32
    %c0_i32_0 = arith.constant 0 : i32
    %c0_i32_1 = arith.constant 0 : i32
    return %c0_i32, %c0_i32_0 : i32, i32
  }
  func.func @transform_4(%arg0: i32) -> (i32, i32) {
    %c0_i32 = arith.constant 0 : i32
    %c0_i32_0 = arith.constant 0 : i32
    %c0_i32_1 = arith.constant 0 : i32
    return %c0_i32, %c0_i32_0 : i32, i32
  }
  func.func @transform_5(%arg0: i32) -> (i32, i32) {
    %c0_i32 = arith.constant 0 : i32
    %c0_i32_0 = arith.constant 0 : i32
    return %c0_i32, %arg0 : i32, i32
  }
}

module attributes {stable_mosaic.version = 11 : i64} {
  func.func @_hresize_kernel(%arg0: i32, %arg1: memref<8x4xbf16, #tpu.memory_space<vmem>>, %arg2: memref<4x128xf32, #tpu.memory_space<vmem>>, %arg3: memref<8x128xf32, #tpu.memory_space<vmem>>) attributes {dimension_semantics = [#tpu.dimension_semantics<parallel>], iteration_bounds = array<i64: 1>, scalar_prefetch = 0 : i64, scratch_operands = 0 : i64, tpu.core_type = #tpu.core_type<tc>, window_params = [{pipeline_mode = #tpu.pipeline_mode<synchronous>, transform_indices = @transform_0, window_bounds = array<i64: 8, 4>}, {transform_indices = @transform_1, window_bounds = array<i64: 4, 128>}, {transform_indices = @transform_2, window_bounds = array<i64: 8, 128>}]} {
    %c0 = arith.constant 0 : index
    %c0_0 = arith.constant 0 : index
    %0 = vector.load %arg2[%c0, %c0_0] : memref<4x128xf32, #tpu.memory_space<vmem>>, vector<4x128xf32>
    %1 = math.exp %0 : vector<4x128xf32>
    %c0_1 = arith.constant 0 : index
    %c0_2 = arith.constant 0 : index
    %2 = vector.load %arg1[%c0_1, %c0_2] : memref<8x4xbf16, #tpu.memory_space<vmem>>, vector<8x4xbf16>
    %3 = arith.truncf %1 : vector<4x128xf32> to vector<4x128xbf16>
    %cst = arith.constant dense<0.000000e+00> : vector<8x128xf32>
    %4 = tpu.matmul %2, %3, %cst {dimension_numbers = #tpu.dot_dimension_numbers<[1], [0], [0], [1], [0, 0, 1, 1], [], []>} : vector<8x4xbf16>, vector<4x128xbf16>, vector<8x128xf32> -> vector<8x128xf32>
    %c0_3 = arith.constant 0 : index
    %c0_4 = arith.constant 0 : index
    %5 = vector.load %arg3[%c0_3, %c0_4] : memref<8x128xf32, #tpu.memory_space<vmem>>, vector<8x128xf32>
    tpu.vector_store %arg3[%c0_3, %c0_4], %4 {strides = array<i32>} : memref<8x128xf32, #tpu.memory_space<vmem>>, vector<8x128xf32>,
    return
  }
  func.func @transform_0(%arg0: i32) -> (i32, i32) {
    %c0_i32 = arith.constant 0 : i32
    %c0_i32_0 = arith.constant 0 : i32
    %c0_i32_1 = arith.constant 0 : i32
    return %c0_i32, %c0_i32_0 : i32, i32
  }
  func.func @transform_1(%arg0: i32) -> (i32, i32) {
    %c0_i32 = arith.constant 0 : i32
    %c0_i32_0 = arith.constant 0 : i32
    return %c0_i32, %arg0 : i32, i32
  }
  func.func @transform_2(%arg0: i32) -> (i32, i32) {
    %c0_i32 = arith.constant 0 : i32
    %c0_i32_0 = arith.constant 0 : i32
    return %c0_i32, %arg0 : i32, i32
  }
}

module attributes {stable_mosaic.version = 11 : i64} {
  func.func @_proj_kernel(%arg0: i32, %arg1: memref<16x4xbf16, #tpu.memory_space<vmem>>, %arg2: memref<4x8xbf16, #tpu.memory_space<vmem>>, %arg3: memref<1x8xf32, #tpu.memory_space<vmem>>, %arg4: memref<16x8xf32, #tpu.memory_space<vmem>>) attributes {dimension_semantics = [#tpu.dimension_semantics<parallel>], iteration_bounds = array<i64: 1>, scalar_prefetch = 0 : i64, scratch_operands = 0 : i64, tpu.core_type = #tpu.core_type<tc>, window_params = [{transform_indices = @transform_0, window_bounds = array<i64: 16, 4>}, {pipeline_mode = #tpu.pipeline_mode<synchronous>, transform_indices = @transform_1, window_bounds = array<i64: 4, 8>}, {pipeline_mode = #tpu.pipeline_mode<synchronous>, transform_indices = @transform_2, window_bounds = array<i64: 1, 8>}, {transform_indices = @transform_3, window_bounds = array<i64: 16, 8>}]} {
    %c0 = arith.constant 0 : index
    %c0_0 = arith.constant 0 : index
    %0 = vector.load %arg1[%c0, %c0_0] : memref<16x4xbf16, #tpu.memory_space<vmem>>, vector<16x4xbf16>
    %c0_1 = arith.constant 0 : index
    %c0_2 = arith.constant 0 : index
    %1 = vector.load %arg2[%c0_1, %c0_2] : memref<4x8xbf16, #tpu.memory_space<vmem>>, vector<4x8xbf16>
    %cst = arith.constant dense<0.000000e+00> : vector<16x8xf32>
    %2 = tpu.matmul %0, %1, %cst {dimension_numbers = #tpu.dot_dimension_numbers<[1], [0], [0], [1], [0, 0, 1, 1], [], []>} : vector<16x4xbf16>, vector<4x8xbf16>, vector<16x8xf32> -> vector<16x8xf32>
    %c0_3 = arith.constant 0 : index
    %c0_4 = arith.constant 0 : index
    %3 = vector.load %arg3[%c0_3, %c0_4] : memref<1x8xf32, #tpu.memory_space<vmem>>, vector<1x8xf32>
    %4 = vector.broadcast %3 : vector<1x8xf32> to vector<16x8xf32>
    %5 = arith.addf %2, %4 : vector<16x8xf32>
    %c0_5 = arith.constant 0 : index
    %c0_6 = arith.constant 0 : index
    %6 = vector.load %arg4[%c0_5, %c0_6] : memref<16x8xf32, #tpu.memory_space<vmem>>, vector<16x8xf32>
    tpu.vector_store %arg4[%c0_5, %c0_6], %5 {strides = array<i32>} : memref<16x8xf32, #tpu.memory_space<vmem>>, vector<16x8xf32>,
    return
  }
  func.func @transform_0(%arg0: i32) -> (i32, i32) {
    %c0_i32 = arith.constant 0 : i32
    %c0_i32_0 = arith.constant 0 : i32
    return %arg0, %c0_i32 : i32, i32
  }
  func.func @transform_1(%arg0: i32) -> (i32, i32) {
    %c0_i32 = arith.constant 0 : i32
    %c0_i32_0 = arith.constant 0 : i32
    %c0_i32_1 = arith.constant 0 : i32
    return %c0_i32, %c0_i32_0 : i32, i32
  }
  func.func @transform_2(%arg0: i32) -> (i32, i32) {
    %c0_i32 = arith.constant 0 : i32
    %c0_i32_0 = arith.constant 0 : i32
    %c0_i32_1 = arith.constant 0 : i32
    return %c0_i32, %c0_i32_0 : i32, i32
  }
  func.func @transform_3(%arg0: i32) -> (i32, i32) {
    %c0_i32 = arith.constant 0 : i32
    %c0_i32_0 = arith.constant 0 : i32
    return %arg0, %c0_i32 : i32, i32
  }
}

module attributes {stable_mosaic.version = 11 : i64} {
  func.func @_proj_kernel(%arg0: i32, %arg1: memref<128x8xbf16, #tpu.memory_space<vmem>>, %arg2: memref<8x32xbf16, #tpu.memory_space<vmem>>, %arg3: memref<1x32xf32, #tpu.memory_space<vmem>>, %arg4: memref<128x32xf32, #tpu.memory_space<vmem>>) attributes {dimension_semantics = [#tpu.dimension_semantics<parallel>], iteration_bounds = array<i64: 1>, scalar_prefetch = 0 : i64, scratch_operands = 0 : i64, tpu.core_type = #tpu.core_type<tc>, window_params = [{transform_indices = @transform_0, window_bounds = array<i64: 128, 8>}, {pipeline_mode = #tpu.pipeline_mode<synchronous>, transform_indices = @transform_1, window_bounds = array<i64: 8, 32>}, {pipeline_mode = #tpu.pipeline_mode<synchronous>, transform_indices = @transform_2, window_bounds = array<i64: 1, 32>}, {transform_indices = @transform_3, window_bounds = array<i64: 128, 32>}]} {
    %c0 = arith.constant 0 : index
    %c0_0 = arith.constant 0 : index
    %0 = vector.load %arg1[%c0, %c0_0] : memref<128x8xbf16, #tpu.memory_space<vmem>>, vector<128x8xbf16>
    %c0_1 = arith.constant 0 : index
    %c0_2 = arith.constant 0 : index
    %1 = vector.load %arg2[%c0_1, %c0_2] : memref<8x32xbf16, #tpu.memory_space<vmem>>, vector<8x32xbf16>
    %cst = arith.constant dense<0.000000e+00> : vector<128x32xf32>
    %2 = tpu.matmul %0, %1, %cst {dimension_numbers = #tpu.dot_dimension_numbers<[1], [0], [0], [1], [0, 0, 1, 1], [], []>} : vector<128x8xbf16>, vector<8x32xbf16>, vector<128x32xf32> -> vector<128x32xf32>
    %c0_3 = arith.constant 0 : index
    %c0_4 = arith.constant 0 : index
    %3 = vector.load %arg3[%c0_3, %c0_4] : memref<1x32xf32, #tpu.memory_space<vmem>>, vector<1x32xf32>
    %4 = vector.broadcast %3 : vector<1x32xf32> to vector<128x32xf32>
    %5 = arith.addf %2, %4 : vector<128x32xf32>
    %cst_5 = arith.constant 0.000000e+00 : f32
    %6 = vector.broadcast %cst_5 : f32 to vector<128x32xf32>
    %7 = arith.maximumf %5, %6 : vector<128x32xf32>
    %c0_6 = arith.constant 0 : index
    %c0_7 = arith.constant 0 : index
    %8 = vector.load %arg4[%c0_6, %c0_7] : memref<128x32xf32, #tpu.memory_space<vmem>>, vector<128x32xf32>
    tpu.vector_store %arg4[%c0_6, %c0_7], %7 {strides = array<i32>} : memref<128x32xf32, #tpu.memory_space<vmem>>, vector<128x32xf32>,
    return
  }
  func.func @transform_0(%arg0: i32) -> (i32, i32) {
    %c0_i32 = arith.constant 0 : i32
    %c0_i32_0 = arith.constant 0 : i32
    return %arg0, %c0_i32 : i32, i32
  }
  func.func @transform_1(%arg0: i32) -> (i32, i32) {
    %c0_i32 = arith.constant 0 : i32
    %c0_i32_0 = arith.constant 0 : i32
    %c0_i32_1 = arith.constant 0 : i32
    return %c0_i32, %c0_i32_0 : i32, i32
  }
  func.func @transform_2(%arg0: i32) -> (i32, i32) {
    %c0_i32 = arith.constant 0 : i32
    %c0_i32_0 = arith.constant 0 : i32
    %c0_i32_1 = arith.constant 0 : i32
    return %c0_i32, %c0_i32_0 : i32, i32
  }
  func.func @transform_3(%arg0: i32) -> (i32, i32) {
    %c0_i32 = arith.constant 0 : i32
    %c0_i32_0 = arith.constant 0 : i32
    return %arg0, %c0_i32 : i32, i32
  }
}

module attributes {stable_mosaic.version = 11 : i64} {
  func.func @_afp_kernel(%arg0: memref<1x8x32xf32, #tpu.memory_space<vmem>>, %arg1: memref<2x1x32xf32, #tpu.memory_space<vmem>>, %arg2: memref<2x64x32xbf16, #tpu.memory_space<vmem>>, %arg3: memref<2x1x64xf32, #tpu.memory_space<vmem>>, %arg4: memref<2x8x32xf32, #tpu.memory_space<vmem>>) attributes {dimension_semantics = [], scalar_prefetch = 0 : i64, scratch_operands = 0 : i64, tpu.core_type = #tpu.core_type<tc>} {
    %c0 = arith.constant 0 : index
    %c0_0 = arith.constant 0 : index
    %c0_1 = arith.constant 0 : index
    %0 = vector.load %arg0[%c0, %c0_0, %c0_1] : memref<1x8x32xf32, #tpu.memory_space<vmem>>, vector<1x8x32xf32>
    %c0_2 = arith.constant 0 : index
    %c0_3 = arith.constant 0 : index
    %c0_4 = arith.constant 0 : index
    %1 = vector.load %arg1[%c0_2, %c0_3, %c0_4] : memref<2x1x32xf32, #tpu.memory_space<vmem>>, vector<2x1x32xf32>
    %2 = vector.broadcast %0 : vector<1x8x32xf32> to vector<2x8x32xf32>
    %3 = vector.broadcast %1 : vector<2x1x32xf32> to vector<2x8x32xf32>
    %4 = arith.addf %2, %3 : vector<2x8x32xf32>
    %c0_5 = arith.constant 0 : index
    %c0_6 = arith.constant 0 : index
    %c0_7 = arith.constant 0 : index
    %5 = vector.load %arg2[%c0_5, %c0_6, %c0_7] : memref<2x64x32xbf16, #tpu.memory_space<vmem>>, vector<2x64x32xbf16>
    %6 = arith.truncf %4 : vector<2x8x32xf32> to vector<2x8x32xbf16>
    %cst = arith.constant dense<0.000000e+00> : vector<2x8x64xf32>
    %7 = tpu.matmul %6, %5, %cst {dimension_numbers = #tpu.dot_dimension_numbers<[2], [2], [1], [1], [0, 0, 0, 1, 1, 1], [0], [0]>} : vector<2x8x32xbf16>, vector<2x64x32xbf16>, vector<2x8x64xf32> -> vector<2x8x64xf32>
    %cst_8 = arith.constant 0.176776692 : f32
    %8 = vector.broadcast %cst_8 : f32 to vector<2x8x64xf32>
    %9 = arith.mulf %7, %8 : vector<2x8x64xf32>
    %c0_9 = arith.constant 0 : index
    %c0_10 = arith.constant 0 : index
    %c0_11 = arith.constant 0 : index
    %10 = vector.load %arg3[%c0_9, %c0_10, %c0_11] : memref<2x1x64xf32, #tpu.memory_space<vmem>>, vector<2x1x64xf32>
    %cst_12 = arith.constant 1.000000e+00 : f32
    %11 = vector.broadcast %cst_12 : f32 to vector<2x1x64xf32>
    %12 = arith.subf %10, %11 : vector<2x1x64xf32>
    %cst_13 = arith.constant 1.000000e+09 : f32
    %13 = vector.broadcast %cst_13 : f32 to vector<2x1x64xf32>
    %14 = arith.mulf %12, %13 : vector<2x1x64xf32>
    %15 = vector.broadcast %14 : vector<2x1x64xf32> to vector<2x8x64xf32>
    %16 = arith.addf %9, %15 : vector<2x8x64xf32>
    %cst_14 = arith.constant dense<0xFF800000> : vector<2x8xf32>
    %17 = vector.multi_reduction <maximumf>, %16, %cst_14 [2] : vector<2x8x64xf32> to vector<2x8xf32>
    %18 = vector.shape_cast %17 : vector<2x8xf32> to vector<2x8x1xf32>
    %19 = vector.broadcast %18 : vector<2x8x1xf32> to vector<2x8x64xf32>
    %20 = arith.subf %16, %19 : vector<2x8x64xf32>
    %21 = math.exp %20 : vector<2x8x64xf32>
    %cst_15 = arith.constant dense<0.000000e+00> : vector<2x8xf32>
    %22 = vector.multi_reduction <add>, %21, %cst_15 [2] : vector<2x8x64xf32> to vector<2x8xf32>
    %23 = vector.shape_cast %22 : vector<2x8xf32> to vector<2x8x1xf32>
    %24 = arith.truncf %21 : vector<2x8x64xf32> to vector<2x8x64xbf16>
    %cst_16 = arith.constant dense<0.000000e+00> : vector<2x8x32xf32>
    %25 = tpu.matmul %24, %5, %cst_16 {dimension_numbers = #tpu.dot_dimension_numbers<[2], [1], [1], [2], [0, 0, 0, 1, 1, 2], [0], [0]>} : vector<2x8x64xbf16>, vector<2x64x32xbf16>, vector<2x8x32xf32> -> vector<2x8x32xf32>
    %26 = tpu.reciprocal %23 {approx = true} : vector<2x8x1xf32> -> vector<2x8x1xf32>
    %27 = vector.broadcast %26 : vector<2x8x1xf32> to vector<2x8x32xf32>
    %28 = arith.mulf %25, %27 : vector<2x8x32xf32>
    %c0_17 = arith.constant 0 : index
    %c0_18 = arith.constant 0 : index
    %c0_19 = arith.constant 0 : index
    %29 = vector.load %arg4[%c0_17, %c0_18, %c0_19] : memref<2x8x32xf32, #tpu.memory_space<vmem>>, vector<2x8x32xf32>
    tpu.vector_store %arg4[%c0_17, %c0_18, %c0_19], %28 {strides = array<i32>} : memref<2x8x32xf32, #tpu.memory_space<vmem>>, vector<2x8x32xf32>,
    return
  }
}

module attributes {stable_mosaic.version = 11 : i64} {
  func.func @_isd_kernel(%arg0: i32, %arg1: memref<2x64x32xbf16, #tpu.memory_space<vmem>>, %arg2: memref<2x1x32xf32, #tpu.memory_space<vmem>>, %arg3: memref<2x8x32xbf16, #tpu.memory_space<vmem>>, %arg4: memref<1x32xf32, #tpu.memory_space<vmem>>, %arg5: memref<1x1xf32, #tpu.memory_space<vmem>>, %arg6: memref<2x64xf32, #tpu.memory_space<vmem>>) attributes {dimension_semantics = [#tpu.dimension_semantics<parallel>], iteration_bounds = array<i64: 1>, scalar_prefetch = 0 : i64, scratch_operands = 0 : i64, tpu.core_type = #tpu.core_type<tc>, window_params = [{transform_indices = @transform_0, window_bounds = array<i64: 2, 64, 32>}, {pipeline_mode = #tpu.pipeline_mode<synchronous>, transform_indices = @transform_1, window_bounds = array<i64: 2, 1, 32>}, {pipeline_mode = #tpu.pipeline_mode<synchronous>, transform_indices = @transform_2, window_bounds = array<i64: 2, 8, 32>}, {pipeline_mode = #tpu.pipeline_mode<synchronous>, transform_indices = @transform_3, window_bounds = array<i64: 1, 32>}, {pipeline_mode = #tpu.pipeline_mode<synchronous>, transform_indices = @transform_4, window_bounds = array<i64: 1, 1>}, {transform_indices = @transform_5, window_bounds = array<i64: 2, 64>}]} {
    %c0 = arith.constant 0 : index
    %c0_0 = arith.constant 0 : index
    %c0_1 = arith.constant 0 : index
    %0 = vector.load %arg1[%c0, %c0_0, %c0_1] : memref<2x64x32xbf16, #tpu.memory_space<vmem>>, vector<2x64x32xbf16>
    %1 = arith.extf %0 : vector<2x64x32xbf16> to vector<2x64x32xf32>
    %c0_2 = arith.constant 0 : index
    %c0_3 = arith.constant 0 : index
    %c0_4 = arith.constant 0 : index
    %2 = vector.load %arg2[%c0_2, %c0_3, %c0_4] : memref<2x1x32xf32, #tpu.memory_space<vmem>>, vector<2x1x32xf32>
    %3 = vector.broadcast %2 : vector<2x1x32xf32> to vector<2x64x32xf32>
    %4 = arith.addf %1, %3 : vector<2x64x32xf32>
    %c0_5 = arith.constant 0 : index
    %c0_6 = arith.constant 0 : index
    %c0_7 = arith.constant 0 : index
    %5 = vector.load %arg3[%c0_5, %c0_6, %c0_7] : memref<2x8x32xbf16, #tpu.memory_space<vmem>>, vector<2x8x32xbf16>
    %6 = arith.truncf %4 : vector<2x64x32xf32> to vector<2x64x32xbf16>
    %cst = arith.constant dense<0.000000e+00> : vector<2x64x8xf32>
    %7 = tpu.matmul %6, %5, %cst {dimension_numbers = #tpu.dot_dimension_numbers<[2], [2], [1], [1], [0, 0, 0, 1, 1, 1], [0], [0]>} : vector<2x64x32xbf16>, vector<2x8x32xbf16>, vector<2x64x8xf32> -> vector<2x64x8xf32>
    %cst_8 = arith.constant 0.176776692 : f32
    %8 = vector.broadcast %cst_8 : f32 to vector<2x64x8xf32>
    %9 = arith.mulf %7, %8 : vector<2x64x8xf32>
    %cst_9 = arith.constant dense<0xFF800000> : vector<2x64xf32>
    %10 = vector.multi_reduction <maximumf>, %9, %cst_9 [2] : vector<2x64x8xf32> to vector<2x64xf32>
    %11 = vector.shape_cast %10 : vector<2x64xf32> to vector<2x64x1xf32>
    %12 = vector.broadcast %11 : vector<2x64x1xf32> to vector<2x64x8xf32>
    %13 = arith.subf %9, %12 : vector<2x64x8xf32>
    %14 = math.exp %13 : vector<2x64x8xf32>
    %cst_10 = arith.constant dense<0.000000e+00> : vector<2x64xf32>
    %15 = vector.multi_reduction <add>, %14, %cst_10 [2] : vector<2x64x8xf32> to vector<2x64xf32>
    %16 = vector.shape_cast %15 : vector<2x64xf32> to vector<2x64x1xf32>
    %17 = arith.truncf %14 : vector<2x64x8xf32> to vector<2x64x8xbf16>
    %cst_11 = arith.constant dense<0.000000e+00> : vector<2x64x32xf32>
    %18 = tpu.matmul %17, %5, %cst_11 {dimension_numbers = #tpu.dot_dimension_numbers<[2], [1], [1], [2], [0, 0, 0, 1, 1, 2], [0], [0]>} : vector<2x64x8xbf16>, vector<2x8x32xbf16>, vector<2x64x32xf32> -> vector<2x64x32xf32>
    %19 = tpu.reciprocal %16 {approx = true} : vector<2x64x1xf32> -> vector<2x64x1xf32>
    %20 = vector.broadcast %19 : vector<2x64x1xf32> to vector<2x64x32xf32>
    %21 = arith.mulf %18, %20 : vector<2x64x32xf32>
    %22 = arith.addf %4, %21 : vector<2x64x32xf32>
    %c0_12 = arith.constant 0 : index
    %c0_13 = arith.constant 0 : index
    %23 = vector.load %arg4[%c0_12, %c0_13] : memref<1x32xf32, #tpu.memory_space<vmem>>, vector<1x32xf32>
    %24 = vector.shape_cast %23 : vector<1x32xf32> to vector<1x1x32xf32>
    %25 = vector.broadcast %24 : vector<1x1x32xf32> to vector<2x64x32xf32>
    %26 = arith.mulf %22, %25 : vector<2x64x32xf32>
    %cst_14 = arith.constant dense<0.000000e+00> : vector<2x64xf32>
    %27 = vector.multi_reduction <add>, %26, %cst_14 [2] : vector<2x64x32xf32> to vector<2x64xf32>
    %c0_15 = arith.constant 0 : index
    %c0_16 = arith.constant 0 : index
    %28 = vector.load %arg5[%c0_15, %c0_16] : memref<1x1xf32, #tpu.memory_space<vmem>>, vector<1x1xf32>
    %29 = vector.broadcast %28 : vector<1x1xf32> to vector<2x64xf32>
    %30 = arith.addf %27, %29 : vector<2x64xf32>
    %c0_17 = arith.constant 0 : index
    %c0_18 = arith.constant 0 : index
    %31 = vector.load %arg6[%c0_17, %c0_18] : memref<2x64xf32, #tpu.memory_space<vmem>>, vector<2x64xf32>
    tpu.vector_store %arg6[%c0_17, %c0_18], %30 {strides = array<i32>} : memref<2x64xf32, #tpu.memory_space<vmem>>, vector<2x64xf32>,
    return
  }
  func.func @transform_0(%arg0: i32) -> (i32, i32, i32) {
    %c0_i32 = arith.constant 0 : i32
    %c0_i32_0 = arith.constant 0 : i32
    %c0_i32_1 = arith.constant 0 : i32
    return %c0_i32, %arg0, %c0_i32_0 : i32, i32, i32
  }
  func.func @transform_1(%arg0: i32) -> (i32, i32, i32) {
    %c0_i32 = arith.constant 0 : i32
    %c0_i32_0 = arith.constant 0 : i32
    %c0_i32_1 = arith.constant 0 : i32
    %c0_i32_2 = arith.constant 0 : i32
    return %c0_i32, %c0_i32_0, %c0_i32_1 : i32, i32, i32
  }
  func.func @transform_2(%arg0: i32) -> (i32, i32, i32) {
    %c0_i32 = arith.constant 0 : i32
    %c0_i32_0 = arith.constant 0 : i32
    %c0_i32_1 = arith.constant 0 : i32
    %c0_i32_2 = arith.constant 0 : i32
    return %c0_i32, %c0_i32_0, %c0_i32_1 : i32, i32, i32
  }
  func.func @transform_3(%arg0: i32) -> (i32, i32) {
    %c0_i32 = arith.constant 0 : i32
    %c0_i32_0 = arith.constant 0 : i32
    %c0_i32_1 = arith.constant 0 : i32
    return %c0_i32, %c0_i32_0 : i32, i32
  }
  func.func @transform_4(%arg0: i32) -> (i32, i32) {
    %c0_i32 = arith.constant 0 : i32
    %c0_i32_0 = arith.constant 0 : i32
    %c0_i32_1 = arith.constant 0 : i32
    return %c0_i32, %c0_i32_0 : i32, i32
  }
  func.func @transform_5(%arg0: i32) -> (i32, i32) {
    %c0_i32 = arith.constant 0 : i32
    %c0_i32_0 = arith.constant 0 : i32
    return %c0_i32, %arg0 : i32, i32
  }
}

module attributes {stable_mosaic.version = 11 : i64} {
  func.func @_hresize_kernel(%arg0: i32, %arg1: memref<8x8xbf16, #tpu.memory_space<vmem>>, %arg2: memref<8x128xf32, #tpu.memory_space<vmem>>, %arg3: memref<8x128xf32, #tpu.memory_space<vmem>>) attributes {dimension_semantics = [#tpu.dimension_semantics<parallel>], iteration_bounds = array<i64: 1>, scalar_prefetch = 0 : i64, scratch_operands = 0 : i64, tpu.core_type = #tpu.core_type<tc>, window_params = [{pipeline_mode = #tpu.pipeline_mode<synchronous>, transform_indices = @transform_0, window_bounds = array<i64: 8, 8>}, {transform_indices = @transform_1, window_bounds = array<i64: 8, 128>}, {transform_indices = @transform_2, window_bounds = array<i64: 8, 128>}]} {
    %c0 = arith.constant 0 : index
    %c0_0 = arith.constant 0 : index
    %0 = vector.load %arg2[%c0, %c0_0] : memref<8x128xf32, #tpu.memory_space<vmem>>, vector<8x128xf32>
    %1 = math.exp %0 : vector<8x128xf32>
    %c0_1 = arith.constant 0 : index
    %c0_2 = arith.constant 0 : index
    %2 = vector.load %arg1[%c0_1, %c0_2] : memref<8x8xbf16, #tpu.memory_space<vmem>>, vector<8x8xbf16>
    %3 = arith.truncf %1 : vector<8x128xf32> to vector<8x128xbf16>
    %cst = arith.constant dense<0.000000e+00> : vector<8x128xf32>
    %4 = tpu.matmul %2, %3, %cst {dimension_numbers = #tpu.dot_dimension_numbers<[1], [0], [0], [1], [0, 0, 1, 1], [], []>} : vector<8x8xbf16>, vector<8x128xbf16>, vector<8x128xf32> -> vector<8x128xf32>
    %c0_3 = arith.constant 0 : index
    %c0_4 = arith.constant 0 : index
    %5 = vector.load %arg3[%c0_3, %c0_4] : memref<8x128xf32, #tpu.memory_space<vmem>>, vector<8x128xf32>
    tpu.vector_store %arg3[%c0_3, %c0_4], %4 {strides = array<i32>} : memref<8x128xf32, #tpu.memory_space<vmem>>, vector<8x128xf32>,
    return
  }
  func.func @transform_0(%arg0: i32) -> (i32, i32) {
    %c0_i32 = arith.constant 0 : i32
    %c0_i32_0 = arith.constant 0 : i32
    %c0_i32_1 = arith.constant 0 : i32
    return %c0_i32, %c0_i32_0 : i32, i32
  }
  func.func @transform_1(%arg0: i32) -> (i32, i32) {
    %c0_i32 = arith.constant 0 : i32
    %c0_i32_0 = arith.constant 0 : i32
    return %c0_i32, %arg0 : i32, i32
  }
  func.func @transform_2(%arg0: i32) -> (i32, i32) {
    %c0_i32 = arith.constant 0 : i32
    %c0_i32_0 = arith.constant 0 : i32
    return %c0_i32, %arg0 : i32, i32
  }
}

module attributes {stable_mosaic.version = 11 : i64} {
  func.func @_proj_kernel(%arg0: i32, %arg1: memref<16x8xbf16, #tpu.memory_space<vmem>>, %arg2: memref<8x8xbf16, #tpu.memory_space<vmem>>, %arg3: memref<1x8xf32, #tpu.memory_space<vmem>>, %arg4: memref<16x8xf32, #tpu.memory_space<vmem>>) attributes {dimension_semantics = [#tpu.dimension_semantics<parallel>], iteration_bounds = array<i64: 1>, scalar_prefetch = 0 : i64, scratch_operands = 0 : i64, tpu.core_type = #tpu.core_type<tc>, window_params = [{transform_indices = @transform_0, window_bounds = array<i64: 16, 8>}, {pipeline_mode = #tpu.pipeline_mode<synchronous>, transform_indices = @transform_1, window_bounds = array<i64: 8, 8>}, {pipeline_mode = #tpu.pipeline_mode<synchronous>, transform_indices = @transform_2, window_bounds = array<i64: 1, 8>}, {transform_indices = @transform_3, window_bounds = array<i64: 16, 8>}]} {
    %c0 = arith.constant 0 : index
    %c0_0 = arith.constant 0 : index
    %0 = vector.load %arg1[%c0, %c0_0] : memref<16x8xbf16, #tpu.memory_space<vmem>>, vector<16x8xbf16>
    %c0_1 = arith.constant 0 : index
    %c0_2 = arith.constant 0 : index
    %1 = vector.load %arg2[%c0_1, %c0_2] : memref<8x8xbf16, #tpu.memory_space<vmem>>, vector<8x8xbf16>
    %cst = arith.constant dense<0.000000e+00> : vector<16x8xf32>
    %2 = tpu.matmul %0, %1, %cst {dimension_numbers = #tpu.dot_dimension_numbers<[1], [0], [0], [1], [0, 0, 1, 1], [], []>} : vector<16x8xbf16>, vector<8x8xbf16>, vector<16x8xf32> -> vector<16x8xf32>
    %c0_3 = arith.constant 0 : index
    %c0_4 = arith.constant 0 : index
    %3 = vector.load %arg3[%c0_3, %c0_4] : memref<1x8xf32, #tpu.memory_space<vmem>>, vector<1x8xf32>
    %4 = vector.broadcast %3 : vector<1x8xf32> to vector<16x8xf32>
    %5 = arith.addf %2, %4 : vector<16x8xf32>
    %c0_5 = arith.constant 0 : index
    %c0_6 = arith.constant 0 : index
    %6 = vector.load %arg4[%c0_5, %c0_6] : memref<16x8xf32, #tpu.memory_space<vmem>>, vector<16x8xf32>
    tpu.vector_store %arg4[%c0_5, %c0_6], %5 {strides = array<i32>} : memref<16x8xf32, #tpu.memory_space<vmem>>, vector<16x8xf32>,
    return
  }
  func.func @transform_0(%arg0: i32) -> (i32, i32) {
    %c0_i32 = arith.constant 0 : i32
    %c0_i32_0 = arith.constant 0 : i32
    return %arg0, %c0_i32 : i32, i32
  }
  func.func @transform_1(%arg0: i32) -> (i32, i32) {
    %c0_i32 = arith.constant 0 : i32
    %c0_i32_0 = arith.constant 0 : i32
    %c0_i32_1 = arith.constant 0 : i32
    return %c0_i32, %c0_i32_0 : i32, i32
  }
  func.func @transform_2(%arg0: i32) -> (i32, i32) {
    %c0_i32 = arith.constant 0 : i32
    %c0_i32_0 = arith.constant 0 : i32
    %c0_i32_1 = arith.constant 0 : i32
    return %c0_i32, %c0_i32_0 : i32, i32
  }
  func.func @transform_3(%arg0: i32) -> (i32, i32) {
    %c0_i32 = arith.constant 0 : i32
    %c0_i32_0 = arith.constant 0 : i32
    return %arg0, %c0_i32 : i32, i32
  }
}

module attributes {stable_mosaic.version = 11 : i64} {
  func.func @_hresize_kernel(%arg0: i32, %arg1: memref<16x8xbf16, #tpu.memory_space<vmem>>, %arg2: memref<8x128xf32, #tpu.memory_space<vmem>>, %arg3: memref<16x128xf32, #tpu.memory_space<vmem>>) attributes {dimension_semantics = [#tpu.dimension_semantics<parallel>], iteration_bounds = array<i64: 1>, scalar_prefetch = 0 : i64, scratch_operands = 0 : i64, tpu.core_type = #tpu.core_type<tc>, window_params = [{pipeline_mode = #tpu.pipeline_mode<synchronous>, transform_indices = @transform_0, window_bounds = array<i64: 16, 8>}, {transform_indices = @transform_1, window_bounds = array<i64: 8, 128>}, {transform_indices = @transform_2, window_bounds = array<i64: 16, 128>}]} {
    %c0 = arith.constant 0 : index
    %c0_0 = arith.constant 0 : index
    %0 = vector.load %arg2[%c0, %c0_0] : memref<8x128xf32, #tpu.memory_space<vmem>>, vector<8x128xf32>
    %c0_1 = arith.constant 0 : index
    %c0_2 = arith.constant 0 : index
    %1 = vector.load %arg1[%c0_1, %c0_2] : memref<16x8xbf16, #tpu.memory_space<vmem>>, vector<16x8xbf16>
    %2 = arith.truncf %0 : vector<8x128xf32> to vector<8x128xbf16>
    %cst = arith.constant dense<0.000000e+00> : vector<16x128xf32>
    %3 = tpu.matmul %1, %2, %cst {dimension_numbers = #tpu.dot_dimension_numbers<[1], [0], [0], [1], [0, 0, 1, 1], [], []>} : vector<16x8xbf16>, vector<8x128xbf16>, vector<16x128xf32> -> vector<16x128xf32>
    %c0_3 = arith.constant 0 : index
    %c0_4 = arith.constant 0 : index
    %4 = vector.load %arg3[%c0_3, %c0_4] : memref<16x128xf32, #tpu.memory_space<vmem>>, vector<16x128xf32>
    tpu.vector_store %arg3[%c0_3, %c0_4], %3 {strides = array<i32>} : memref<16x128xf32, #tpu.memory_space<vmem>>, vector<16x128xf32>,
    return
  }
  func.func @transform_0(%arg0: i32) -> (i32, i32) {
    %c0_i32 = arith.constant 0 : i32
    %c0_i32_0 = arith.constant 0 : i32
    %c0_i32_1 = arith.constant 0 : i32
    return %c0_i32, %c0_i32_0 : i32, i32
  }
  func.func @transform_1(%arg0: i32) -> (i32, i32) {
    %c0_i32 = arith.constant 0 : i32
    %c0_i32_0 = arith.constant 0 : i32
    return %c0_i32, %arg0 : i32, i32
  }
  func.func @transform_2(%arg0: i32) -> (i32, i32) {
    %c0_i32 = arith.constant 0 : i32
    %c0_i32_0 = arith.constant 0 : i32
    return %c0_i32, %arg0 : i32, i32
  }
}

module attributes {stable_mosaic.version = 11 : i64} {
  func.func @_proj_kernel(%arg0: i32, %arg1: memref<32x8xbf16, #tpu.memory_space<vmem>>, %arg2: memref<8x16xbf16, #tpu.memory_space<vmem>>, %arg3: memref<1x16xf32, #tpu.memory_space<vmem>>, %arg4: memref<32x16xf32, #tpu.memory_space<vmem>>) attributes {dimension_semantics = [#tpu.dimension_semantics<parallel>], iteration_bounds = array<i64: 1>, scalar_prefetch = 0 : i64, scratch_operands = 0 : i64, tpu.core_type = #tpu.core_type<tc>, window_params = [{transform_indices = @transform_0, window_bounds = array<i64: 32, 8>}, {pipeline_mode = #tpu.pipeline_mode<synchronous>, transform_indices = @transform_1, window_bounds = array<i64: 8, 16>}, {pipeline_mode = #tpu.pipeline_mode<synchronous>, transform_indices = @transform_2, window_bounds = array<i64: 1, 16>}, {transform_indices = @transform_3, window_bounds = array<i64: 32, 16>}]} {
    %c0 = arith.constant 0 : index
    %c0_0 = arith.constant 0 : index
    %0 = vector.load %arg1[%c0, %c0_0] : memref<32x8xbf16, #tpu.memory_space<vmem>>, vector<32x8xbf16>
    %c0_1 = arith.constant 0 : index
    %c0_2 = arith.constant 0 : index
    %1 = vector.load %arg2[%c0_1, %c0_2] : memref<8x16xbf16, #tpu.memory_space<vmem>>, vector<8x16xbf16>
    %cst = arith.constant dense<0.000000e+00> : vector<32x16xf32>
    %2 = tpu.matmul %0, %1, %cst {dimension_numbers = #tpu.dot_dimension_numbers<[1], [0], [0], [1], [0, 0, 1, 1], [], []>} : vector<32x8xbf16>, vector<8x16xbf16>, vector<32x16xf32> -> vector<32x16xf32>
    %c0_3 = arith.constant 0 : index
    %c0_4 = arith.constant 0 : index
    %3 = vector.load %arg3[%c0_3, %c0_4] : memref<1x16xf32, #tpu.memory_space<vmem>>, vector<1x16xf32>
    %4 = vector.broadcast %3 : vector<1x16xf32> to vector<32x16xf32>
    %5 = arith.addf %2, %4 : vector<32x16xf32>
    %c0_5 = arith.constant 0 : index
    %c0_6 = arith.constant 0 : index
    %6 = vector.load %arg4[%c0_5, %c0_6] : memref<32x16xf32, #tpu.memory_space<vmem>>, vector<32x16xf32>
    tpu.vector_store %arg4[%c0_5, %c0_6], %5 {strides = array<i32>} : memref<32x16xf32, #tpu.memory_space<vmem>>, vector<32x16xf32>,
    return
  }
  func.func @transform_0(%arg0: i32) -> (i32, i32) {
    %c0_i32 = arith.constant 0 : i32
    %c0_i32_0 = arith.constant 0 : i32
    return %arg0, %c0_i32 : i32, i32
  }
  func.func @transform_1(%arg0: i32) -> (i32, i32) {
    %c0_i32 = arith.constant 0 : i32
    %c0_i32_0 = arith.constant 0 : i32
    %c0_i32_1 = arith.constant 0 : i32
    return %c0_i32, %c0_i32_0 : i32, i32
  }
  func.func @transform_2(%arg0: i32) -> (i32, i32) {
    %c0_i32 = arith.constant 0 : i32
    %c0_i32_0 = arith.constant 0 : i32
    %c0_i32_1 = arith.constant 0 : i32
    return %c0_i32, %c0_i32_0 : i32, i32
  }
  func.func @transform_3(%arg0: i32) -> (i32, i32) {
    %c0_i32 = arith.constant 0 : i32
    %c0_i32_0 = arith.constant 0 : i32
    return %arg0, %c0_i32 : i32, i32
  }
}

</mosaic_0001>

<llo_original>
// kernel: idisc_erp_forward.20
$region0: #{idisc_erp_forward.20}
  #allocation0 [shape = 'u32[]', space=smem, size = 0x4, offset = 0x4, fixed_abs, tag = 'smem constant byte address 0x4 - core index']
  #allocation1 [shape = 'u32[144,128]{1,0:T(1,128)}', space=vmem, size = 0x12000, scoped, tag = 'internal scratch']
  %s0 = inlined_call_operand.vmem [shape: bf16[32,8], index: 0, kind: input, shape index: {}]
  %s1 = inlined_call_operand.vmem [shape: bf16[8,16], index: 1, kind: input, shape index: {}]
  %s2 = inlined_call_operand.vmem [shape: f32[1,16], index: 2, kind: input, shape index: {}]
  %s3 = inlined_call_operand.vmem [shape: f32[32,16], index: 3, kind: output, shape index: {}]
  %s4 = sld [smem:[#allocation0]]
  $region22: #{idisc_erp_forward.20} parent=0
    _
  %s6 = ssub.s32 1, %s4
  %s7 = scalar_select 0, %s6, %s4
  // Predicated region
  $region2: #{idisc_erp_forward.20} parent=0 // pred_check
    _
  $region3: #{idisc_erp_forward.20} parent=0 // pred_check_branch
    %9 = sbr.rel (0) target = $region5
  $region4: #{idisc_erp_forward.20} parent=0 // pred_region
    _
  $region5: #{idisc_erp_forward.20} parent=0 // pred_fallthru
    _
  // Predicated region
  $region6: #{idisc_erp_forward.20} parent=0 // pred_check
    _
  $region7: #{idisc_erp_forward.20} parent=0 // pred_check_branch
    %11 = sbr.rel (0) target = $region9
  $region8: #{idisc_erp_forward.20} parent=0 // pred_region
    _
  $region9: #{idisc_erp_forward.20} parent=0 // pred_fallthru
    _
  // Predicated region
  $region10: #{idisc_erp_forward.20} parent=0 // pred_check
    _
  $region11: #{idisc_erp_forward.20} parent=0 // pred_check_branch
    %13 = sbr.rel (0) target = $region13
  $region12: #{idisc_erp_forward.20} parent=0 // pred_region
    _
  $region13: #{idisc_erp_forward.20} parent=0 // pred_fallthru
    _
  %v15 = vld [vmem:[%s0] sm:$0xf]
  %v16 = vld [vmem:[%s0 + $0x4] sm:$0xf]
  %v17 = vld [vmem:[%s0 + $0x8] sm:$0xf]
  %v18 = vld [vmem:[%s0 + $0xc] sm:$0xf]
  %v19 = vld [vmem:[%s1] sm:$0xf]
  %v20 = vld [vmem:[%s2] sm:$0x1]
  %v22 = vlaneseq
  %v23 = vshrl.u32 %v22, 7
  %v24 = vsub.s32 0, %v23
  %v25 = vrot.slane %v20, %v24
  %v31 = vunpack.c.l.b16 %v15
  %v32 = vunpack.c.l.b16 %v16
  %v33 = vunpack.c.l.b16 %v17
  %v34 = vunpack.c.l.b16 %v18
  %v35 = vpack.c.b16 %v32, %v31
  %v36 = vpack.c.b16 %v34, %v33
  %vm37 = vcmask 64512
  %v39 = vsel %vm37, %v35, 0
  %v42 = vsel %vm37, %v36, 0
  %vm44 = vcmask 1043456
  %v46 = vsel %vm44, %v19, 0
  %48 = vmatprep.subr.bf16.mxu0 0
  %49 = vmatpush1.bf16.msra.mxu0 %v46
  %50 = vmatprep.subr.bf16.mxu0 0
  %51 = vmatpush1.bf16.msra.mxu0 0
  %52 = vmatprep.subr.bf16.mxu0 0
  %53 = vmatpush1.bf16.msra.mxu0 0
  %54 = vmatprep.subr.bf16.mxu0 0
  %55 = vmatpush1.bf16.msra.mxu0 0
  %56 = vmatprep.subr.bf16.mxu0 0
  %57 = vmatpush1.bf16.msra.mxu0 0
  %58 = vmatprep.subr.bf16.mxu0 0
  %59 = vmatpush1.bf16.msra.mxu0 0
  %60 = vmatprep.subr.bf16.mxu0 0
  %61 = vmatpush1.bf16.msra.mxu0 0
  %62 = vmatprep.subr.bf16.mxu0 0
  %63 = vmatpush1.bf16.msra.mxu0 0
  %64 = vmatprep.subr.bf16.mxu0 0
  %65 = vmatpush1.bf16.msra.mxu0 0
  %66 = vmatprep.subr.bf16.mxu0 0
  %67 = vmatpush1.bf16.msra.mxu0 0
  %68 = vmatprep.subr.bf16.mxu0 0
  %69 = vmatpush1.bf16.msra.mxu0 0
  %70 = vmatprep.subr.bf16.mxu0 0
  %71 = vmatpush1.bf16.msra.mxu0 0
  %72 = vmatprep.subr.bf16.mxu0 0
  %73 = vmatpush1.bf16.msra.mxu0 0
  %74 = vmatprep.subr.bf16.mxu0 0
  %75 = vmatpush1.bf16.msra.mxu0 0
  %76 = vmatprep.subr.bf16.mxu0 0
  %77 = vmatpush1.bf16.msra.mxu0 0
  %78 = vmatprep.subr.bf16.mxu0 0
  %79 = vmatpush1.bf16.msra.mxu0 0
  %80 = vmatprep.mubr.bf16.mxu0 0
  %81 = vmatmul.mubr.bf16.gmra.mrb[0].mxu0 %v39
  %v82 = vpop.f32.mrb[0].mxu0
  %v83 = vadd.f32 %v25, %v82
  %v84 = vpop.f32.mrb[0].mxu0
  %v85 = vpop.f32.mrb[0].mxu0
  %v86 = vadd.f32 %v25, %v85
  %v87 = vpop.f32.mrb[0].mxu0
  %88 = vmatprep.mubr.bf16.mxu0 0
  %89 = vmatmul.mubr.bf16.gmra.mrb[0].mxu0 %v42
  %v90 = vpop.f32.mrb[0].mxu0
  %v91 = vadd.f32 %v25, %v90
  %v92 = vpop.f32.mrb[0].mxu0
  %v93 = vpop.f32.mrb[0].mxu0
  %v94 = vadd.f32 %v25, %v93
  %v95 = vpop.f32.mrb[0].mxu0
  %96 = vdwg.mxu0
  %v97 = vmax.f32 %v83, 0.0
  %v98 = vmax.f32 %v86, 0.0
  %v99 = vmax.f32 %v91, 0.0
  %v100 = vmax.f32 %v94, 0.0
  %vm101 = vcmask 130048
  %102 = vst.msk [vmem:[%s3] sm:$0xff] %vm101, %v97
  %103 = vst.msk [vmem:[%s3 + $0x8] sm:$0xff] %vm101, %v98
  %104 = vst.msk [vmem:[%s3 + $0x10] sm:$0xff] %vm101, %v99
  %105 = vst.msk [vmem:[%s3 + $0x18] sm:$0xff] %vm101, %v100
  // Predicated region
  $region14: #{idisc_erp_forward.20} parent=0 // pred_check
    _
  $region15: #{idisc_erp_forward.20} parent=0 // pred_check_branch
    %107 = sbr.rel (0) target = $region17
  $region16: #{idisc_erp_forward.20} parent=0 // pred_region
    _
  $region17: #{idisc_erp_forward.20} parent=0 // pred_fallthru
    _
  // Predicated region
  $region18: #{idisc_erp_forward.20} parent=0 // pred_check
    _
  $region19: #{idisc_erp_forward.20} parent=0 // pred_check_branch
    %109 = sbr.rel (0) target = $region21
  $region20: #{idisc_erp_forward.20} parent=0 // pred_region
    _
  $region21: #{idisc_erp_forward.20} parent=0 // pred_fallthru
    _

// kernel: idisc_erp_forward.22
$region0: #{idisc_erp_forward.22}
  #allocation0 [shape = 'u32[]', space=smem, size = 0x4, offset = 0x4, fixed_abs, tag = 'smem constant byte address 0x4 - core index']
  #allocation1 [shape = 'u32[144,128]{1,0:T(1,128)}', space=vmem, size = 0x12000, scoped, tag = 'internal scratch']
  %s0 = inlined_call_operand.vmem [shape: bf16[32,16], index: 0, kind: input, shape index: {}]
  %s1 = inlined_call_operand.vmem [shape: bf16[16,32], index: 1, kind: input, shape index: {}]
  %s2 = inlined_call_operand.vmem [shape: f32[1,32], index: 2, kind: input, shape index: {}]
  %s3 = inlined_call_operand.vmem [shape: f32[32,32], index: 3, kind: output, shape index: {}]
  %s4 = sld [smem:[#allocation0]]
  $region22: #{idisc_erp_forward.22} parent=0
    _
  %s6 = ssub.s32 1, %s4
  %s7 = scalar_select 0, %s6, %s4
  // Predicated region
  $region2: #{idisc_erp_forward.22} parent=0 // pred_check
    _
  $region3: #{idisc_erp_forward.22} parent=0 // pred_check_branch
    %9 = sbr.rel (0) target = $region5
  $region4: #{idisc_erp_forward.22} parent=0 // pred_region
    _
  $region5: #{idisc_erp_forward.22} parent=0 // pred_fallthru
    _
  // Predicated region
  $region6: #{idisc_erp_forward.22} parent=0 // pred_check
    _
  $region7: #{idisc_erp_forward.22} parent=0 // pred_check_branch
    %11 = sbr.rel (0) target = $region9
  $region8: #{idisc_erp_forward.22} parent=0 // pred_region
    _
  $region9: #{idisc_erp_forward.22} parent=0 // pred_fallthru
    _
  // Predicated region
  $region10: #{idisc_erp_forward.22} parent=0 // pred_check
    _
  $region11: #{idisc_erp_forward.22} parent=0 // pred_check_branch
    %13 = sbr.rel (0) target = $region13
  $region12: #{idisc_erp_forward.22} parent=0 // pred_region
    _
  $region13: #{idisc_erp_forward.22} parent=0 // pred_fallthru
    _
  %v15 = vld [vmem:[%s0] sm:$0xf]
  %v16 = vld [vmem:[%s0 + $0x4] sm:$0xf]
  %v17 = vld [vmem:[%s0 + $0x8] sm:$0xf]
  %v18 = vld [vmem:[%s0 + $0xc] sm:$0xf]
  %v19 = vld [vmem:[%s1] sm:$0xf]
  %v20 = vld [vmem:[%s1 + $0x4] sm:$0xf]
  %v21 = vld [vmem:[%s2] sm:$0x1]
  %v23 = vlaneseq
  %v24 = vshrl.u32 %v23, 7
  %v25 = vsub.s32 0, %v24
  %v26 = vrot.slane %v21, %v25
  %v32 = vunpack.c.l.b16 %v15
  %v33 = vunpack.c.l.b16 %v16
  %v34 = vunpack.c.l.b16 %v17
  %v35 = vunpack.c.l.b16 %v18
  %v36 = vpack.c.b16 %v33, %v32
  %v37 = vpack.c.b16 %v35, %v34
  %v40 = vunpack.c.l.b16 %v19
  %v41 = vunpack.c.l.b16 %v20
  %v42 = vpack.c.b16 %v41, %v40
  %vm44 = vcmask 130048
  %v46 = vsel %vm44, %v36, 0
  %v49 = vsel %vm44, %v37, 0
  %51 = vmatprep.subr.bf16.mxu0 0
  %52 = vmatpush1.bf16.msra.mxu0 %v42
  %53 = vmatprep.subr.bf16.mxu0 0
  %54 = vmatpush1.bf16.msra.mxu0 0
  %55 = vmatprep.subr.bf16.mxu0 0
  %56 = vmatpush1.bf16.msra.mxu0 0
  %57 = vmatprep.subr.bf16.mxu0 0
  %58 = vmatpush1.bf16.msra.mxu0 0
  %59 = vmatprep.subr.bf16.mxu0 0
  %60 = vmatpush1.bf16.msra.mxu0 0
  %61 = vmatprep.subr.bf16.mxu0 0
  %62 = vmatpush1.bf16.msra.mxu0 0
  %63 = vmatprep.subr.bf16.mxu0 0
  %64 = vmatpush1.bf16.msra.mxu0 0
  %65 = vmatprep.subr.bf16.mxu0 0
  %66 = vmatpush1.bf16.msra.mxu0 0
  %67 = vmatprep.subr.bf16.mxu0 0
  %68 = vmatpush1.bf16.msra.mxu0 0
  %69 = vmatprep.subr.bf16.mxu0 0
  %70 = vmatpush1.bf16.msra.mxu0 0
  %71 = vmatprep.subr.bf16.mxu0 0
  %72 = vmatpush1.bf16.msra.mxu0 0
  %73 = vmatprep.subr.bf16.mxu0 0
  %74 = vmatpush1.bf16.msra.mxu0 0
  %75 = vmatprep.subr.bf16.mxu0 0
  %76 = vmatpush1.bf16.msra.mxu0 0
  %77 = vmatprep.subr.bf16.mxu0 0
  %78 = vmatpush1.bf16.msra.mxu0 0
  %79 = vmatprep.subr.bf16.mxu0 0
  %80 = vmatpush1.bf16.msra.mxu0 0
  %81 = vmatprep.subr.bf16.mxu0 0
  %82 = vmatpush1.bf16.msra.mxu0 0
  %83 = vmatprep.mubr.bf16.mxu0 0
  %84 = vmatmul.mubr.bf16.gmra.mrb[0].mxu0 %v46
  %v85 = vpop.f32.mrb[0].mxu0
  %v86 = vadd.f32 %v26, %v85
  %v87 = vpop.f32.mrb[0].mxu0
  %v88 = vpop.f32.mrb[0].mxu0
  %v89 = vadd.f32 %v26, %v88
  %v90 = vpop.f32.mrb[0].mxu0
  %91 = vmatprep.mubr.bf16.mxu0 0
  %92 = vmatmul.mubr.bf16.gmra.mrb[0].mxu0 %v49
  %v93 = vpop.f32.mrb[0].mxu0
  %v94 = vadd.f32 %v26, %v93
  %v95 = vpop.f32.mrb[0].mxu0
  %v96 = vpop.f32.mrb[0].mxu0
  %v97 = vadd.f32 %v26, %v96
  %v98 = vpop.f32.mrb[0].mxu0
  %99 = vdwg.mxu0
  %v100 = vmax.f32 %v86, 0.0
  %v101 = vmax.f32 %v89, 0.0
  %v102 = vmax.f32 %v94, 0.0
  %v103 = vmax.f32 %v97, 0.0
  %vm104 = vcmask 261120
  %105 = vst.msk [vmem:[%s3] sm:$0xff] %vm104, %v100
  %106 = vst.msk [vmem:[%s3 + $0x8] sm:$0xff] %vm104, %v101
  %107 = vst.msk [vmem:[%s3 + $0x10] sm:$0xff] %vm104, %v102
  %108 = vst.msk [vmem:[%s3 + $0x18] sm:$0xff] %vm104, %v103
  // Predicated region
  $region14: #{idisc_erp_forward.22} parent=0 // pred_check
    _
  $region15: #{idisc_erp_forward.22} parent=0 // pred_check_branch
    %110 = sbr.rel (0) target = $region17
  $region16: #{idisc_erp_forward.22} parent=0 // pred_region
    _
  $region17: #{idisc_erp_forward.22} parent=0 // pred_fallthru
    _
  // Predicated region
  $region18: #{idisc_erp_forward.22} parent=0 // pred_check
    _
  $region19: #{idisc_erp_forward.22} parent=0 // pred_check_branch
    %112 = sbr.rel (0) target = $region21
  $region20: #{idisc_erp_forward.22} parent=0 // pred_region
    _
  $region21: #{idisc_erp_forward.22} parent=0 // pred_fallthru
    _

// kernel: idisc_erp_forward.19
$region0: #{idisc_erp_forward.19}
  #allocation0 [shape = 'u32[]', space=smem, size = 0x4, offset = 0x4, fixed_abs, tag = 'smem constant byte address 0x4 - core index']
  #allocation1 [shape = 'u32[144,128]{1,0:T(1,128)}', space=vmem, size = 0x12000, scoped, tag = 'internal scratch']
  %s0 = inlined_call_operand.vmem [shape: bf16[128,3], index: 0, kind: input, shape index: {}]
  %s1 = inlined_call_operand.vmem [shape: bf16[3,8], index: 1, kind: input, shape index: {}]
  %s2 = inlined_call_operand.vmem [shape: f32[1,8], index: 2, kind: input, shape index: {}]
  %s3 = inlined_call_operand.vmem [shape: f32[128,8], index: 3, kind: output, shape index: {}]
  %s4 = sld [smem:[#allocation0]]
  $region22: #{idisc_erp_forward.19} parent=0
    _
  %s6 = ssub.s32 1, %s4
  %s7 = scalar_select 0, %s6, %s4
  // Predicated region
  $region2: #{idisc_erp_forward.19} parent=0 // pred_check
    _
  $region3: #{idisc_erp_forward.19} parent=0 // pred_check_branch
    %9 = sbr.rel (0) target = $region5
  $region4: #{idisc_erp_forward.19} parent=0 // pred_region
    _
  $region5: #{idisc_erp_forward.19} parent=0 // pred_fallthru
    _
  // Predicated region
  $region6: #{idisc_erp_forward.19} parent=0 // pred_check
    _
  $region7: #{idisc_erp_forward.19} parent=0 // pred_check_branch
    %11 = sbr.rel (0) target = $region9
  $region8: #{idisc_erp_forward.19} parent=0 // pred_region
    _
  $region9: #{idisc_erp_forward.19} parent=0 // pred_fallthru
    _
  // Predicated region
  $region10: #{idisc_erp_forward.19} parent=0 // pred_check
    _
  $region11: #{idisc_erp_forward.19} parent=0 // pred_check_branch
    %13 = sbr.rel (0) target = $region13
  $region12: #{idisc_erp_forward.19} parent=0 // pred_region
    _
  $region13: #{idisc_erp_forward.19} parent=0 // pred_fallthru
    _
  %v15 = vld [vmem:[%s0] sm:$0xf]
  %v16 = vld [vmem:[%s0 + $0x4] sm:$0xf]
  %v17 = vld [vmem:[%s0 + $0x8] sm:$0xf]
  %v18 = vld [vmem:[%s0 + $0xc] sm:$0xf]
  %v19 = vld [vmem:[%s0 + $0x10] sm:$0xf]
  %v20 = vld [vmem:[%s0 + $0x14] sm:$0xf]
  %v21 = vld [vmem:[%s0 + $0x18] sm:$0xf]
  %v22 = vld [vmem:[%s0 + $0x1c] sm:$0xf]
  %v23 = vld [vmem:[%s0 + $0x20] sm:$0xf]
  %v24 = vld [vmem:[%s0 + $0x24] sm:$0xf]
  %v25 = vld [vmem:[%s0 + $0x28] sm:$0xf]
  %v26 = vld [vmem:[%s0 + $0x2c] sm:$0xf]
  %v27 = vld [vmem:[%s0 + $0x30] sm:$0xf]
  %v28 = vld [vmem:[%s0 + $0x34] sm:$0xf]
  %v29 = vld [vmem:[%s0 + $0x38] sm:$0xf]
  %v30 = vld [vmem:[%s0 + $0x3c] sm:$0xf]
  %v31 = vld [vmem:[%s1] sm:$0x3]
  %v32 = vld [vmem:[%s2] sm:$0x1]
  %v34 = vlaneseq
  %v35 = vshrl.u32 %v34, 7
  %v36 = vsub.s32 0, %v35
  %v37 = vrot.slane %v32, %v36
  %v55 = vunpack.c.l.b16 %v15
  %v56 = vunpack.c.l.b16 %v16
  %v57 = vunpack.c.l.b16 %v17
  %v58 = vunpack.c.l.b16 %v18
  %v59 = vunpack.c.l.b16 %v19
  %v60 = vunpack.c.l.b16 %v20
  %v61 = vunpack.c.l.b16 %v21
  %v62 = vunpack.c.l.b16 %v22
  %v63 = vunpack.c.l.b16 %v23
  %v64 = vunpack.c.l.b16 %v24
  %v65 = vunpack.c.l.b16 %v25
  %v66 = vunpack.c.l.b16 %v26
  %v67 = vunpack.c.l.b16 %v27
  %v68 = vunpack.c.l.b16 %v28
  %v69 = vunpack.c.l.b16 %v29
  %v70 = vunpack.c.l.b16 %v30
  %v71 = vpack.c.b16 %v56, %v55
  %v72 = vpack.c.b16 %v58, %v57
  %v73 = vpack.c.b16 %v60, %v59
  %v74 = vpack.c.b16 %v62, %v61
  %v75 = vpack.c.b16 %v64, %v63
  %v76 = vpack.c.b16 %v66, %v65
  %v77 = vpack.c.b16 %v68, %v67
  %v78 = vpack.c.b16 %v70, %v69
  %vm79 = vcmask 23552
  %v81 = vsel %vm79, %v71, 0
  %v84 = vsel %vm79, %v72, 0
  %v87 = vsel %vm79, %v73, 0
  %v90 = vsel %vm79, %v74, 0
  %v93 = vsel %vm79, %v75, 0
  %v96 = vsel %vm79, %v76, 0
  %v99 = vsel %vm79, %v77, 0
  %v102 = vsel %vm79, %v78, 0
  %vm104 = vcmask 1040384
  %vm105 = vcmask 1041408
  %v106 = vsel %vm104, 4294967295, 65535
  %v107 = vsel %vm105, %v106, 0
  %v109 = vand.u32 %v31, %v107
  %111 = vmatprep.subr.bf16.mxu0 0
  %112 = vmatpush1.bf16.msra.mxu0 %v109
  %113 = vmatprep.subr.bf16.mxu0 0
  %114 = vmatpush1.bf16.msra.mxu0 0
  %115 = vmatprep.subr.bf16.mxu0 0
  %116 = vmatpush1.bf16.msra.mxu0 0
  %117 = vmatprep.subr.bf16.mxu0 0
  %118 = vmatpush1.bf16.msra.mxu0 0
  %119 = vmatprep.subr.bf16.mxu0 0
  %120 = vmatpush1.bf16.msra.mxu0 0
  %121 = vmatprep.subr.bf16.mxu0 0
  %122 = vmatpush1.bf16.msra.mxu0 0
  %123 = vmatprep.subr.bf16.mxu0 0
  %124 = vmatpush1.bf16.msra.mxu0 0
  %125 = vmatprep.subr.bf16.mxu0 0
  %126 = vmatpush1.bf16.msra.mxu0 0
  %127 = vmatprep.subr.bf16.mxu0 0
  %128 = vmatpush1.bf16.msra.mxu0 0
  %129 = vmatprep.subr.bf16.mxu0 0
  %130 = vmatpush1.bf16.msra.mxu0 0
  %131 = vmatprep.subr.bf16.mxu0 0
  %132 = vmatpush1.bf16.msra.mxu0 0
  %133 = vmatprep.subr.bf16.mxu0 0
  %134 = vmatpush1.bf16.msra.mxu0 0
  %135 = vmatprep.subr.bf16.mxu0 0
  %136 = vmatpush1.bf16.msra.mxu0 0
  %137 = vmatprep.subr.bf16.mxu0 0
  %138 = vmatpush1.bf16.msra.mxu0 0
  %139 = vmatprep.subr.bf16.mxu0 0
  %140 = vmatpush1.bf16.msra.mxu0 0
  %141 = vmatprep.subr.bf16.mxu0 0
  %142 = vmatpush1.bf16.msra.mxu0 0
  %143 = vmatprep.mubr.bf16.mxu0 0
  %144 = vmatmul.mubr.bf16.gmra.mrb[0].mxu0 %v81
  %v145 = vpop.f32.mrb[0].mxu0
  %v146 = vadd.f32 %v37, %v145
  %v147 = vpop.f32.mrb[0].mxu0
  %v148 = vpop.f32.mrb[0].mxu0
  %v149 = vadd.f32 %v37, %v148
  %v150 = vpop.f32.mrb[0].mxu0
  %151 = vmatprep.mubr.bf16.mxu0 0
  %152 = vmatmul.mubr.bf16.gmra.mrb[0].mxu0 %v84
  %v153 = vpop.f32.mrb[0].mxu0
  %v154 = vadd.f32 %v37, %v153
  %v155 = vpop.f32.mrb[0].mxu0
  %v156 = vpop.f32.mrb[0].mxu0
  %v157 = vadd.f32 %v37, %v156
  %v158 = vpop.f32.mrb[0].mxu0
  %159 = vmatprep.mubr.bf16.mxu0 0
  %160 = vmatmul.mubr.bf16.gmra.mrb[0].mxu0 %v87
  %v161 = vpop.f32.mrb[0].mxu0
  %v162 = vadd.f32 %v37, %v161
  %v163 = vpop.f32.mrb[0].mxu0
  %v164 = vpop.f32.mrb[0].mxu0
  %v165 = vadd.f32 %v37, %v164
  %v166 = vpop.f32.mrb[0].mxu0
  %167 = vmatprep.mubr.bf16.mxu0 0
  %168 = vmatmul.mubr.bf16.gmra.mrb[0].mxu0 %v90
  %v169 = vpop.f32.mrb[0].mxu0
  %v170 = vadd.f32 %v37, %v169
  %v171 = vpop.f32.mrb[0].mxu0
  %v172 = vpop.f32.mrb[0].mxu0
  %v173 = vadd.f32 %v37, %v172
  %v174 = vpop.f32.mrb[0].mxu0
  %175 = vmatprep.mubr.bf16.mxu0 0
  %176 = vmatmul.mubr.bf16.gmra.mrb[0].mxu0 %v93
  %v177 = vpop.f32.mrb[0].mxu0
  %v178 = vadd.f32 %v37, %v177
  %v179 = vpop.f32.mrb[0].mxu0
  %v180 = vpop.f32.mrb[0].mxu0
  %v181 = vadd.f32 %v37, %v180
  %v182 = vpop.f32.mrb[0].mxu0
  %183 = vmatprep.mubr.bf16.mxu0 0
  %184 = vmatmul.mubr.bf16.gmra.mrb[0].mxu0 %v96
  %v185 = vpop.f32.mrb[0].mxu0
  %v186 = vadd.f32 %v37, %v185
  %v187 = vpop.f32.mrb[0].mxu0
  %v188 = vpop.f32.mrb[0].mxu0
  %v189 = vadd.f32 %v37, %v188
  %v190 = vpop.f32.mrb[0].mxu0
  %191 = vmatprep.mubr.bf16.mxu0 0
  %192 = vmatmul.mubr.bf16.gmra.mrb[0].mxu0 %v99
  %v193 = vpop.f32.mrb[0].mxu0
  %v194 = vadd.f32 %v37, %v193
  %v195 = vpop.f32.mrb[0].mxu0
  %v196 = vpop.f32.mrb[0].mxu0
  %v197 = vadd.f32 %v37, %v196
  %v198 = vpop.f32.mrb[0].mxu0
  %199 = vmatprep.mubr.bf16.mxu0 0
  %200 = vmatmul.mubr.bf16.gmra.mrb[0].mxu0 %v102
  %v201 = vpop.f32.mrb[0].mxu0
  %v202 = vadd.f32 %v37, %v201
  %v203 = vpop.f32.mrb[0].mxu0
  %v204 = vpop.f32.mrb[0].mxu0
  %v205 = vadd.f32 %v37, %v204
  %v206 = vpop.f32.mrb[0].mxu0
  %207 = vdwg.mxu0
  %v208 = vmax.f32 %v146, 0.0
  %v209 = vmax.f32 %v149, 0.0
  %v210 = vmax.f32 %v154, 0.0
  %v211 = vmax.f32 %v157, 0.0
  %v212 = vmax.f32 %v162, 0.0
  %v213 = vmax.f32 %v165, 0.0
  %v214 = vmax.f32 %v170, 0.0
  %v215 = vmax.f32 %v173, 0.0
  %v216 = vmax.f32 %v178, 0.0
  %v217 = vmax.f32 %v181, 0.0
  %v218 = vmax.f32 %v186, 0.0
  %v219 = vmax.f32 %v189, 0.0
  %v220 = vmax.f32 %v194, 0.0
  %v221 = vmax.f32 %v197, 0.0
  %v222 = vmax.f32 %v202, 0.0
  %v223 = vmax.f32 %v205, 0.0
  %vm224 = vcmask 64512
  %225 = vst.msk [vmem:[%s3] sm:$0xff] %vm224, %v208
  %226 = vst.msk [vmem:[%s3 + $0x8] sm:$0xff] %vm224, %v209
  %227 = vst.msk [vmem:[%s3 + $0x10] sm:$0xff] %vm224, %v210
  %228 = vst.msk [vmem:[%s3 + $0x18] sm:$0xff] %vm224, %v211
  %229 = vst.msk [vmem:[%s3 + $0x20] sm:$0xff] %vm224, %v212
  %230 = vst.msk [vmem:[%s3 + $0x28] sm:$0xff] %vm224, %v213
  %231 = vst.msk [vmem:[%s3 + $0x30] sm:$0xff] %vm224, %v214
  %232 = vst.msk [vmem:[%s3 + $0x38] sm:$0xff] %vm224, %v215
  %233 = vst.msk [vmem:[%s3 + $0x40] sm:$0xff] %vm224, %v216
  %234 = vst.msk [vmem:[%s3 + $0x48] sm:$0xff] %vm224, %v217
  %235 = vst.msk [vmem:[%s3 + $0x50] sm:$0xff] %vm224, %v218
  %236 = vst.msk [vmem:[%s3 + $0x58] sm:$0xff] %vm224, %v219
  %237 = vst.msk [vmem:[%s3 + $0x60] sm:$0xff] %vm224, %v220
  %238 = vst.msk [vmem:[%s3 + $0x68] sm:$0xff] %vm224, %v221
  %239 = vst.msk [vmem:[%s3 + $0x70] sm:$0xff] %vm224, %v222
  %240 = vst.msk [vmem:[%s3 + $0x78] sm:$0xff] %vm224, %v223
  // Predicated region
  $region14: #{idisc_erp_forward.19} parent=0 // pred_check
    _
  $region15: #{idisc_erp_forward.19} parent=0 // pred_check_branch
    %242 = sbr.rel (0) target = $region17
  $region16: #{idisc_erp_forward.19} parent=0 // pred_region
    _
  $region17: #{idisc_erp_forward.19} parent=0 // pred_fallthru
    _
  // Predicated region
  $region18: #{idisc_erp_forward.19} parent=0 // pred_check
    _
  $region19: #{idisc_erp_forward.19} parent=0 // pred_check_branch
    %244 = sbr.rel (0) target = $region21
  $region20: #{idisc_erp_forward.19} parent=0 // pred_region
    _
  $region21: #{idisc_erp_forward.19} parent=0 // pred_fallthru
    _

// kernel: squeeze.1
$region0: #{squeeze.1}
  %s0 = inlined_call_operand.vmem [shape: f32[2,1,16,16], index: 0, kind: input, shape index: {}]
  %s1 = inlined_call_operand.vmem [shape: f32[2,256], index: 1, kind: output, shape index: {}]
  $region1: #{squeeze.1} parent=0
    #allocation0 [shape = 'u8[8192]{0}', space=vmem, size = 0x2000, scoped, tag = 'scoped mem for output reshape']
    %v2 = vld [vmem:[%s0] ss:$8 sm:$0xf]
    %vm3 = vcmask 130048
    %4 = vst.msk [vmem:[#allocation0] ss:$8 sm:$0x3] %vm3, %v2
    %s5 = scalar_lea.vmem [#allocation0], 4294967281
    %6 = vst.msk [vmem:[%s5] ss:$8 sm:$0xc] %vm3, %v2
    %s7 = scalar_lea.vmem %s0, 7
    %s8 = smov 3
    %v9 = vld [vmem:[%s7] ss:$16 sm:%s8]
    %s10 = scalar_lea.vmem %s0, 4294967279
    %s11 = smov 12
    %v12 = vld [vmem:[%s10] ss:$16 sm:%s11]
    %vm13 = vcmask 1043458
    %v14 = vsel %vm13, %v12, %v9
    %15 = vrot.lane.b32.xlu0 %v14, 112
    %v16 = vpop.permute.xlu0 %15
    %vm17 = vcmask 1048448
    %18 = vst.msk [vmem:[#allocation0] sm:$0x3] %vm17, %v16
    %s19 = scalar_lea.vmem [#allocation0], 6
    %20 = vst.msk [vmem:[%s19] sm:$0xc] %vm17, %v16
    %s21 = scalar_lea.vmem %s0, 6
    %s22 = smov 3
    %v23 = vld [vmem:[%s21] ss:$16 sm:%s22]
    %s24 = scalar_lea.vmem %s0, 4294967278
    %s25 = smov 12
    %v26 = vld [vmem:[%s24] ss:$16 sm:%s25]
    %vm27 = vcmask 1043458
    %v28 = vsel %vm27, %v26, %v23
    %29 = vrot.lane.b32.xlu0 %v28, 96
    %v30 = vpop.permute.xlu0 %29
    %vm31 = vcmask 917248
    %32 = vst.msk [vmem:[#allocation0] sm:$0x3] %vm31, %v30
    %s33 = scalar_lea.vmem [#allocation0], 6
    %34 = vst.msk [vmem:[%s33] sm:$0xc] %vm31, %v30
    %s35 = scalar_lea.vmem %s0, 5
    %s36 = smov 3
    %v37 = vld [vmem:[%s35] ss:$16 sm:%s36]
    %s38 = scalar_lea.vmem %s0, 4294967277
    %s39 = smov 12
    %v40 = vld [vmem:[%s38] ss:$16 sm:%s39]
    %vm41 = vcmask 1043458
    %v42 = vsel %vm41, %v40, %v37
    %43 = vrot.lane.b32.xlu0 %v42, 80
    %v44 = vpop.permute.xlu0 %43
    %vm45 = vcmask 786048
    %46 = vst.msk [vmem:[#allocation0] sm:$0x3] %vm45, %v44
    %s47 = scalar_lea.vmem [#allocation0], 6
    %48 = vst.msk [vmem:[%s47] sm:$0xc] %vm45, %v44
    %s49 = scalar_lea.vmem %s0, 4
    %s50 = smov 3
    %v51 = vld [vmem:[%s49] ss:$16 sm:%s50]
    %s52 = scalar_lea.vmem %s0, 4294967276
    %s53 = smov 12
    %v54 = vld [vmem:[%s52] ss:$16 sm:%s53]
    %vm55 = vcmask 1043458
    %v56 = vsel %vm55, %v54, %v51
    %57 = vrot.lane.b32.xlu0 %v56, 64
    %v58 = vpop.permute.xlu0 %57
    %vm59 = vcmask 654848
    %60 = vst.msk [vmem:[#allocation0] sm:$0x3] %vm59, %v58
    %s61 = scalar_lea.vmem [#allocation0], 6
    %62 = vst.msk [vmem:[%s61] sm:$0xc] %vm59, %v58
    %s63 = scalar_lea.vmem %s0, 3
    %s64 = smov 3
    %v65 = vld [vmem:[%s63] ss:$16 sm:%s64]
    %s66 = scalar_lea.vmem %s0, 4294967275
    %s67 = smov 12
    %v68 = vld [vmem:[%s66] ss:$16 sm:%s67]
    %vm69 = vcmask 1043458
    %v70 = vsel %vm69, %v68, %v65
    %71 = vrot.lane.b32.xlu0 %v70, 48
    %v72 = vpop.permute.xlu0 %71
    %vm73 = vcmask 523648
    %74 = vst.msk [vmem:[#allocation0] sm:$0x3] %vm73, %v72
    %s75 = scalar_lea.vmem [#allocation0], 6
    %76 = vst.msk [vmem:[%s75] sm:$0xc] %vm73, %v72
    %s77 = scalar_lea.vmem %s0, 2
    %s78 = smov 3
    %v79 = vld [vmem:[%s77] ss:$16 sm:%s78]
    %s80 = scalar_lea.vmem %s0, 4294967274
    %s81 = smov 12
    %v82 = vld [vmem:[%s80] ss:$16 sm:%s81]
    %vm83 = vcmask 1043458
    %v84 = vsel %vm83, %v82, %v79
    %85 = vrot.lane.b32.xlu0 %v84, 32
    %v86 = vpop.permute.xlu0 %85
    %vm87 = vcmask 392448
    %88 = vst.msk [vmem:[#allocation0] sm:$0x3] %vm87, %v86
    %s89 = scalar_lea.vmem [#allocation0], 6
    %90 = vst.msk [vmem:[%s89] sm:$0xc] %vm87, %v86
    %s91 = scalar_lea.vmem %s0, 1
    %s92 = smov 3
    %v93 = vld [vmem:[%s91] ss:$16 sm:%s92]
    %s94 = scalar_lea.vmem %s0, 4294967273
    %s95 = smov 12
    %v96 = vld [vmem:[%s94] ss:$16 sm:%s95]
    %vm97 = vcmask 1043458
    %v98 = vsel %vm97, %v96, %v93
    %99 = vrot.lane.b32.xlu0 %v98, 16
    %v100 = vpop.permute.xlu0 %99
    %vm101 = vcmask 261248
    %102 = vst.msk [vmem:[#allocation0] sm:$0x3] %vm101, %v100
    %s103 = scalar_lea.vmem [#allocation0], 6
    %104 = vst.msk [vmem:[%s103] sm:$0xc] %vm101, %v100
    %s106 = sshllo.u32 0, 2
    %v108 = vld [vmem:[#allocation0] sm:%s106]
    %s109 = sshllo.u32 0, 2
    %110 = vst [vmem:[%s1] sm:%s109] %v108
    %s111 = scalar_lea.vmem [#allocation0], 8
    %v112 = vld [vmem:[%s111] sm:%s106]
    %s113 = sshllo.u32 0, 2
    %s114 = scalar_lea.vmem %s1, 2
    %115 = vst [vmem:[%s114] sm:%s113] %v112

// kernel: idisc_erp_forward.29
$region0: #{idisc_erp_forward.29}
  #allocation0 [shape = 'u32[]', space=smem, size = 0x4, offset = 0x4, fixed_abs, tag = 'smem constant byte address 0x4 - core index']
  #allocation1 [shape = 'u32[144,128]{1,0:T(1,128)}', space=vmem, size = 0x12000, scoped, tag = 'internal scratch']
  %s0 = inlined_call_operand.vmem [shape: bf16[8,4], index: 0, kind: input, shape index: {}]
  %s1 = inlined_call_operand.vmem [shape: bf16[4,32], index: 1, kind: input, shape index: {}]
  %s2 = inlined_call_operand.vmem [shape: f32[1,32], index: 2, kind: input, shape index: {}]
  %s3 = inlined_call_operand.vmem [shape: f32[8,32], index: 3, kind: output, shape index: {}]
  %s4 = sld [smem:[#allocation0]]
  $region22: #{idisc_erp_forward.29} parent=0
    _
  %s6 = ssub.s32 1, %s4
  %s7 = scalar_select 0, %s6, %s4
  // Predicated region
  $region2: #{idisc_erp_forward.29} parent=0 // pred_check
    _
  $region3: #{idisc_erp_forward.29} parent=0 // pred_check_branch
    %9 = sbr.rel (0) target = $region5
  $region4: #{idisc_erp_forward.29} parent=0 // pred_region
    _
  $region5: #{idisc_erp_forward.29} parent=0 // pred_fallthru
    _
  // Predicated region
  $region6: #{idisc_erp_forward.29} parent=0 // pred_check
    _
  $region7: #{idisc_erp_forward.29} parent=0 // pred_check_branch
    %11 = sbr.rel (0) target = $region9
  $region8: #{idisc_erp_forward.29} parent=0 // pred_region
    _
  $region9: #{idisc_erp_forward.29} parent=0 // pred_fallthru
    _
  // Predicated region
  $region10: #{idisc_erp_forward.29} parent=0 // pred_check
    _
  $region11: #{idisc_erp_forward.29} parent=0 // pred_check_branch
    %13 = sbr.rel (0) target = $region13
  $region12: #{idisc_erp_forward.29} parent=0 // pred_region
    _
  $region13: #{idisc_erp_forward.29} parent=0 // pred_fallthru
    _
  %v15 = vld [vmem:[%s0] sm:$0xf]
  %v16 = vld [vmem:[%s1] sm:$0x3]
  %v17 = vld [vmem:[%s2] sm:$0x1]
  %v19 = vlaneseq
  %v20 = vshrl.u32 %v19, 7
  %v21 = vsub.s32 0, %v20
  %v22 = vrot.slane %v17, %v21
  %vm24 = vcmask 31744
  %v26 = vsel %vm24, %v15, 0
  %vm28 = vcmask 1041408
  %v30 = vsel %vm28, %v16, 0
  %32 = vmatprep.subr.bf16.mxu0 0
  %33 = vmatpush1.bf16.msra.mxu0 %v30
  %34 = vmatprep.subr.bf16.mxu0 0
  %35 = vmatpush1.bf16.msra.mxu0 0
  %36 = vmatprep.subr.bf16.mxu0 0
  %37 = vmatpush1.bf16.msra.mxu0 0
  %38 = vmatprep.subr.bf16.mxu0 0
  %39 = vmatpush1.bf16.msra.mxu0 0
  %40 = vmatprep.subr.bf16.mxu0 0
  %41 = vmatpush1.bf16.msra.mxu0 0
  %42 = vmatprep.subr.bf16.mxu0 0
  %43 = vmatpush1.bf16.msra.mxu0 0
  %44 = vmatprep.subr.bf16.mxu0 0
  %45 = vmatpush1.bf16.msra.mxu0 0
  %46 = vmatprep.subr.bf16.mxu0 0
  %47 = vmatpush1.bf16.msra.mxu0 0
  %48 = vmatprep.subr.bf16.mxu0 0
  %49 = vmatpush1.bf16.msra.mxu0 0
  %50 = vmatprep.subr.bf16.mxu0 0
  %51 = vmatpush1.bf16.msra.mxu0 0
  %52 = vmatprep.subr.bf16.mxu0 0
  %53 = vmatpush1.bf16.msra.mxu0 0
  %54 = vmatprep.subr.bf16.mxu0 0
  %55 = vmatpush1.bf16.msra.mxu0 0
  %56 = vmatprep.subr.bf16.mxu0 0
  %57 = vmatpush1.bf16.msra.mxu0 0
  %58 = vmatprep.subr.bf16.mxu0 0
  %59 = vmatpush1.bf16.msra.mxu0 0
  %60 = vmatprep.subr.bf16.mxu0 0
  %61 = vmatpush1.bf16.msra.mxu0 0
  %62 = vmatprep.subr.bf16.mxu0 0
  %63 = vmatpush1.bf16.msra.mxu0 0
  %64 = vmatprep.mubr.bf16.mxu0 0
  %65 = vmatmul.mubr.bf16.gmra.mrb[0].mxu0 %v26
  %v66 = vpop.f32.mrb[0].mxu0
  %v67 = vadd.f32 %v22, %v66
  %v68 = vpop.f32.mrb[0].mxu0
  %v69 = vpop.f32.mrb[0].mxu0
  %v70 = vpop.f32.mrb[0].mxu0
  %71 = vdwg.mxu0
  %vm72 = vcmask 261120
  %73 = vst.msk [vmem:[%s3] sm:$0xff] %vm72, %v67
  // Predicated region
  $region14: #{idisc_erp_forward.29} parent=0 // pred_check
    _
  $region15: #{idisc_erp_forward.29} parent=0 // pred_check_branch
    %75 = sbr.rel (0) target = $region17
  $region16: #{idisc_erp_forward.29} parent=0 // pred_region
    _
  $region17: #{idisc_erp_forward.29} parent=0 // pred_fallthru
    _
  // Predicated region
  $region18: #{idisc_erp_forward.29} parent=0 // pred_check
    _
  $region19: #{idisc_erp_forward.29} parent=0 // pred_check_branch
    %77 = sbr.rel (0) target = $region21
  $region20: #{idisc_erp_forward.29} parent=0 // pred_region
    _
  $region21: #{idisc_erp_forward.29} parent=0 // pred_fallthru
    _

// kernel: idisc_erp_forward.25
$region0: #{idisc_erp_forward.25}
  #allocation0 [shape = 'u32[]', space=smem, size = 0x4, offset = 0x4, fixed_abs, tag = 'smem constant byte address 0x4 - core index']
  #allocation1 [shape = 'u32[144,128]{1,0:T(1,128)}', space=vmem, size = 0x12000, scoped, tag = 'internal scratch']
  %s0 = inlined_call_operand.vmem [shape: f32[2,256], index: 0, kind: input, shape index: {}]
  %s1 = inlined_call_operand.vmem [shape: f32[2,256], index: 1, kind: output, shape index: {}]
  %s2 = sld [smem:[#allocation0]]
  $region14: #{idisc_erp_forward.25} parent=0
    _
  %s4 = ssub.s32 1, %s2
  %s5 = scalar_select 0, %s4, %s2
  // Predicated region
  $region2: #{idisc_erp_forward.25} parent=0 // pred_check
    _
  $region3: #{idisc_erp_forward.25} parent=0 // pred_check_branch
    %7 = sbr.rel (0) target = $region5
  $region4: #{idisc_erp_forward.25} parent=0 // pred_region
    _
  $region5: #{idisc_erp_forward.25} parent=0 // pred_fallthru
    _
  %v8 = vld [vmem:[%s0] sm:$0xf]
  %v11 = vunpack.c.l.s4 1983009808
  %v12 = vunpack.c.0.s8 %v11
  %v13 = vlaneseq
  %v14 = vshrl.u32 %v13, 7
  %v15 = vsub.s32 %v12, %v14
  %v16 = vrot.slane %v8, %v15
  %v17 = vcombine.high %v16, %v16
  %vm20 = vcmask 1041408
  %v21 = vsel %vm20, %v16, inf
  %v22 = vsel %vm20, %v17, inf
  %v23 = vmin.f32 %v21, %v22
  %24 = vmin.xlane.f32.xlu0 %v23
  %v25 = vpop.xlane.xlu0 %24
  %v26 = vrot.slane %v25, 4
  %v27 = vmin.f32 %v25, %v26
  %v28 = vrot.slane %v27, 2
  %v29 = vmin.f32 %v27, %v28
  %v30 = vrot.slane %v29, 1
  %v31 = vmin.f32 %v29, %v30
  %s32 = vtos %v31
  %v33 = vstv %s32
  %vm34 = vcmp.gt.f32.partialorder %v8, %v33
  %v35 = vsel %vm34, 1, 0
  %v36 = vcvt.s32.f32 %v35
  %37 = vst [vmem:[%s1] sm:$0xf] %v36
  // Predicated region
  $region6: #{idisc_erp_forward.25} parent=0 // pred_check
    _
  $region7: #{idisc_erp_forward.25} parent=0 // pred_check_branch
    %39 = sbr.rel (0) target = $region9
  $region8: #{idisc_erp_forward.25} parent=0 // pred_region
    _
  $region9: #{idisc_erp_forward.25} parent=0 // pred_fallthru
    _
  // Predicated region
  $region10: #{idisc_erp_forward.25} parent=0 // pred_check
    _
  $region11: #{idisc_erp_forward.25} parent=0 // pred_check_branch
    %41 = sbr.rel (0) target = $region13
  $region12: #{idisc_erp_forward.25} parent=0 // pred_region
    _
  $region13: #{idisc_erp_forward.25} parent=0 // pred_fallthru
    _

// kernel: idisc_erp_forward.27
$region0: #{idisc_erp_forward.27}
  #allocation0 [shape = 'u32[]', space=smem, size = 0x4, offset = 0x4, fixed_abs, tag = 'smem constant byte address 0x4 - core index']
  #allocation1 [shape = 'u32[144,128]{1,0:T(1,128)}', space=vmem, size = 0x12000, scoped, tag = 'internal scratch']
  %s0 = inlined_call_operand.vmem [shape: f32[1,8,32], index: 0, kind: input, shape index: {}]
  %s1 = inlined_call_operand.vmem [shape: f32[2,1,32], index: 1, kind: input, shape index: {}]
  %s2 = inlined_call_operand.vmem [shape: bf16[2,16,32], index: 2, kind: input, shape index: {}]
  %s3 = inlined_call_operand.vmem [shape: f32[2,1,16], index: 3, kind: input, shape index: {}]
  %s4 = inlined_call_operand.vmem [shape: f32[2,8,32], index: 4, kind: output, shape index: {}]
  %s5 = sld [smem:[#allocation0]]
  $region26: #{idisc_erp_forward.27} parent=0
    _
  %s7 = ssub.s32 1, %s5
  %s8 = scalar_select 0, %s7, %s5
  // Predicated region
  $region2: #{idisc_erp_forward.27} parent=0 // pred_check
    _
  $region3: #{idisc_erp_forward.27} parent=0 // pred_check_branch
    %10 = sbr.rel (0) target = $region5
  $region4: #{idisc_erp_forward.27} parent=0 // pred_region
    _
  $region5: #{idisc_erp_forward.27} parent=0 // pred_fallthru
    _
  // Predicated region
  $region6: #{idisc_erp_forward.27} parent=0 // pred_check
    _
  $region7: #{idisc_erp_forward.27} parent=0 // pred_check_branch
    %12 = sbr.rel (0) target = $region9
  $region8: #{idisc_erp_forward.27} parent=0 // pred_region
    _
  $region9: #{idisc_erp_forward.27} parent=0 // pred_fallthru
    _
  // Predicated region
  $region10: #{idisc_erp_forward.27} parent=0 // pred_check
    _
  $region11: #{idisc_erp_forward.27} parent=0 // pred_check_branch
    %14 = sbr.rel (0) target = $region13
  $region12: #{idisc_erp_forward.27} parent=0 // pred_region
    _
  $region13: #{idisc_erp_forward.27} parent=0 // pred_fallthru
    _
  // Predicated region
  $region14: #{idisc_erp_forward.27} parent=0 // pred_check
    _
  $region15: #{idisc_erp_forward.27} parent=0 // pred_check_branch
    %16 = sbr.rel (0) target = $region17
  $region16: #{idisc_erp_forward.27} parent=0 // pred_region
    _
  $region17: #{idisc_erp_forward.27} parent=0 // pred_fallthru
    _
  %v18 = vld [vmem:[%s0] sm:$0xff]
  %v19 = vld [vmem:[%s1] sm:$0x1]
  %v20 = vld [vmem:[%s1 + $0x1] sm:$0x1]
  %v23 = vlaneseq
  %v24 = vshrl.u32 %v23, 7
  %v25 = vsub.s32 0, %v24
  %v26 = vrot.slane %v19, %v25
  %v27 = vlaneseq
  %v28 = vshrl.u32 %v27, 7
  %v29 = vsub.s32 0, %v28
  %v30 = vrot.slane %v20, %v29
  %v33 = vadd.f32 %v18, %v26
  %v34 = vadd.f32 %v18, %v30
  %v35 = vld [vmem:[%s2] sm:$0xf]
  %v36 = vld [vmem:[%s2 + $0x4] sm:$0xf]
  %v37 = vld [vmem:[%s2 + $0x8] sm:$0xf]
  %v38 = vld [vmem:[%s2 + $0xc] sm:$0xf]
  %v39 = vpack.c.bf16 %v33, %v33
  %v40 = vpack.c.bf16 %v34, %v34
  %v43 = vunpack.c.l.b16 %v35
  %v44 = vunpack.c.l.b16 %v36
  %v45 = vpack.c.b16 %v44, %v43
  %vm46 = vcmask 261120
  %v48 = vsel %vm46, %v39, 0
  %v51 = vsel %vm46, %v45, 0
  %53 = vmatprep.subr.bf16.mxu0 0
  %54 = vmatpush1.bf16.xpose.msra.mxu0 %v51
  %55 = vmatprep.subr.bf16.mxu0 0
  %56 = vmatpush1.bf16.xpose.msra.mxu0 0
  %57 = vmatprep.subr.bf16.mxu0 0
  %58 = vmatpush1.bf16.xpose.msra.mxu0 0
  %59 = vmatprep.subr.bf16.mxu0 0
  %60 = vmatpush1.bf16.xpose.msra.mxu0 0
  %61 = vmatprep.subr.bf16.mxu0 0
  %62 = vmatpush1.bf16.xpose.msra.mxu0 0
  %63 = vmatprep.subr.bf16.mxu0 0
  %64 = vmatpush1.bf16.xpose.msra.mxu0 0
  %65 = vmatprep.subr.bf16.mxu0 0
  %66 = vmatpush1.bf16.xpose.msra.mxu0 0
  %67 = vmatprep.subr.bf16.mxu0 0
  %68 = vmatpush1.bf16.xpose.msra.mxu0 0
  %69 = vmatprep.subr.bf16.mxu0 0
  %70 = vmatpush1.bf16.xpose.msra.mxu0 0
  %71 = vmatprep.subr.bf16.mxu0 0
  %72 = vmatpush1.bf16.xpose.msra.mxu0 0
  %73 = vmatprep.subr.bf16.mxu0 0
  %74 = vmatpush1.bf16.xpose.msra.mxu0 0
  %75 = vmatprep.subr.bf16.mxu0 0
  %76 = vmatpush1.bf16.xpose.msra.mxu0 0
  %77 = vmatprep.subr.bf16.mxu0 0
  %78 = vmatpush1.bf16.xpose.msra.mxu0 0
  %79 = vmatprep.subr.bf16.mxu0 0
  %80 = vmatpush1.bf16.xpose.msra.mxu0 0
  %81 = vmatprep.subr.bf16.mxu0 0
  %82 = vmatpush1.bf16.xpose.msra.mxu0 0
  %83 = vmatprep.subr.bf16.mxu0 0
  %84 = vmatpush1.bf16.xpose.msra.mxu0 0
  %85 = vmatprep.mubr.bf16.mxu0 0
  %86 = vmatmul.mubr.bf16.gmra.mrb[0].mxu0 %v48
  %v87 = vpop.f32.mrb[0].mxu0
  %v88 = vadd.f32 0.0, %v87
  %v89 = vpop.f32.mrb[0].mxu0
  %v90 = vpop.f32.mrb[0].mxu0
  %v91 = vpop.f32.mrb[0].mxu0
  %92 = vdwg.mxu0
  %v95 = vunpack.c.l.b16 %v37
  %v96 = vunpack.c.l.b16 %v38
  %v97 = vpack.c.b16 %v96, %v95
  %v99 = vsel %vm46, %v40, 0
  %v102 = vsel %vm46, %v97, 0
  %104 = vmatprep.subr.bf16.mxu0 0
  %105 = vmatpush1.bf16.xpose.msra.mxu0 %v102
  %106 = vmatprep.subr.bf16.mxu0 0
  %107 = vmatpush1.bf16.xpose.msra.mxu0 0
  %108 = vmatprep.subr.bf16.mxu0 0
  %109 = vmatpush1.bf16.xpose.msra.mxu0 0
  %110 = vmatprep.subr.bf16.mxu0 0
  %111 = vmatpush1.bf16.xpose.msra.mxu0 0
  %112 = vmatprep.subr.bf16.mxu0 0
  %113 = vmatpush1.bf16.xpose.msra.mxu0 0
  %114 = vmatprep.subr.bf16.mxu0 0
  %115 = vmatpush1.bf16.xpose.msra.mxu0 0
  %116 = vmatprep.subr.bf16.mxu0 0
  %117 = vmatpush1.bf16.xpose.msra.mxu0 0
  %118 = vmatprep.subr.bf16.mxu0 0
  %119 = vmatpush1.bf16.xpose.msra.mxu0 0
  %120 = vmatprep.subr.bf16.mxu0 0
  %121 = vmatpush1.bf16.xpose.msra.mxu0 0
  %122 = vmatprep.subr.bf16.mxu0 0
  %123 = vmatpush1.bf16.xpose.msra.mxu0 0
  %124 = vmatprep.subr.bf16.mxu0 0
  %125 = vmatpush1.bf16.xpose.msra.mxu0 0
  %126 = vmatprep.subr.bf16.mxu0 0
  %127 = vmatpush1.bf16.xpose.msra.mxu0 0
  %128 = vmatprep.subr.bf16.mxu0 0
  %129 = vmatpush1.bf16.xpose.msra.mxu0 0
  %130 = vmatprep.subr.bf16.mxu0 0
  %131 = vmatpush1.bf16.xpose.msra.mxu0 0
  %132 = vmatprep.subr.bf16.mxu0 0
  %133 = vmatpush1.bf16.xpose.msra.mxu0 0
  %134 = vmatprep.subr.bf16.mxu0 0
  %135 = vmatpush1.bf16.xpose.msra.mxu0 0
  %136 = vmatprep.mubr.bf16.mxu0 0
  %137 = vmatmul.mubr.bf16.gmra.mrb[0].mxu0 %v99
  %v138 = vpop.f32.mrb[0].mxu0
  %v139 = vadd.f32 0.0, %v138
  %v140 = vpop.f32.mrb[0].mxu0
  %v141 = vpop.f32.mrb[0].mxu0
  %v142 = vpop.f32.mrb[0].mxu0
  %143 = vdwg.mxu0
  %v144 = vmul.f32 %v88, 0.17677669
  %v145 = vmul.f32 %v139, 0.17677669
  %v146 = vld [vmem:[%s3] sm:$0x1]
  %v147 = vld [vmem:[%s3 + $0x1] sm:$0x1]
  %v148 = vsub.f32 %v146, 1.0
  %v149 = vsub.f32 %v147, 1.0
  %v150 = vmul.f32 %v148, 1e+09
  %v151 = vmul.f32 %v149, 1e+09
  %v154 = vlaneseq
  %v155 = vshrl.u32 %v154, 7
  %v156 = vsub.s32 0, %v155
  %v157 = vrot.slane %v150, %v156
  %v158 = vlaneseq
  %v159 = vshrl.u32 %v158, 7
  %v160 = vsub.s32 0, %v159
  %v161 = vrot.slane %v151, %v160
  %v164 = vadd.f32 %v144, %v157
  %v165 = vadd.f32 %v145, %v161
  %vm166 = vcmask 130048
  %v167 = vsel %vm166, %v164, -inf
  %168 = vmax.xlane.f32.xlu0 %v167
  %v169 = vpop.xlane.xlu0 %168
  %v170 = vsel %vm166, %v165, -inf
  %171 = vmax.xlane.f32.xlu0 %v170
  %v172 = vpop.xlane.xlu0 %171
  %v173 = vsub.f32 %v164, %v169
  %v174 = vsub.f32 %v165, %v172
  %v175 = vmul.f32 %v173, 1.442695
  %v176 = vpow.pop %v175
  %v177 = vmul.f32 %v174, 1.442695
  %v178 = vpow.pop %v177
  %v179 = vsel %vm166, %v176, 0.0
  %180 = vadd.xlane.f32.xlu0 %v179
  %v181 = vpop.xlane.xlu0 %180
  %v182 = vsel %vm166, %v178, 0.0
  %183 = vadd.xlane.f32.xlu0 %v182
  %v184 = vpop.xlane.xlu0 %183
  %v185 = vpack.c.bf16 %v176, %v176
  %v186 = vpack.c.bf16 %v178, %v178
  %v189 = vsel %vm166, %v185, 0
  %191 = vmatprep.subr.bf16.mxu0 0
  %192 = vmatpush1.bf16.msra.mxu0 %v45
  %193 = vmatprep.subr.bf16.mxu0 0
  %194 = vmatpush1.bf16.msra.mxu0 0
  %195 = vmatprep.subr.bf16.mxu0 0
  %196 = vmatpush1.bf16.msra.mxu0 0
  %197 = vmatprep.subr.bf16.mxu0 0
  %198 = vmatpush1.bf16.msra.mxu0 0
  %199 = vmatprep.subr.bf16.mxu0 0
  %200 = vmatpush1.bf16.msra.mxu0 0
  %201 = vmatprep.subr.bf16.mxu0 0
  %202 = vmatpush1.bf16.msra.mxu0 0
  %203 = vmatprep.subr.bf16.mxu0 0
  %204 = vmatpush1.bf16.msra.mxu0 0
  %205 = vmatprep.subr.bf16.mxu0 0
  %206 = vmatpush1.bf16.msra.mxu0 0
  %207 = vmatprep.subr.bf16.mxu0 0
  %208 = vmatpush1.bf16.msra.mxu0 0
  %209 = vmatprep.subr.bf16.mxu0 0
  %210 = vmatpush1.bf16.msra.mxu0 0
  %211 = vmatprep.subr.bf16.mxu0 0
  %212 = vmatpush1.bf16.msra.mxu0 0
  %213 = vmatprep.subr.bf16.mxu0 0
  %214 = vmatpush1.bf16.msra.mxu0 0
  %215 = vmatprep.subr.bf16.mxu0 0
  %216 = vmatpush1.bf16.msra.mxu0 0
  %217 = vmatprep.subr.bf16.mxu0 0
  %218 = vmatpush1.bf16.msra.mxu0 0
  %219 = vmatprep.subr.bf16.mxu0 0
  %220 = vmatpush1.bf16.msra.mxu0 0
  %221 = vmatprep.subr.bf16.mxu0 0
  %222 = vmatpush1.bf16.msra.mxu0 0
  %223 = vmatprep.mubr.bf16.mxu0 0
  %224 = vmatmul.mubr.bf16.gmra.mrb[0].mxu0 %v189
  %v225 = vpop.f32.mrb[0].mxu0
  %v226 = vadd.f32 0.0, %v225
  %v227 = vpop.f32.mrb[0].mxu0
  %v228 = vpop.f32.mrb[0].mxu0
  %v229 = vpop.f32.mrb[0].mxu0
  %230 = vdwg.mxu0
  %v233 = vsel %vm166, %v186, 0
  %235 = vmatprep.subr.bf16.mxu0 0
  %236 = vmatpush1.bf16.msra.mxu0 %v97
  %237 = vmatprep.subr.bf16.mxu0 0
  %238 = vmatpush1.bf16.msra.mxu0 0
  %239 = vmatprep.subr.bf16.mxu0 0
  %240 = vmatpush1.bf16.msra.mxu0 0
  %241 = vmatprep.subr.bf16.mxu0 0
  %242 = vmatpush1.bf16.msra.mxu0 0
  %243 = vmatprep.subr.bf16.mxu0 0
  %244 = vmatpush1.bf16.msra.mxu0 0
  %245 = vmatprep.subr.bf16.mxu0 0
  %246 = vmatpush1.bf16.msra.mxu0 0
  %247 = vmatprep.subr.bf16.mxu0 0
  %248 = vmatpush1.bf16.msra.mxu0 0
  %249 = vmatprep.subr.bf16.mxu0 0
  %250 = vmatpush1.bf16.msra.mxu0 0
  %251 = vmatprep.subr.bf16.mxu0 0
  %252 = vmatpush1.bf16.msra.mxu0 0
  %253 = vmatprep.subr.bf16.mxu0 0
  %254 = vmatpush1.bf16.msra.mxu0 0
  %255 = vmatprep.subr.bf16.mxu0 0
  %256 = vmatpush1.bf16.msra.mxu0 0
  %257 = vmatprep.subr.bf16.mxu0 0
  %258 = vmatpush1.bf16.msra.mxu0 0
  %259 = vmatprep.subr.bf16.mxu0 0
  %260 = vmatpush1.bf16.msra.mxu0 0
  %261 = vmatprep.subr.bf16.mxu0 0
  %262 = vmatpush1.bf16.msra.mxu0 0
  %263 = vmatprep.subr.bf16.mxu0 0
  %264 = vmatpush1.bf16.msra.mxu0 0
  %265 = vmatprep.subr.bf16.mxu0 0
  %266 = vmatpush1.bf16.msra.mxu0 0
  %267 = vmatprep.mubr.bf16.mxu0 0
  %268 = vmatmul.mubr.bf16.gmra.mrb[0].mxu0 %v233
  %v269 = vpop.f32.mrb[0].mxu0
  %v270 = vadd.f32 0.0, %v269
  %v271 = vpop.f32.mrb[0].mxu0
  %v272 = vpop.f32.mrb[0].mxu0
  %v273 = vpop.f32.mrb[0].mxu0
  %274 = vdwg.mxu0
  %v275 = vrcp.pop %v181
  %v276 = vrcp.pop %v184
  %v277 = vmul.f32 %v226, %v275
  %v278 = vmul.f32 %v270, %v276
  %279 = vst.msk [vmem:[%s4] sm:$0xff] %vm46, %v277
  %280 = vst.msk [vmem:[%s4 + $0x8] sm:$0xff] %vm46, %v278
  // Predicated region
  $region18: #{idisc_erp_forward.27} parent=0 // pred_check
    _
  $region19: #{idisc_erp_forward.27} parent=0 // pred_check_branch
    %282 = sbr.rel (0) target = $region21
  $region20: #{idisc_erp_forward.27} parent=0 // pred_region
    _
  $region21: #{idisc_erp_forward.27} parent=0 // pred_fallthru
    _
  // Predicated region
  $region22: #{idisc_erp_forward.27} parent=0 // pred_check
    _
  $region23: #{idisc_erp_forward.27} parent=0 // pred_check_branch
    %284 = sbr.rel (0) target = $region25
  $region24: #{idisc_erp_forward.27} parent=0 // pred_region
    _
  $region25: #{idisc_erp_forward.27} parent=0 // pred_fallthru
    _

// kernel: idisc_erp_forward.32
$region0: #{idisc_erp_forward.32}
  #allocation0 [shape = 'u32[]', space=smem, size = 0x4, offset = 0x4, fixed_abs, tag = 'smem constant byte address 0x4 - core index']
  #allocation1 [shape = 'u32[144,128]{1,0:T(1,128)}', space=vmem, size = 0x12000, scoped, tag = 'internal scratch']
  %s0 = inlined_call_operand.vmem [shape: bf16[8,4], index: 0, kind: input, shape index: {}]
  %s1 = inlined_call_operand.vmem [shape: f32[4,128], index: 1, kind: input, shape index: {}]
  %s2 = inlined_call_operand.vmem [shape: f32[8,128], index: 2, kind: output, shape index: {}]
  %s3 = sld [smem:[#allocation0]]
  $region18: #{idisc_erp_forward.32} parent=0
    _
  %s5 = ssub.s32 1, %s3
  %s6 = scalar_select 0, %s5, %s3
  // Predicated region
  $region2: #{idisc_erp_forward.32} parent=0 // pred_check
    _
  $region3: #{idisc_erp_forward.32} parent=0 // pred_check_branch
    %8 = sbr.rel (0) target = $region5
  $region4: #{idisc_erp_forward.32} parent=0 // pred_region
    _
  $region5: #{idisc_erp_forward.32} parent=0 // pred_fallthru
    _
  // Predicated region
  $region6: #{idisc_erp_forward.32} parent=0 // pred_check
    _
  $region7: #{idisc_erp_forward.32} parent=0 // pred_check_branch
    %10 = sbr.rel (0) target = $region9
  $region8: #{idisc_erp_forward.32} parent=0 // pred_region
    _
  $region9: #{idisc_erp_forward.32} parent=0 // pred_fallthru
    _
  %v12 = vld [vmem:[%s1] sm:$0xf]
  %v13 = vmul.f32 %v12, 1.442695
  %v14 = vpow.pop %v13
  %v15 = vld [vmem:[%s0] sm:$0xf]
  %v16 = vpack.c.bf16 %v14, %v14
  %vm17 = vcmask 31744
  %v19 = vsel %vm17, %v15, 0
  %vm21 = vcmask 1041408
  %v23 = vsel %vm21, %v16, 0
  %25 = vmatprep.subr.bf16.mxu0 0
  %26 = vmatpush1.bf16.msra.mxu0 %v23
  %27 = vmatprep.subr.bf16.mxu0 0
  %28 = vmatpush1.bf16.msra.mxu0 0
  %29 = vmatprep.subr.bf16.mxu0 0
  %30 = vmatpush1.bf16.msra.mxu0 0
  %31 = vmatprep.subr.bf16.mxu0 0
  %32 = vmatpush1.bf16.msra.mxu0 0
  %33 = vmatprep.subr.bf16.mxu0 0
  %34 = vmatpush1.bf16.msra.mxu0 0
  %35 = vmatprep.subr.bf16.mxu0 0
  %36 = vmatpush1.bf16.msra.mxu0 0
  %37 = vmatprep.subr.bf16.mxu0 0
  %38 = vmatpush1.bf16.msra.mxu0 0
  %39 = vmatprep.subr.bf16.mxu0 0
  %40 = vmatpush1.bf16.msra.mxu0 0
  %41 = vmatprep.subr.bf16.mxu0 0
  %42 = vmatpush1.bf16.msra.mxu0 0
  %43 = vmatprep.subr.bf16.mxu0 0
  %44 = vmatpush1.bf16.msra.mxu0 0
  %45 = vmatprep.subr.bf16.mxu0 0
  %46 = vmatpush1.bf16.msra.mxu0 0
  %47 = vmatprep.subr.bf16.mxu0 0
  %48 = vmatpush1.bf16.msra.mxu0 0
  %49 = vmatprep.subr.bf16.mxu0 0
  %50 = vmatpush1.bf16.msra.mxu0 0
  %51 = vmatprep.subr.bf16.mxu0 0
  %52 = vmatpush1.bf16.msra.mxu0 0
  %53 = vmatprep.subr.bf16.mxu0 0
  %54 = vmatpush1.bf16.msra.mxu0 0
  %55 = vmatprep.subr.bf16.mxu0 0
  %56 = vmatpush1.bf16.msra.mxu0 0
  %57 = vmatprep.mubr.bf16.mxu0 0
  %58 = vmatmul.mubr.bf16.gmra.mrb[0].mxu0 %v19
  %v59 = vpop.f32.mrb[0].mxu0
  %v60 = vadd.f32 0.0, %v59
  %v61 = vpop.f32.mrb[0].mxu0
  %v62 = vpop.f32.mrb[0].mxu0
  %v63 = vpop.f32.mrb[0].mxu0
  %64 = vdwg.mxu0
  %65 = vst [vmem:[%s2] sm:$0xff] %v60
  // Predicated region
  $region10: #{idisc_erp_forward.32} parent=0 // pred_check
    _
  $region11: #{idisc_erp_forward.32} parent=0 // pred_check_branch
    %67 = sbr.rel (0) target = $region13
  $region12: #{idisc_erp_forward.32} parent=0 // pred_region
    _
  $region13: #{idisc_erp_forward.32} parent=0 // pred_fallthru
    _
  // Predicated region
  $region14: #{idisc_erp_forward.32} parent=0 // pred_check
    _
  $region15: #{idisc_erp_forward.32} parent=0 // pred_check_branch
    %69 = sbr.rel (0) target = $region17
  $region16: #{idisc_erp_forward.32} parent=0 // pred_region
    _
  $region17: #{idisc_erp_forward.32} parent=0 // pred_fallthru
    _

// kernel: idisc_erp_forward.33
$region0: #{idisc_erp_forward.33}
  #allocation0 [shape = 'u32[]', space=smem, size = 0x4, offset = 0x4, fixed_abs, tag = 'smem constant byte address 0x4 - core index']
  #allocation1 [shape = 'u32[144,128]{1,0:T(1,128)}', space=vmem, size = 0x12000, scoped, tag = 'internal scratch']
  %s0 = inlined_call_operand.vmem [shape: bf16[16,4], index: 0, kind: input, shape index: {}]
  %s1 = inlined_call_operand.vmem [shape: bf16[4,8], index: 1, kind: input, shape index: {}]
  %s2 = inlined_call_operand.vmem [shape: f32[1,8], index: 2, kind: input, shape index: {}]
  %s3 = inlined_call_operand.vmem [shape: f32[16,8], index: 3, kind: output, shape index: {}]
  %s4 = sld [smem:[#allocation0]]
  $region22: #{idisc_erp_forward.33} parent=0
    _
  %s6 = ssub.s32 1, %s4
  %s7 = scalar_select 0, %s6, %s4
  // Predicated region
  $region2: #{idisc_erp_forward.33} parent=0 // pred_check
    _
  $region3: #{idisc_erp_forward.33} parent=0 // pred_check_branch
    %9 = sbr.rel (0) target = $region5
  $region4: #{idisc_erp_forward.33} parent=0 // pred_region
    _
  $region5: #{idisc_erp_forward.33} parent=0 // pred_fallthru
    _
  // Predicated region
  $region6: #{idisc_erp_forward.33} parent=0 // pred_check
    _
  $region7: #{idisc_erp_forward.33} parent=0 // pred_check_branch
    %11 = sbr.rel (0) target = $region9
  $region8: #{idisc_erp_forward.33} parent=0 // pred_region
    _
  $region9: #{idisc_erp_forward.33} parent=0 // pred_fallthru
    _
  // Predicated region
  $region10: #{idisc_erp_forward.33} parent=0 // pred_check
    _
  $region11: #{idisc_erp_forward.33} parent=0 // pred_check_branch
    %13 = sbr.rel (0) target = $region13
  $region12: #{idisc_erp_forward.33} parent=0 // pred_region
    _
  $region13: #{idisc_erp_forward.33} parent=0 // pred_fallthru
    _
  %v15 = vld [vmem:[%s0] sm:$0xf]
  %v16 = vld [vmem:[%s0 + $0x4] sm:$0xf]
  %v17 = vld [vmem:[%s1] sm:$0x3]
  %v18 = vld [vmem:[%s2] sm:$0x1]
  %v20 = vlaneseq
  %v21 = vshrl.u32 %v20, 7
  %v22 = vsub.s32 0, %v21
  %v23 = vrot.slane %v18, %v22
  %v27 = vunpack.c.l.b16 %v15
  %v28 = vunpack.c.l.b16 %v16
  %v29 = vpack.c.b16 %v28, %v27
  %vm30 = vcmask 31744
  %v32 = vsel %vm30, %v29, 0
  %vm34 = vcmask 1041408
  %v36 = vsel %vm34, %v17, 0
  %38 = vmatprep.subr.bf16.mxu0 0
  %39 = vmatpush1.bf16.msra.mxu0 %v36
  %40 = vmatprep.subr.bf16.mxu0 0
  %41 = vmatpush1.bf16.msra.mxu0 0
  %42 = vmatprep.subr.bf16.mxu0 0
  %43 = vmatpush1.bf16.msra.mxu0 0
  %44 = vmatprep.subr.bf16.mxu0 0
  %45 = vmatpush1.bf16.msra.mxu0 0
  %46 = vmatprep.subr.bf16.mxu0 0
  %47 = vmatpush1.bf16.msra.mxu0 0
  %48 = vmatprep.subr.bf16.mxu0 0
  %49 = vmatpush1.bf16.msra.mxu0 0
  %50 = vmatprep.subr.bf16.mxu0 0
  %51 = vmatpush1.bf16.msra.mxu0 0
  %52 = vmatprep.subr.bf16.mxu0 0
  %53 = vmatpush1.bf16.msra.mxu0 0
  %54 = vmatprep.subr.bf16.mxu0 0
  %55 = vmatpush1.bf16.msra.mxu0 0
  %56 = vmatprep.subr.bf16.mxu0 0
  %57 = vmatpush1.bf16.msra.mxu0 0
  %58 = vmatprep.subr.bf16.mxu0 0
  %59 = vmatpush1.bf16.msra.mxu0 0
  %60 = vmatprep.subr.bf16.mxu0 0
  %61 = vmatpush1.bf16.msra.mxu0 0
  %62 = vmatprep.subr.bf16.mxu0 0
  %63 = vmatpush1.bf16.msra.mxu0 0
  %64 = vmatprep.subr.bf16.mxu0 0
  %65 = vmatpush1.bf16.msra.mxu0 0
  %66 = vmatprep.subr.bf16.mxu0 0
  %67 = vmatpush1.bf16.msra.mxu0 0
  %68 = vmatprep.subr.bf16.mxu0 0
  %69 = vmatpush1.bf16.msra.mxu0 0
  %70 = vmatprep.mubr.bf16.mxu0 0
  %71 = vmatmul.mubr.bf16.gmra.mrb[0].mxu0 %v32
  %v72 = vpop.f32.mrb[0].mxu0
  %v73 = vadd.f32 %v23, %v72
  %v74 = vpop.f32.mrb[0].mxu0
  %v75 = vpop.f32.mrb[0].mxu0
  %v76 = vadd.f32 %v23, %v75
  %v77 = vpop.f32.mrb[0].mxu0
  %78 = vdwg.mxu0
  %vm79 = vcmask 64512
  %80 = vst.msk [vmem:[%s3] sm:$0xff] %vm79, %v73
  %81 = vst.msk [vmem:[%s3 + $0x8] sm:$0xff] %vm79, %v76
  // Predicated region
  $region14: #{idisc_erp_forward.33} parent=0 // pred_check
    _
  $region15: #{idisc_erp_forward.33} parent=0 // pred_check_branch
    %83 = sbr.rel (0) target = $region17
  $region16: #{idisc_erp_forward.33} parent=0 // pred_region
    _
  $region17: #{idisc_erp_forward.33} parent=0 // pred_fallthru
    _
  // Predicated region
  $region18: #{idisc_erp_forward.33} parent=0 // pred_check
    _
  $region19: #{idisc_erp_forward.33} parent=0 // pred_check_branch
    %85 = sbr.rel (0) target = $region21
  $region20: #{idisc_erp_forward.33} parent=0 // pred_region
    _
  $region21: #{idisc_erp_forward.33} parent=0 // pred_fallthru
    _

// kernel: idisc_erp_forward.30
$region0: #{idisc_erp_forward.30}
  #allocation0 [shape = 'u32[]', space=smem, size = 0x4, offset = 0x4, fixed_abs, tag = 'smem constant byte address 0x4 - core index']
  #allocation1 [shape = 'u32[144,128]{1,0:T(1,128)}', space=vmem, size = 0x12000, scoped, tag = 'internal scratch']
  #allocation2 [shape = 'f32[1,1]{1,0:T(1,128)S(1)}', space=vmem, size = 0x200, scoped, tag = 'scoped memory for idisc_erp_forward.30']
  %s0 = inlined_call_operand.vmem [shape: bf16[2,16,32], index: 0, kind: input, shape index: {}]
  %s1 = inlined_call_operand.vmem [shape: f32[2,1,32], index: 1, kind: input, shape index: {}]
  %s2 = inlined_call_operand.vmem [shape: bf16[2,8,32], index: 2, kind: input, shape index: {}]
  %s3 = inlined_call_operand.vmem [shape: f32[1,32], index: 3, kind: input, shape index: {}]
  %s4 = inlined_call_operand.<no memory space> [shape: f32[1,1], index: 4, kind: input, shape index: {}]
  %s5 = inlined_call_operand.vmem [shape: f32[2,16], index: 5, kind: output, shape index: {}]
  %s6 = sld [smem:[#allocation0]]
  $region30: #{idisc_erp_forward.30} parent=0
    _
  %s8 = ssub.s32 1, %s6
  %s9 = scalar_select 0, %s8, %s6
  %v10 = vstv %s4
  %11 = vst [vmem:[#allocation2] sm:$0x1] %v10
  // Predicated region
  $region2: #{idisc_erp_forward.30} parent=0 // pred_check
    _
  $region3: #{idisc_erp_forward.30} parent=0 // pred_check_branch
    %13 = sbr.rel (0) target = $region5
  $region4: #{idisc_erp_forward.30} parent=0 // pred_region
    _
  $region5: #{idisc_erp_forward.30} parent=0 // pred_fallthru
    _
  // Predicated region
  $region6: #{idisc_erp_forward.30} parent=0 // pred_check
    _
  $region7: #{idisc_erp_forward.30} parent=0 // pred_check_branch
    %15 = sbr.rel (0) target = $region9
  $region8: #{idisc_erp_forward.30} parent=0 // pred_region
    _
  $region9: #{idisc_erp_forward.30} parent=0 // pred_fallthru
    _
  // Predicated region
  $region10: #{idisc_erp_forward.30} parent=0 // pred_check
    _
  $region11: #{idisc_erp_forward.30} parent=0 // pred_check_branch
    %17 = sbr.rel (0) target = $region13
  $region12: #{idisc_erp_forward.30} parent=0 // pred_region
    _
  $region13: #{idisc_erp_forward.30} parent=0 // pred_fallthru
    _
  // Predicated region
  $region14: #{idisc_erp_forward.30} parent=0 // pred_check
    _
  $region15: #{idisc_erp_forward.30} parent=0 // pred_check_branch
    %19 = sbr.rel (0) target = $region17
  $region16: #{idisc_erp_forward.30} parent=0 // pred_region
    _
  $region17: #{idisc_erp_forward.30} parent=0 // pred_fallthru
    _
  // Predicated region
  $region18: #{idisc_erp_forward.30} parent=0 // pred_check
    _
  $region19: #{idisc_erp_forward.30} parent=0 // pred_check_branch
    %21 = sbr.rel (0) target = $region21
  $region20: #{idisc_erp_forward.30} parent=0 // pred_region
    _
  $region21: #{idisc_erp_forward.30} parent=0 // pred_fallthru
    _
  %v23 = vld [vmem:[%s0] sm:$0xf]
  %v24 = vld [vmem:[%s0 + $0x4] sm:$0xf]
  %v25 = vld [vmem:[%s0 + $0x8] sm:$0xf]
  %v26 = vld [vmem:[%s0 + $0xc] sm:$0xf]
  %v27 = vunpack.c.l.bf16 %v23
  %v28 = vunpack.c.l.bf16 %v24
  %v29 = vunpack.c.l.bf16 %v25
  %v30 = vunpack.c.l.bf16 %v26
  %v31 = vld [vmem:[%s1] sm:$0x1]
  %v32 = vld [vmem:[%s1 + $0x1] sm:$0x1]
  %v35 = vlaneseq
  %v36 = vshrl.u32 %v35, 7
  %v37 = vsub.s32 0, %v36
  %v38 = vrot.slane %v31, %v37
  %v39 = vlaneseq
  %v40 = vshrl.u32 %v39, 7
  %v41 = vsub.s32 0, %v40
  %v42 = vrot.slane %v32, %v41
  %v45 = vadd.f32 %v27, %v38
  %v46 = vadd.f32 %v28, %v38
  %v47 = vadd.f32 %v29, %v42
  %v48 = vadd.f32 %v30, %v42
  %v49 = vld [vmem:[%s2] sm:$0xf]
  %v50 = vld [vmem:[%s2 + $0x4] sm:$0xf]
  %v51 = vpack.c.bf16 %v46, %v45
  %v52 = vpack.c.bf16 %v48, %v47
  %vm53 = vcmask 261120
  %v55 = vsel %vm53, %v51, 0
  %v58 = vsel %vm53, %v49, 0
  %60 = vmatprep.subr.bf16.mxu0 0
  %61 = vmatpush1.bf16.xpose.msra.mxu0 %v58
  %62 = vmatprep.subr.bf16.mxu0 0
  %63 = vmatpush1.bf16.xpose.msra.mxu0 0
  %64 = vmatprep.subr.bf16.mxu0 0
  %65 = vmatpush1.bf16.xpose.msra.mxu0 0
  %66 = vmatprep.subr.bf16.mxu0 0
  %67 = vmatpush1.bf16.xpose.msra.mxu0 0
  %68 = vmatprep.subr.bf16.mxu0 0
  %69 = vmatpush1.bf16.xpose.msra.mxu0 0
  %70 = vmatprep.subr.bf16.mxu0 0
  %71 = vmatpush1.bf16.xpose.msra.mxu0 0
  %72 = vmatprep.subr.bf16.mxu0 0
  %73 = vmatpush1.bf16.xpose.msra.mxu0 0
  %74 = vmatprep.subr.bf16.mxu0 0
  %75 = vmatpush1.bf16.xpose.msra.mxu0 0
  %76 = vmatprep.subr.bf16.mxu0 0
  %77 = vmatpush1.bf16.xpose.msra.mxu0 0
  %78 = vmatprep.subr.bf16.mxu0 0
  %79 = vmatpush1.bf16.xpose.msra.mxu0 0
  %80 = vmatprep.subr.bf16.mxu0 0
  %81 = vmatpush1.bf16.xpose.msra.mxu0 0
  %82 = vmatprep.subr.bf16.mxu0 0
  %83 = vmatpush1.bf16.xpose.msra.mxu0 0
  %84 = vmatprep.subr.bf16.mxu0 0
  %85 = vmatpush1.bf16.xpose.msra.mxu0 0
  %86 = vmatprep.subr.bf16.mxu0 0
  %87 = vmatpush1.bf16.xpose.msra.mxu0 0
  %88 = vmatprep.subr.bf16.mxu0 0
  %89 = vmatpush1.bf16.xpose.msra.mxu0 0
  %90 = vmatprep.subr.bf16.mxu0 0
  %91 = vmatpush1.bf16.xpose.msra.mxu0 0
  %92 = vmatprep.mubr.bf16.mxu0 0
  %93 = vmatmul.mubr.bf16.gmra.mrb[0].mxu0 %v55
  %v94 = vpop.f32.mrb[0].mxu0
  %v95 = vadd.f32 0.0, %v94
  %v96 = vpop.f32.mrb[0].mxu0
  %v97 = vpop.f32.mrb[0].mxu0
  %v98 = vadd.f32 0.0, %v97
  %v99 = vpop.f32.mrb[0].mxu0
  %100 = vdwg.mxu0
  %v102 = vsel %vm53, %v52, 0
  %v105 = vsel %vm53, %v50, 0
  %107 = vmatprep.subr.bf16.mxu0 0
  %108 = vmatpush1.bf16.xpose.msra.mxu0 %v105
  %109 = vmatprep.subr.bf16.mxu0 0
  %110 = vmatpush1.bf16.xpose.msra.mxu0 0
  %111 = vmatprep.subr.bf16.mxu0 0
  %112 = vmatpush1.bf16.xpose.msra.mxu0 0
  %113 = vmatprep.subr.bf16.mxu0 0
  %114 = vmatpush1.bf16.xpose.msra.mxu0 0
  %115 = vmatprep.subr.bf16.mxu0 0
  %116 = vmatpush1.bf16.xpose.msra.mxu0 0
  %117 = vmatprep.subr.bf16.mxu0 0
  %118 = vmatpush1.bf16.xpose.msra.mxu0 0
  %119 = vmatprep.subr.bf16.mxu0 0
  %120 = vmatpush1.bf16.xpose.msra.mxu0 0
  %121 = vmatprep.subr.bf16.mxu0 0
  %122 = vmatpush1.bf16.xpose.msra.mxu0 0
  %123 = vmatprep.subr.bf16.mxu0 0
  %124 = vmatpush1.bf16.xpose.msra.mxu0 0
  %125 = vmatprep.subr.bf16.mxu0 0
  %126 = vmatpush1.bf16.xpose.msra.mxu0 0
  %127 = vmatprep.subr.bf16.mxu0 0
  %128 = vmatpush1.bf16.xpose.msra.mxu0 0
  %129 = vmatprep.subr.bf16.mxu0 0
  %130 = vmatpush1.bf16.xpose.msra.mxu0 0
  %131 = vmatprep.subr.bf16.mxu0 0
  %132 = vmatpush1.bf16.xpose.msra.mxu0 0
  %133 = vmatprep.subr.bf16.mxu0 0
  %134 = vmatpush1.bf16.xpose.msra.mxu0 0
  %135 = vmatprep.subr.bf16.mxu0 0
  %136 = vmatpush1.bf16.xpose.msra.mxu0 0
  %137 = vmatprep.subr.bf16.mxu0 0
  %138 = vmatpush1.bf16.xpose.msra.mxu0 0
  %139 = vmatprep.mubr.bf16.mxu0 0
  %140 = vmatmul.mubr.bf16.gmra.mrb[0].mxu0 %v102
  %v141 = vpop.f32.mrb[0].mxu0
  %v142 = vadd.f32 0.0, %v141
  %v143 = vpop.f32.mrb[0].mxu0
  %v144 = vpop.f32.mrb[0].mxu0
  %v145 = vadd.f32 0.0, %v144
  %v146 = vpop.f32.mrb[0].mxu0
  %147 = vdwg.mxu0
  %v148 = vmul.f32 %v95, 0.17677669
  %v149 = vmul.f32 %v98, 0.17677669
  %v150 = vmul.f32 %v142, 0.17677669
  %v151 = vmul.f32 %v145, 0.17677669
  %vm152 = vcmask 64512
  %v153 = vsel %vm152, %v148, -inf
  %154 = vmax.xlane.f32.xlu0 %v153
  %v155 = vpop.xlane.xlu0 %154
  %v156 = vsel %vm152, %v149, -inf
  %157 = vmax.xlane.f32.xlu0 %v156
  %v158 = vpop.xlane.xlu0 %157
  %v159 = vsel %vm152, %v150, -inf
  %160 = vmax.xlane.f32.xlu0 %v159
  %v161 = vpop.xlane.xlu0 %160
  %v162 = vsel %vm152, %v151, -inf
  %163 = vmax.xlane.f32.xlu0 %v162
  %v164 = vpop.xlane.xlu0 %163
  %v165 = vsub.f32 %v148, %v155
  %v166 = vsub.f32 %v149, %v158
  %v167 = vsub.f32 %v150, %v161
  %v168 = vsub.f32 %v151, %v164
  %v169 = vmul.f32 %v165, 1.442695
  %v170 = vpow.pop %v169
  %v171 = vmul.f32 %v166, 1.442695
  %v172 = vpow.pop %v171
  %v173 = vmul.f32 %v167, 1.442695
  %v174 = vpow.pop %v173
  %v175 = vmul.f32 %v168, 1.442695
  %v176 = vpow.pop %v175
  %v177 = vsel %vm152, %v170, 0.0
  %178 = vadd.xlane.f32.xlu0 %v177
  %v179 = vpop.xlane.xlu0 %178
  %v180 = vsel %vm152, %v172, 0.0
  %181 = vadd.xlane.f32.xlu0 %v180
  %v182 = vpop.xlane.xlu0 %181
  %v183 = vsel %vm152, %v174, 0.0
  %184 = vadd.xlane.f32.xlu0 %v183
  %v185 = vpop.xlane.xlu0 %184
  %v186 = vsel %vm152, %v176, 0.0
  %187 = vadd.xlane.f32.xlu0 %v186
  %v188 = vpop.xlane.xlu0 %187
  %v189 = vpack.c.bf16 %v172, %v170
  %v190 = vpack.c.bf16 %v176, %v174
  %v192 = vsel %vm152, %v189, 0
  %vm194 = vcmask 1043456
  %v195 = vsel %vm194, %v49, 0
  %197 = vmatprep.subr.bf16.mxu0 0
  %198 = vmatpush1.bf16.msra.mxu0 %v195
  %199 = vmatprep.subr.bf16.mxu0 0
  %200 = vmatpush1.bf16.msra.mxu0 0
  %201 = vmatprep.subr.bf16.mxu0 0
  %202 = vmatpush1.bf16.msra.mxu0 0
  %203 = vmatprep.subr.bf16.mxu0 0
  %204 = vmatpush1.bf16.msra.mxu0 0
  %205 = vmatprep.subr.bf16.mxu0 0
  %206 = vmatpush1.bf16.msra.mxu0 0
  %207 = vmatprep.subr.bf16.mxu0 0
  %208 = vmatpush1.bf16.msra.mxu0 0
  %209 = vmatprep.subr.bf16.mxu0 0
  %210 = vmatpush1.bf16.msra.mxu0 0
  %211 = vmatprep.subr.bf16.mxu0 0
  %212 = vmatpush1.bf16.msra.mxu0 0
  %213 = vmatprep.subr.bf16.mxu0 0
  %214 = vmatpush1.bf16.msra.mxu0 0
  %215 = vmatprep.subr.bf16.mxu0 0
  %216 = vmatpush1.bf16.msra.mxu0 0
  %217 = vmatprep.subr.bf16.mxu0 0
  %218 = vmatpush1.bf16.msra.mxu0 0
  %219 = vmatprep.subr.bf16.mxu0 0
  %220 = vmatpush1.bf16.msra.mxu0 0
  %221 = vmatprep.subr.bf16.mxu0 0
  %222 = vmatpush1.bf16.msra.mxu0 0
  %223 = vmatprep.subr.bf16.mxu0 0
  %224 = vmatpush1.bf16.msra.mxu0 0
  %225 = vmatprep.subr.bf16.mxu0 0
  %226 = vmatpush1.bf16.msra.mxu0 0
  %227 = vmatprep.subr.bf16.mxu0 0
  %228 = vmatpush1.bf16.msra.mxu0 0
  %229 = vmatprep.mubr.bf16.mxu0 0
  %230 = vmatmul.mubr.bf16.gmra.mrb[0].mxu0 %v192
  %v231 = vpop.f32.mrb[0].mxu0
  %v232 = vadd.f32 0.0, %v231
  %v233 = vpop.f32.mrb[0].mxu0
  %v234 = vpop.f32.mrb[0].mxu0
  %v235 = vadd.f32 0.0, %v234
  %v236 = vpop.f32.mrb[0].mxu0
  %237 = vdwg.mxu0
  %v239 = vsel %vm152, %v190, 0
  %v241 = vsel %vm194, %v50, 0
  %243 = vmatprep.subr.bf16.mxu0 0
  %244 = vmatpush1.bf16.msra.mxu0 %v241
  %245 = vmatprep.subr.bf16.mxu0 0
  %246 = vmatpush1.bf16.msra.mxu0 0
  %247 = vmatprep.subr.bf16.mxu0 0
  %248 = vmatpush1.bf16.msra.mxu0 0
  %249 = vmatprep.subr.bf16.mxu0 0
  %250 = vmatpush1.bf16.msra.mxu0 0
  %251 = vmatprep.subr.bf16.mxu0 0
  %252 = vmatpush1.bf16.msra.mxu0 0
  %253 = vmatprep.subr.bf16.mxu0 0
  %254 = vmatpush1.bf16.msra.mxu0 0
  %255 = vmatprep.subr.bf16.mxu0 0
  %256 = vmatpush1.bf16.msra.mxu0 0
  %257 = vmatprep.subr.bf16.mxu0 0
  %258 = vmatpush1.bf16.msra.mxu0 0
  %259 = vmatprep.subr.bf16.mxu0 0
  %260 = vmatpush1.bf16.msra.mxu0 0
  %261 = vmatprep.subr.bf16.mxu0 0
  %262 = vmatpush1.bf16.msra.mxu0 0
  %263 = vmatprep.subr.bf16.mxu0 0
  %264 = vmatpush1.bf16.msra.mxu0 0
  %265 = vmatprep.subr.bf16.mxu0 0
  %266 = vmatpush1.bf16.msra.mxu0 0
  %267 = vmatprep.subr.bf16.mxu0 0
  %268 = vmatpush1.bf16.msra.mxu0 0
  %269 = vmatprep.subr.bf16.mxu0 0
  %270 = vmatpush1.bf16.msra.mxu0 0
  %271 = vmatprep.subr.bf16.mxu0 0
  %272 = vmatpush1.bf16.msra.mxu0 0
  %273 = vmatprep.subr.bf16.mxu0 0
  %274 = vmatpush1.bf16.msra.mxu0 0
  %275 = vmatprep.mubr.bf16.mxu0 0
  %276 = vmatmul.mubr.bf16.gmra.mrb[0].mxu0 %v239
  %v277 = vpop.f32.mrb[0].mxu0
  %v278 = vadd.f32 0.0, %v277
  %v279 = vpop.f32.mrb[0].mxu0
  %v280 = vpop.f32.mrb[0].mxu0
  %v281 = vadd.f32 0.0, %v280
  %v282 = vpop.f32.mrb[0].mxu0
  %283 = vdwg.mxu0
  %v284 = vrcp.pop %v179
  %v285 = vrcp.pop %v182
  %v286 = vrcp.pop %v185
  %v287 = vrcp.pop %v188
  %v288 = vmul.f32 %v232, %v284
  %v289 = vmul.f32 %v235, %v285
  %v290 = vmul.f32 %v278, %v286
  %v291 = vmul.f32 %v281, %v287
  %v292 = vadd.f32 %v45, %v288
  %v293 = vadd.f32 %v46, %v289
  %v294 = vadd.f32 %v47, %v290
  %v295 = vadd.f32 %v48, %v291
  %v296 = vld [vmem:[%s3] sm:$0x1]
  %v298 = vlaneseq
  %v299 = vshrl.u32 %v298, 7
  %v300 = vsub.s32 0, %v299
  %v301 = vrot.slane %v296, %v300
  %v303 = vmul.f32 %v292, %v301
  %v304 = vmul.f32 %v293, %v301
  %v305 = vmul.f32 %v294, %v301
  %v306 = vmul.f32 %v295, %v301
  %v307 = vsel %vm53, %v303, 0.0
  %308 = vadd.xlane.f32.xlu0 %v307
  %v309 = vpop.xlane.xlu0 %308
  %v310 = vsel %vm53, %v304, 0.0
  %311 = vadd.xlane.f32.xlu0 %v310
  %v312 = vpop.xlane.xlu0 %311
  %v313 = vsel %vm53, %v305, 0.0
  %314 = vadd.xlane.f32.xlu0 %v313
  %v315 = vpop.xlane.xlu0 %314
  %v316 = vsel %vm53, %v306, 0.0
  %317 = vadd.xlane.f32.xlu0 %v316
  %v318 = vpop.xlane.xlu0 %317
  %v319 = vld [vmem:[#allocation2] sm:$0x1]
  %v321 = vlaneseq
  %v322 = vshrl.u32 %v321, 7
  %v323 = vsub.s32 0, %v322
  %v324 = vrot.slane %v319, %v323
  %325 = vset.pattern.permute.xlu0 0
  %326 = vperm.xlu0 %325, %v324
  %v327 = vpop.permute.xlu0 %326
  %v329 = vadd.f32 %v309, %v327
  %v330 = vadd.f32 %v312, %v327
  %v331 = vadd.f32 %v315, %v327
  %v332 = vadd.f32 %v318, %v327
  %v337 = vlaneseq
  %v338 = vand.u32 %v337, 127
  %v339 = vlaneseq
  %v340 = vshrl.u32 %v339, 7
  %v341 = vsub.s32 %v338, %v340
  %v342 = vrot.slane %v329, %v341
  %v343 = vadd.s32 %v338, 4294967288
  %v344 = vlaneseq
  %v345 = vshrl.u32 %v344, 7
  %v346 = vsub.s32 %v343, %v345
  %v347 = vrot.slane %v330, %v346
  %vm348 = vcmask 130112
  %v349 = vsel %vm348, %v347, %v342
  %v350 = vlaneseq
  %v351 = vshrl.u32 %v350, 7
  %v352 = vsub.s32 %v338, %v351
  %v353 = vrot.slane %v331, %v352
  %v354 = vlaneseq
  %v355 = vshrl.u32 %v354, 7
  %v356 = vsub.s32 %v343, %v355
  %v357 = vrot.slane %v332, %v356
  %v358 = vsel %vm348, %v357, %v353
  %vm359 = vcmask 1041409
  %v360 = vsel %vm359, %v358, %v349
  %vm362 = vcmask 123904
  %363 = vst.msk [vmem:[%s5] sm:$0x3] %vm362, %v360
  // Predicated region
  $region22: #{idisc_erp_forward.30} parent=0 // pred_check
    _
  $region23: #{idisc_erp_forward.30} parent=0 // pred_check_branch
    %365 = sbr.rel (0) target = $region25
  $region24: #{idisc_erp_forward.30} parent=0 // pred_region
    _
  $region25: #{idisc_erp_forward.30} parent=0 // pred_fallthru
    _
  // Predicated region
  $region26: #{idisc_erp_forward.30} parent=0 // pred_check
    _
  $region27: #{idisc_erp_forward.30} parent=0 // pred_check_branch
    %367 = sbr.rel (0) target = $region29
  $region28: #{idisc_erp_forward.30} parent=0 // pred_region
    _
  $region29: #{idisc_erp_forward.30} parent=0 // pred_fallthru
    _

// kernel: idisc_erp_forward.24
$region0: #{idisc_erp_forward.24}
  #allocation0 [shape = 'u32[]', space=smem, size = 0x4, offset = 0x4, fixed_abs, tag = 'smem constant byte address 0x4 - core index']
  #allocation1 [shape = 'u32[144,128]{1,0:T(1,128)}', space=vmem, size = 0x12000, scoped, tag = 'internal scratch']
  %s0 = inlined_call_operand.vmem [shape: bf16[128,8], index: 0, kind: input, shape index: {}]
  %s1 = inlined_call_operand.vmem [shape: bf16[8,32], index: 1, kind: input, shape index: {}]
  %s2 = inlined_call_operand.vmem [shape: f32[1,32], index: 2, kind: input, shape index: {}]
  %s3 = inlined_call_operand.vmem [shape: f32[128,32], index: 3, kind: output, shape index: {}]
  %s4 = sld [smem:[#allocation0]]
  $region22: #{idisc_erp_forward.24} parent=0
    _
  %s6 = ssub.s32 1, %s4
  %s7 = scalar_select 0, %s6, %s4
  // Predicated region
  $region2: #{idisc_erp_forward.24} parent=0 // pred_check
    _
  $region3: #{idisc_erp_forward.24} parent=0 // pred_check_branch
    %9 = sbr.rel (0) target = $region5
  $region4: #{idisc_erp_forward.24} parent=0 // pred_region
    _
  $region5: #{idisc_erp_forward.24} parent=0 // pred_fallthru
    _
  // Predicated region
  $region6: #{idisc_erp_forward.24} parent=0 // pred_check
    _
  $region7: #{idisc_erp_forward.24} parent=0 // pred_check_branch
    %11 = sbr.rel (0) target = $region9
  $region8: #{idisc_erp_forward.24} parent=0 // pred_region
    _
  $region9: #{idisc_erp_forward.24} parent=0 // pred_fallthru
    _
  // Predicated region
  $region10: #{idisc_erp_forward.24} parent=0 // pred_check
    _
  $region11: #{idisc_erp_forward.24} parent=0 // pred_check_branch
    %13 = sbr.rel (0) target = $region13
  $region12: #{idisc_erp_forward.24} parent=0 // pred_region
    _
  $region13: #{idisc_erp_forward.24} parent=0 // pred_fallthru
    _
  %v15 = vld [vmem:[%s0] sm:$0xf]
  %v16 = vld [vmem:[%s0 + $0x4] sm:$0xf]
  %v17 = vld [vmem:[%s0 + $0x8] sm:$0xf]
  %v18 = vld [vmem:[%s0 + $0xc] sm:$0xf]
  %v19 = vld [vmem:[%s0 + $0x10] sm:$0xf]
  %v20 = vld [vmem:[%s0 + $0x14] sm:$0xf]
  %v21 = vld [vmem:[%s0 + $0x18] sm:$0xf]
  %v22 = vld [vmem:[%s0 + $0x1c] sm:$0xf]
  %v23 = vld [vmem:[%s0 + $0x20] sm:$0xf]
  %v24 = vld [vmem:[%s0 + $0x24] sm:$0xf]
  %v25 = vld [vmem:[%s0 + $0x28] sm:$0xf]
  %v26 = vld [vmem:[%s0 + $0x2c] sm:$0xf]
  %v27 = vld [vmem:[%s0 + $0x30] sm:$0xf]
  %v28 = vld [vmem:[%s0 + $0x34] sm:$0xf]
  %v29 = vld [vmem:[%s0 + $0x38] sm:$0xf]
  %v30 = vld [vmem:[%s0 + $0x3c] sm:$0xf]
  %v31 = vld [vmem:[%s1] sm:$0xf]
  %v32 = vld [vmem:[%s2] sm:$0x1]
  %v34 = vlaneseq
  %v35 = vshrl.u32 %v34, 7
  %v36 = vsub.s32 0, %v35
  %v37 = vrot.slane %v32, %v36
  %v55 = vunpack.c.l.b16 %v15
  %v56 = vunpack.c.l.b16 %v16
  %v57 = vunpack.c.l.b16 %v17
  %v58 = vunpack.c.l.b16 %v18
  %v59 = vunpack.c.l.b16 %v19
  %v60 = vunpack.c.l.b16 %v20
  %v61 = vunpack.c.l.b16 %v21
  %v62 = vunpack.c.l.b16 %v22
  %v63 = vunpack.c.l.b16 %v23
  %v64 = vunpack.c.l.b16 %v24
  %v65 = vunpack.c.l.b16 %v25
  %v66 = vunpack.c.l.b16 %v26
  %v67 = vunpack.c.l.b16 %v27
  %v68 = vunpack.c.l.b16 %v28
  %v69 = vunpack.c.l.b16 %v29
  %v70 = vunpack.c.l.b16 %v30
  %v71 = vpack.c.b16 %v56, %v55
  %v72 = vpack.c.b16 %v58, %v57
  %v73 = vpack.c.b16 %v60, %v59
  %v74 = vpack.c.b16 %v62, %v61
  %v75 = vpack.c.b16 %v64, %v63
  %v76 = vpack.c.b16 %v66, %v65
  %v77 = vpack.c.b16 %v68, %v67
  %v78 = vpack.c.b16 %v70, %v69
  %vm79 = vcmask 64512
  %v81 = vsel %vm79, %v71, 0
  %v84 = vsel %vm79, %v72, 0
  %v87 = vsel %vm79, %v73, 0
  %v90 = vsel %vm79, %v74, 0
  %v93 = vsel %vm79, %v75, 0
  %v96 = vsel %vm79, %v76, 0
  %v99 = vsel %vm79, %v77, 0
  %v102 = vsel %vm79, %v78, 0
  %vm104 = vcmask 1043456
  %v106 = vsel %vm104, %v31, 0
  %108 = vmatprep.subr.bf16.mxu0 0
  %109 = vmatpush1.bf16.msra.mxu0 %v106
  %110 = vmatprep.subr.bf16.mxu0 0
  %111 = vmatpush1.bf16.msra.mxu0 0
  %112 = vmatprep.subr.bf16.mxu0 0
  %113 = vmatpush1.bf16.msra.mxu0 0
  %114 = vmatprep.subr.bf16.mxu0 0
  %115 = vmatpush1.bf16.msra.mxu0 0
  %116 = vmatprep.subr.bf16.mxu0 0
  %117 = vmatpush1.bf16.msra.mxu0 0
  %118 = vmatprep.subr.bf16.mxu0 0
  %119 = vmatpush1.bf16.msra.mxu0 0
  %120 = vmatprep.subr.bf16.mxu0 0
  %121 = vmatpush1.bf16.msra.mxu0 0
  %122 = vmatprep.subr.bf16.mxu0 0
  %123 = vmatpush1.bf16.msra.mxu0 0
  %124 = vmatprep.subr.bf16.mxu0 0
  %125 = vmatpush1.bf16.msra.mxu0 0
  %126 = vmatprep.subr.bf16.mxu0 0
  %127 = vmatpush1.bf16.msra.mxu0 0
  %128 = vmatprep.subr.bf16.mxu0 0
  %129 = vmatpush1.bf16.msra.mxu0 0
  %130 = vmatprep.subr.bf16.mxu0 0
  %131 = vmatpush1.bf16.msra.mxu0 0
  %132 = vmatprep.subr.bf16.mxu0 0
  %133 = vmatpush1.bf16.msra.mxu0 0
  %134 = vmatprep.subr.bf16.mxu0 0
  %135 = vmatpush1.bf16.msra.mxu0 0
  %136 = vmatprep.subr.bf16.mxu0 0
  %137 = vmatpush1.bf16.msra.mxu0 0
  %138 = vmatprep.subr.bf16.mxu0 0
  %139 = vmatpush1.bf16.msra.mxu0 0
  %140 = vmatprep.mubr.bf16.mxu0 0
  %141 = vmatmul.mubr.bf16.gmra.mrb[0].mxu0 %v81
  %v142 = vpop.f32.mrb[0].mxu0
  %v143 = vadd.f32 %v37, %v142
  %v144 = vpop.f32.mrb[0].mxu0
  %v145 = vpop.f32.mrb[0].mxu0
  %v146 = vadd.f32 %v37, %v145
  %v147 = vpop.f32.mrb[0].mxu0
  %148 = vmatprep.mubr.bf16.mxu0 0
  %149 = vmatmul.mubr.bf16.gmra.mrb[0].mxu0 %v84
  %v150 = vpop.f32.mrb[0].mxu0
  %v151 = vadd.f32 %v37, %v150
  %v152 = vpop.f32.mrb[0].mxu0
  %v153 = vpop.f32.mrb[0].mxu0
  %v154 = vadd.f32 %v37, %v153
  %v155 = vpop.f32.mrb[0].mxu0
  %156 = vmatprep.mubr.bf16.mxu0 0
  %157 = vmatmul.mubr.bf16.gmra.mrb[0].mxu0 %v87
  %v158 = vpop.f32.mrb[0].mxu0
  %v159 = vadd.f32 %v37, %v158
  %v160 = vpop.f32.mrb[0].mxu0
  %v161 = vpop.f32.mrb[0].mxu0
  %v162 = vadd.f32 %v37, %v161
  %v163 = vpop.f32.mrb[0].mxu0
  %164 = vmatprep.mubr.bf16.mxu0 0
  %165 = vmatmul.mubr.bf16.gmra.mrb[0].mxu0 %v90
  %v166 = vpop.f32.mrb[0].mxu0
  %v167 = vadd.f32 %v37, %v166
  %v168 = vpop.f32.mrb[0].mxu0
  %v169 = vpop.f32.mrb[0].mxu0
  %v170 = vadd.f32 %v37, %v169
  %v171 = vpop.f32.mrb[0].mxu0
  %172 = vmatprep.mubr.bf16.mxu0 0
  %173 = vmatmul.mubr.bf16.gmra.mrb[0].mxu0 %v93
  %v174 = vpop.f32.mrb[0].mxu0
  %v175 = vadd.f32 %v37, %v174
  %v176 = vpop.f32.mrb[0].mxu0
  %v177 = vpop.f32.mrb[0].mxu0
  %v178 = vadd.f32 %v37, %v177
  %v179 = vpop.f32.mrb[0].mxu0
  %180 = vmatprep.mubr.bf16.mxu0 0
  %181 = vmatmul.mubr.bf16.gmra.mrb[0].mxu0 %v96
  %v182 = vpop.f32.mrb[0].mxu0
  %v183 = vadd.f32 %v37, %v182
  %v184 = vpop.f32.mrb[0].mxu0
  %v185 = vpop.f32.mrb[0].mxu0
  %v186 = vadd.f32 %v37, %v185
  %v187 = vpop.f32.mrb[0].mxu0
  %188 = vmatprep.mubr.bf16.mxu0 0
  %189 = vmatmul.mubr.bf16.gmra.mrb[0].mxu0 %v99
  %v190 = vpop.f32.mrb[0].mxu0
  %v191 = vadd.f32 %v37, %v190
  %v192 = vpop.f32.mrb[0].mxu0
  %v193 = vpop.f32.mrb[0].mxu0
  %v194 = vadd.f32 %v37, %v193
  %v195 = vpop.f32.mrb[0].mxu0
  %196 = vmatprep.mubr.bf16.mxu0 0
  %197 = vmatmul.mubr.bf16.gmra.mrb[0].mxu0 %v102
  %v198 = vpop.f32.mrb[0].mxu0
  %v199 = vadd.f32 %v37, %v198
  %v200 = vpop.f32.mrb[0].mxu0
  %v201 = vpop.f32.mrb[0].mxu0
  %v202 = vadd.f32 %v37, %v201
  %v203 = vpop.f32.mrb[0].mxu0
  %204 = vdwg.mxu0
  %v205 = vmax.f32 %v143, 0.0
  %v206 = vmax.f32 %v146, 0.0
  %v207 = vmax.f32 %v151, 0.0
  %v208 = vmax.f32 %v154, 0.0
  %v209 = vmax.f32 %v159, 0.0
  %v210 = vmax.f32 %v162, 0.0
  %v211 = vmax.f32 %v167, 0.0
  %v212 = vmax.f32 %v170, 0.0
  %v213 = vmax.f32 %v175, 0.0
  %v214 = vmax.f32 %v178, 0.0
  %v215 = vmax.f32 %v183, 0.0
  %v216 = vmax.f32 %v186, 0.0
  %v217 = vmax.f32 %v191, 0.0
  %v218 = vmax.f32 %v194, 0.0
  %v219 = vmax.f32 %v199, 0.0
  %v220 = vmax.f32 %v202, 0.0
  %vm221 = vcmask 261120
  %222 = vst.msk [vmem:[%s3] sm:$0xff] %vm221, %v205
  %223 = vst.msk [vmem:[%s3 + $0x8] sm:$0xff] %vm221, %v206
  %224 = vst.msk [vmem:[%s3 + $0x10] sm:$0xff] %vm221, %v207
  %225 = vst.msk [vmem:[%s3 + $0x18] sm:$0xff] %vm221, %v208
  %226 = vst.msk [vmem:[%s3 + $0x20] sm:$0xff] %vm221, %v209
  %227 = vst.msk [vmem:[%s3 + $0x28] sm:$0xff] %vm221, %v210
  %228 = vst.msk [vmem:[%s3 + $0x30] sm:$0xff] %vm221, %v211
  %229 = vst.msk [vmem:[%s3 + $0x38] sm:$0xff] %vm221, %v212
  %230 = vst.msk [vmem:[%s3 + $0x40] sm:$0xff] %vm221, %v213
  %231 = vst.msk [vmem:[%s3 + $0x48] sm:$0xff] %vm221, %v214
  %232 = vst.msk [vmem:[%s3 + $0x50] sm:$0xff] %vm221, %v215
  %233 = vst.msk [vmem:[%s3 + $0x58] sm:$0xff] %vm221, %v216
  %234 = vst.msk [vmem:[%s3 + $0x60] sm:$0xff] %vm221, %v217
  %235 = vst.msk [vmem:[%s3 + $0x68] sm:$0xff] %vm221, %v218
  %236 = vst.msk [vmem:[%s3 + $0x70] sm:$0xff] %vm221, %v219
  %237 = vst.msk [vmem:[%s3 + $0x78] sm:$0xff] %vm221, %v220
  // Predicated region
  $region14: #{idisc_erp_forward.24} parent=0 // pred_check
    _
  $region15: #{idisc_erp_forward.24} parent=0 // pred_check_branch
    %239 = sbr.rel (0) target = $region17
  $region16: #{idisc_erp_forward.24} parent=0 // pred_region
    _
  $region17: #{idisc_erp_forward.24} parent=0 // pred_fallthru
    _
  // Predicated region
  $region18: #{idisc_erp_forward.24} parent=0 // pred_check
    _
  $region19: #{idisc_erp_forward.24} parent=0 // pred_check_branch
    %241 = sbr.rel (0) target = $region21
  $region20: #{idisc_erp_forward.24} parent=0 // pred_region
    _
  $region21: #{idisc_erp_forward.24} parent=0 // pred_fallthru
    _

// kernel: idisc_erp_forward.28
$region0: #{idisc_erp_forward.28}
  #allocation0 [shape = 'u32[]', space=smem, size = 0x4, offset = 0x4, fixed_abs, tag = 'smem constant byte address 0x4 - core index']
  #allocation1 [shape = 'u32[144,128]{1,0:T(1,128)}', space=vmem, size = 0x12000, scoped, tag = 'internal scratch']
  %s0 = inlined_call_operand.vmem [shape: f32[1,8,32], index: 0, kind: input, shape index: {}]
  %s1 = inlined_call_operand.vmem [shape: f32[2,1,32], index: 1, kind: input, shape index: {}]
  %s2 = inlined_call_operand.vmem [shape: bf16[2,64,32], index: 2, kind: input, shape index: {}]
  %s3 = inlined_call_operand.vmem [shape: f32[2,1,64], index: 3, kind: input, shape index: {}]
  %s4 = inlined_call_operand.vmem [shape: f32[2,8,32], index: 4, kind: output, shape index: {}]
  %s5 = sld [smem:[#allocation0]]
  $region26: #{idisc_erp_forward.28} parent=0
    _
  %s7 = ssub.s32 1, %s5
  %s8 = scalar_select 0, %s7, %s5
  // Predicated region
  $region2: #{idisc_erp_forward.28} parent=0 // pred_check
    _
  $region3: #{idisc_erp_forward.28} parent=0 // pred_check_branch
    %10 = sbr.rel (0) target = $region5
  $region4: #{idisc_erp_forward.28} parent=0 // pred_region
    _
  $region5: #{idisc_erp_forward.28} parent=0 // pred_fallthru
    _
  // Predicated region
  $region6: #{idisc_erp_forward.28} parent=0 // pred_check
    _
  $region7: #{idisc_erp_forward.28} parent=0 // pred_check_branch
    %12 = sbr.rel (0) target = $region9
  $region8: #{idisc_erp_forward.28} parent=0 // pred_region
    _
  $region9: #{idisc_erp_forward.28} parent=0 // pred_fallthru
    _
  // Predicated region
  $region10: #{idisc_erp_forward.28} parent=0 // pred_check
    _
  $region11: #{idisc_erp_forward.28} parent=0 // pred_check_branch
    %14 = sbr.rel (0) target = $region13
  $region12: #{idisc_erp_forward.28} parent=0 // pred_region
    _
  $region13: #{idisc_erp_forward.28} parent=0 // pred_fallthru
    _
  // Predicated region
  $region14: #{idisc_erp_forward.28} parent=0 // pred_check
    _
  $region15: #{idisc_erp_forward.28} parent=0 // pred_check_branch
    %16 = sbr.rel (0) target = $region17
  $region16: #{idisc_erp_forward.28} parent=0 // pred_region
    _
  $region17: #{idisc_erp_forward.28} parent=0 // pred_fallthru
    _
  %v18 = vld [vmem:[%s0] sm:$0xff]
  %v19 = vld [vmem:[%s1] sm:$0x1]
  %v20 = vld [vmem:[%s1 + $0x1] sm:$0x1]
  %v23 = vlaneseq
  %v24 = vshrl.u32 %v23, 7
  %v25 = vsub.s32 0, %v24
  %v26 = vrot.slane %v19, %v25
  %v27 = vlaneseq
  %v28 = vshrl.u32 %v27, 7
  %v29 = vsub.s32 0, %v28
  %v30 = vrot.slane %v20, %v29
  %v33 = vadd.f32 %v18, %v26
  %v34 = vadd.f32 %v18, %v30
  %v35 = vld [vmem:[%s2] sm:$0xf]
  %v36 = vld [vmem:[%s2 + $0x4] sm:$0xf]
  %v37 = vld [vmem:[%s2 + $0x8] sm:$0xf]
  %v38 = vld [vmem:[%s2 + $0xc] sm:$0xf]
  %v39 = vld [vmem:[%s2 + $0x10] sm:$0xf]
  %v40 = vld [vmem:[%s2 + $0x14] sm:$0xf]
  %v41 = vld [vmem:[%s2 + $0x18] sm:$0xf]
  %v42 = vld [vmem:[%s2 + $0x1c] sm:$0xf]
  %v43 = vld [vmem:[%s2 + $0x20] sm:$0xf]
  %v44 = vld [vmem:[%s2 + $0x24] sm:$0xf]
  %v45 = vld [vmem:[%s2 + $0x28] sm:$0xf]
  %v46 = vld [vmem:[%s2 + $0x2c] sm:$0xf]
  %v47 = vld [vmem:[%s2 + $0x30] sm:$0xf]
  %v48 = vld [vmem:[%s2 + $0x34] sm:$0xf]
  %v49 = vld [vmem:[%s2 + $0x38] sm:$0xf]
  %v50 = vld [vmem:[%s2 + $0x3c] sm:$0xf]
  %v51 = vpack.c.bf16 %v33, %v33
  %v52 = vpack.c.bf16 %v34, %v34
  %v61 = vunpack.c.l.b16 %v35
  %v62 = vunpack.c.l.b16 %v36
  %v63 = vunpack.c.l.b16 %v37
  %v64 = vunpack.c.l.b16 %v38
  %v65 = vunpack.c.l.b16 %v39
  %v66 = vunpack.c.l.b16 %v40
  %v67 = vunpack.c.l.b16 %v41
  %v68 = vunpack.c.l.b16 %v42
  %v69 = vpack.c.b16 %v62, %v61
  %v70 = vpack.c.b16 %v64, %v63
  %v71 = vpack.c.b16 %v66, %v65
  %v72 = vpack.c.b16 %v68, %v67
  %vm73 = vcmask 261120
  %v75 = vsel %vm73, %v51, 0
  %v78 = vsel %vm73, %v69, 0
  %v81 = vsel %vm73, %v70, 0
  %v84 = vsel %vm73, %v71, 0
  %v87 = vsel %vm73, %v72, 0
  %89 = vmatprep.subr.bf16.mxu0 0
  %90 = vmatpush1.bf16.xpose.msra.mxu0 %v78
  %91 = vmatprep.subr.bf16.mxu0 0
  %92 = vmatpush1.bf16.xpose.msra.mxu0 %v81
  %93 = vmatprep.subr.bf16.mxu0 0
  %94 = vmatpush1.bf16.xpose.msra.mxu0 %v84
  %95 = vmatprep.subr.bf16.mxu0 0
  %96 = vmatpush1.bf16.xpose.msra.mxu0 %v87
  %97 = vmatprep.subr.bf16.mxu0 0
  %98 = vmatpush1.bf16.xpose.msra.mxu0 0
  %99 = vmatprep.subr.bf16.mxu0 0
  %100 = vmatpush1.bf16.xpose.msra.mxu0 0
  %101 = vmatprep.subr.bf16.mxu0 0
  %102 = vmatpush1.bf16.xpose.msra.mxu0 0
  %103 = vmatprep.subr.bf16.mxu0 0
  %104 = vmatpush1.bf16.xpose.msra.mxu0 0
  %105 = vmatprep.subr.bf16.mxu0 0
  %106 = vmatpush1.bf16.xpose.msra.mxu0 0
  %107 = vmatprep.subr.bf16.mxu0 0
  %108 = vmatpush1.bf16.xpose.msra.mxu0 0
  %109 = vmatprep.subr.bf16.mxu0 0
  %110 = vmatpush1.bf16.xpose.msra.mxu0 0
  %111 = vmatprep.subr.bf16.mxu0 0
  %112 = vmatpush1.bf16.xpose.msra.mxu0 0
  %113 = vmatprep.subr.bf16.mxu0 0
  %114 = vmatpush1.bf16.xpose.msra.mxu0 0
  %115 = vmatprep.subr.bf16.mxu0 0
  %116 = vmatpush1.bf16.xpose.msra.mxu0 0
  %117 = vmatprep.subr.bf16.mxu0 0
  %118 = vmatpush1.bf16.xpose.msra.mxu0 0
  %119 = vmatprep.subr.bf16.mxu0 0
  %120 = vmatpush1.bf16.xpose.msra.mxu0 0
  %121 = vmatprep.mubr.bf16.mxu0 0
  %122 = vmatmul.mubr.bf16.gmra.mrb[0].mxu0 %v75
  %v123 = vpop.f32.mrb[0].mxu0
  %v124 = vadd.f32 0.0, %v123
  %v125 = vpop.f32.mrb[0].mxu0
  %v126 = vpop.f32.mrb[0].mxu0
  %v127 = vpop.f32.mrb[0].mxu0
  %128 = vdwg.mxu0
  %v137 = vunpack.c.l.b16 %v43
  %v138 = vunpack.c.l.b16 %v44
  %v139 = vunpack.c.l.b16 %v45
  %v140 = vunpack.c.l.b16 %v46
  %v141 = vunpack.c.l.b16 %v47
  %v142 = vunpack.c.l.b16 %v48
  %v143 = vunpack.c.l.b16 %v49
  %v144 = vunpack.c.l.b16 %v50
  %v145 = vpack.c.b16 %v138, %v137
  %v146 = vpack.c.b16 %v140, %v139
  %v147 = vpack.c.b16 %v142, %v141
  %v148 = vpack.c.b16 %v144, %v143
  %v150 = vsel %vm73, %v52, 0
  %v153 = vsel %vm73, %v145, 0
  %v156 = vsel %vm73, %v146, 0
  %v159 = vsel %vm73, %v147, 0
  %v162 = vsel %vm73, %v148, 0
  %164 = vmatprep.subr.bf16.mxu0 0
  %165 = vmatpush1.bf16.xpose.msra.mxu0 %v153
  %166 = vmatprep.subr.bf16.mxu0 0
  %167 = vmatpush1.bf16.xpose.msra.mxu0 %v156
  %168 = vmatprep.subr.bf16.mxu0 0
  %169 = vmatpush1.bf16.xpose.msra.mxu0 %v159
  %170 = vmatprep.subr.bf16.mxu0 0
  %171 = vmatpush1.bf16.xpose.msra.mxu0 %v162
  %172 = vmatprep.subr.bf16.mxu0 0
  %173 = vmatpush1.bf16.xpose.msra.mxu0 0
  %174 = vmatprep.subr.bf16.mxu0 0
  %175 = vmatpush1.bf16.xpose.msra.mxu0 0
  %176 = vmatprep.subr.bf16.mxu0 0
  %177 = vmatpush1.bf16.xpose.msra.mxu0 0
  %178 = vmatprep.subr.bf16.mxu0 0
  %179 = vmatpush1.bf16.xpose.msra.mxu0 0
  %180 = vmatprep.subr.bf16.mxu0 0
  %181 = vmatpush1.bf16.xpose.msra.mxu0 0
  %182 = vmatprep.subr.bf16.mxu0 0
  %183 = vmatpush1.bf16.xpose.msra.mxu0 0
  %184 = vmatprep.subr.bf16.mxu0 0
  %185 = vmatpush1.bf16.xpose.msra.mxu0 0
  %186 = vmatprep.subr.bf16.mxu0 0
  %187 = vmatpush1.bf16.xpose.msra.mxu0 0
  %188 = vmatprep.subr.bf16.mxu0 0
  %189 = vmatpush1.bf16.xpose.msra.mxu0 0
  %190 = vmatprep.subr.bf16.mxu0 0
  %191 = vmatpush1.bf16.xpose.msra.mxu0 0
  %192 = vmatprep.subr.bf16.mxu0 0
  %193 = vmatpush1.bf16.xpose.msra.mxu0 0
  %194 = vmatprep.subr.bf16.mxu0 0
  %195 = vmatpush1.bf16.xpose.msra.mxu0 0
  %196 = vmatprep.mubr.bf16.mxu0 0
  %197 = vmatmul.mubr.bf16.gmra.mrb[0].mxu0 %v150
  %v198 = vpop.f32.mrb[0].mxu0
  %v199 = vadd.f32 0.0, %v198
  %v200 = vpop.f32.mrb[0].mxu0
  %v201 = vpop.f32.mrb[0].mxu0
  %v202 = vpop.f32.mrb[0].mxu0
  %203 = vdwg.mxu0
  %v204 = vmul.f32 %v124, 0.17677669
  %v205 = vmul.f32 %v199, 0.17677669
  %v206 = vld [vmem:[%s3] sm:$0x1]
  %v207 = vld [vmem:[%s3 + $0x1] sm:$0x1]
  %v208 = vsub.f32 %v206, 1.0
  %v209 = vsub.f32 %v207, 1.0
  %v210 = vmul.f32 %v208, 1e+09
  %v211 = vmul.f32 %v209, 1e+09
  %v214 = vlaneseq
  %v215 = vshrl.u32 %v214, 7
  %v216 = vsub.s32 0, %v215
  %v217 = vrot.slane %v210, %v216
  %v218 = vlaneseq
  %v219 = vshrl.u32 %v218, 7
  %v220 = vsub.s32 0, %v219
  %v221 = vrot.slane %v211, %v220
  %v224 = vadd.f32 %v204, %v217
  %v225 = vadd.f32 %v205, %v221
  %vm226 = vcmask 523264
  %v227 = vsel %vm226, %v224, -inf
  %228 = vmax.xlane.f32.xlu0 %v227
  %v229 = vpop.xlane.xlu0 %228
  %v230 = vsel %vm226, %v225, -inf
  %231 = vmax.xlane.f32.xlu0 %v230
  %v232 = vpop.xlane.xlu0 %231
  %v233 = vsub.f32 %v224, %v229
  %v234 = vsub.f32 %v225, %v232
  %v235 = vmul.f32 %v233, 1.442695
  %v236 = vpow.pop %v235
  %v237 = vmul.f32 %v234, 1.442695
  %v238 = vpow.pop %v237
  %v239 = vsel %vm226, %v236, 0.0
  %240 = vadd.xlane.f32.xlu0 %v239
  %v241 = vpop.xlane.xlu0 %240
  %v242 = vsel %vm226, %v238, 0.0
  %243 = vadd.xlane.f32.xlu0 %v242
  %v244 = vpop.xlane.xlu0 %243
  %v245 = vpack.c.bf16 %v236, %v236
  %v246 = vpack.c.bf16 %v238, %v238
  %v252 = vsel %vm226, %v245, 0
  %254 = vmatprep.subr.bf16.mxu0 0
  %255 = vmatpush1.bf16.msra.mxu0 %v69
  %256 = vmatprep.subr.bf16.mxu0 0
  %257 = vmatpush1.bf16.msra.mxu0 %v70
  %258 = vmatprep.subr.bf16.mxu0 0
  %259 = vmatpush1.bf16.msra.mxu0 %v71
  %260 = vmatprep.subr.bf16.mxu0 0
  %261 = vmatpush1.bf16.msra.mxu0 %v72
  %262 = vmatprep.subr.bf16.mxu0 0
  %263 = vmatpush1.bf16.msra.mxu0 0
  %264 = vmatprep.subr.bf16.mxu0 0
  %265 = vmatpush1.bf16.msra.mxu0 0
  %266 = vmatprep.subr.bf16.mxu0 0
  %267 = vmatpush1.bf16.msra.mxu0 0
  %268 = vmatprep.subr.bf16.mxu0 0
  %269 = vmatpush1.bf16.msra.mxu0 0
  %270 = vmatprep.subr.bf16.mxu0 0
  %271 = vmatpush1.bf16.msra.mxu0 0
  %272 = vmatprep.subr.bf16.mxu0 0
  %273 = vmatpush1.bf16.msra.mxu0 0
  %274 = vmatprep.subr.bf16.mxu0 0
  %275 = vmatpush1.bf16.msra.mxu0 0
  %276 = vmatprep.subr.bf16.mxu0 0
  %277 = vmatpush1.bf16.msra.mxu0 0
  %278 = vmatprep.subr.bf16.mxu0 0
  %279 = vmatpush1.bf16.msra.mxu0 0
  %280 = vmatprep.subr.bf16.mxu0 0
  %281 = vmatpush1.bf16.msra.mxu0 0
  %282 = vmatprep.subr.bf16.mxu0 0
  %283 = vmatpush1.bf16.msra.mxu0 0
  %284 = vmatprep.subr.bf16.mxu0 0
  %285 = vmatpush1.bf16.msra.mxu0 0
  %286 = vmatprep.mubr.bf16.mxu0 0
  %287 = vmatmul.mubr.bf16.gmra.mrb[0].mxu0 %v252
  %v288 = vpop.f32.mrb[0].mxu0
  %v289 = vadd.f32 0.0, %v288
  %v290 = vpop.f32.mrb[0].mxu0
  %v291 = vpop.f32.mrb[0].mxu0
  %v292 = vpop.f32.mrb[0].mxu0
  %293 = vdwg.mxu0
  %v299 = vsel %vm226, %v246, 0
  %301 = vmatprep.subr.bf16.mxu0 0
  %302 = vmatpush1.bf16.msra.mxu0 %v145
  %303 = vmatprep.subr.bf16.mxu0 0
  %304 = vmatpush1.bf16.msra.mxu0 %v146
  %305 = vmatprep.subr.bf16.mxu0 0
  %306 = vmatpush1.bf16.msra.mxu0 %v147
  %307 = vmatprep.subr.bf16.mxu0 0
  %308 = vmatpush1.bf16.msra.mxu0 %v148
  %309 = vmatprep.subr.bf16.mxu0 0
  %310 = vmatpush1.bf16.msra.mxu0 0
  %311 = vmatprep.subr.bf16.mxu0 0
  %312 = vmatpush1.bf16.msra.mxu0 0
  %313 = vmatprep.subr.bf16.mxu0 0
  %314 = vmatpush1.bf16.msra.mxu0 0
  %315 = vmatprep.subr.bf16.mxu0 0
  %316 = vmatpush1.bf16.msra.mxu0 0
  %317 = vmatprep.subr.bf16.mxu0 0
  %318 = vmatpush1.bf16.msra.mxu0 0
  %319 = vmatprep.subr.bf16.mxu0 0
  %320 = vmatpush1.bf16.msra.mxu0 0
  %321 = vmatprep.subr.bf16.mxu0 0
  %322 = vmatpush1.bf16.msra.mxu0 0
  %323 = vmatprep.subr.bf16.mxu0 0
  %324 = vmatpush1.bf16.msra.mxu0 0
  %325 = vmatprep.subr.bf16.mxu0 0
  %326 = vmatpush1.bf16.msra.mxu0 0
  %327 = vmatprep.subr.bf16.mxu0 0
  %328 = vmatpush1.bf16.msra.mxu0 0
  %329 = vmatprep.subr.bf16.mxu0 0
  %330 = vmatpush1.bf16.msra.mxu0 0
  %331 = vmatprep.subr.bf16.mxu0 0
  %332 = vmatpush1.bf16.msra.mxu0 0
  %333 = vmatprep.mubr.bf16.mxu0 0
  %334 = vmatmul.mubr.bf16.gmra.mrb[0].mxu0 %v299
  %v335 = vpop.f32.mrb[0].mxu0
  %v336 = vadd.f32 0.0, %v335
  %v337 = vpop.f32.mrb[0].mxu0
  %v338 = vpop.f32.mrb[0].mxu0
  %v339 = vpop.f32.mrb[0].mxu0
  %340 = vdwg.mxu0
  %v341 = vrcp.pop %v241
  %v342 = vrcp.pop %v244
  %v343 = vmul.f32 %v289, %v341
  %v344 = vmul.f32 %v336, %v342
  %345 = vst.msk [vmem:[%s4] sm:$0xff] %vm73, %v343
  %346 = vst.msk [vmem:[%s4 + $0x8] sm:$0xff] %vm73, %v344
  // Predicated region
  $region18: #{idisc_erp_forward.28} parent=0 // pred_check
    _
  $region19: #{idisc_erp_forward.28} parent=0 // pred_check_branch
    %348 = sbr.rel (0) target = $region21
  $region20: #{idisc_erp_forward.28} parent=0 // pred_region
    _
  $region21: #{idisc_erp_forward.28} parent=0 // pred_fallthru
    _
  // Predicated region
  $region22: #{idisc_erp_forward.28} parent=0 // pred_check
    _
  $region23: #{idisc_erp_forward.28} parent=0 // pred_check_branch
    %350 = sbr.rel (0) target = $region25
  $region24: #{idisc_erp_forward.28} parent=0 // pred_region
    _
  $region25: #{idisc_erp_forward.28} parent=0 // pred_fallthru
    _

// kernel: idisc_erp_forward.34
$region0: #{idisc_erp_forward.34}
  #allocation0 [shape = 'u32[]', space=smem, size = 0x4, offset = 0x4, fixed_abs, tag = 'smem constant byte address 0x4 - core index']
  #allocation1 [shape = 'u32[144,128]{1,0:T(1,128)}', space=vmem, size = 0x12000, scoped, tag = 'internal scratch']
  %s0 = inlined_call_operand.vmem [shape: bf16[8,8], index: 0, kind: input, shape index: {}]
  %s1 = inlined_call_operand.vmem [shape: f32[8,128], index: 1, kind: input, shape index: {}]
  %s2 = inlined_call_operand.vmem [shape: f32[8,128], index: 2, kind: output, shape index: {}]
  %s3 = sld [smem:[#allocation0]]
  $region18: #{idisc_erp_forward.34} parent=0
    _
  %s5 = ssub.s32 1, %s3
  %s6 = scalar_select 0, %s5, %s3
  // Predicated region
  $region2: #{idisc_erp_forward.34} parent=0 // pred_check
    _
  $region3: #{idisc_erp_forward.34} parent=0 // pred_check_branch
    %8 = sbr.rel (0) target = $region5
  $region4: #{idisc_erp_forward.34} parent=0 // pred_region
    _
  $region5: #{idisc_erp_forward.34} parent=0 // pred_fallthru
    _
  // Predicated region
  $region6: #{idisc_erp_forward.34} parent=0 // pred_check
    _
  $region7: #{idisc_erp_forward.34} parent=0 // pred_check_branch
    %10 = sbr.rel (0) target = $region9
  $region8: #{idisc_erp_forward.34} parent=0 // pred_region
    _
  $region9: #{idisc_erp_forward.34} parent=0 // pred_fallthru
    _
  %v12 = vld [vmem:[%s1] sm:$0xff]
  %v13 = vmul.f32 %v12, 1.442695
  %v14 = vpow.pop %v13
  %v15 = vld [vmem:[%s0] sm:$0xf]
  %v16 = vpack.c.bf16 %v14, %v14
  %vm17 = vcmask 64512
  %v19 = vsel %vm17, %v15, 0
  %vm21 = vcmask 1043456
  %v23 = vsel %vm21, %v16, 0
  %25 = vmatprep.subr.bf16.mxu0 0
  %26 = vmatpush1.bf16.msra.mxu0 %v23
  %27 = vmatprep.subr.bf16.mxu0 0
  %28 = vmatpush1.bf16.msra.mxu0 0
  %29 = vmatprep.subr.bf16.mxu0 0
  %30 = vmatpush1.bf16.msra.mxu0 0
  %31 = vmatprep.subr.bf16.mxu0 0
  %32 = vmatpush1.bf16.msra.mxu0 0
  %33 = vmatprep.subr.bf16.mxu0 0
  %34 = vmatpush1.bf16.msra.mxu0 0
  %35 = vmatprep.subr.bf16.mxu0 0
  %36 = vmatpush1.bf16.msra.mxu0 0
  %37 = vmatprep.subr.bf16.mxu0 0
  %38 = vmatpush1.bf16.msra.mxu0 0
  %39 = vmatprep.subr.bf16.mxu0 0
  %40 = vmatpush1.bf16.msra.mxu0 0
  %41 = vmatprep.subr.bf16.mxu0 0
  %42 = vmatpush1.bf16.msra.mxu0 0
  %43 = vmatprep.subr.bf16.mxu0 0
  %44 = vmatpush1.bf16.msra.mxu0 0
  %45 = vmatprep.subr.bf16.mxu0 0
  %46 = vmatpush1.bf16.msra.mxu0 0
  %47 = vmatprep.subr.bf16.mxu0 0
  %48 = vmatpush1.bf16.msra.mxu0 0
  %49 = vmatprep.subr.bf16.mxu0 0
  %50 = vmatpush1.bf16.msra.mxu0 0
  %51 = vmatprep.subr.bf16.mxu0 0
  %52 = vmatpush1.bf16.msra.mxu0 0
  %53 = vmatprep.subr.bf16.mxu0 0
  %54 = vmatpush1.bf16.msra.mxu0 0
  %55 = vmatprep.subr.bf16.mxu0 0
  %56 = vmatpush1.bf16.msra.mxu0 0
  %57 = vmatprep.mubr.bf16.mxu0 0
  %58 = vmatmul.mubr.bf16.gmra.mrb[0].mxu0 %v19
  %v59 = vpop.f32.mrb[0].mxu0
  %v60 = vadd.f32 0.0, %v59
  %v61 = vpop.f32.mrb[0].mxu0
  %v62 = vpop.f32.mrb[0].mxu0
  %v63 = vpop.f32.mrb[0].mxu0
  %64 = vdwg.mxu0
  %65 = vst [vmem:[%s2] sm:$0xff] %v60
  // Predicated region
  $region10: #{idisc_erp_forward.34} parent=0 // pred_check
    _
  $region11: #{idisc_erp_forward.34} parent=0 // pred_check_branch
    %67 = sbr.rel (0) target = $region13
  $region12: #{idisc_erp_forward.34} parent=0 // pred_region
    _
  $region13: #{idisc_erp_forward.34} parent=0 // pred_fallthru
    _
  // Predicated region
  $region14: #{idisc_erp_forward.34} parent=0 // pred_check
    _
  $region15: #{idisc_erp_forward.34} parent=0 // pred_check_branch
    %69 = sbr.rel (0) target = $region17
  $region16: #{idisc_erp_forward.34} parent=0 // pred_region
    _
  $region17: #{idisc_erp_forward.34} parent=0 // pred_fallthru
    _

// kernel: idisc_erp_forward.31
$region0: #{idisc_erp_forward.31}
  #allocation0 [shape = 'u32[]', space=smem, size = 0x4, offset = 0x4, fixed_abs, tag = 'smem constant byte address 0x4 - core index']
  #allocation1 [shape = 'u32[144,128]{1,0:T(1,128)}', space=vmem, size = 0x12000, scoped, tag = 'internal scratch']
  #allocation2 [shape = 'f32[1,1]{1,0:T(1,128)S(1)}', space=vmem, size = 0x200, scoped, tag = 'scoped memory for idisc_erp_forward.31']
  %s0 = inlined_call_operand.vmem [shape: bf16[2,64,32], index: 0, kind: input, shape index: {}]
  %s1 = inlined_call_operand.vmem [shape: f32[2,1,32], index: 1, kind: input, shape index: {}]
  %s2 = inlined_call_operand.vmem [shape: bf16[2,8,32], index: 2, kind: input, shape index: {}]
  %s3 = inlined_call_operand.vmem [shape: f32[1,32], index: 3, kind: input, shape index: {}]
  %s4 = inlined_call_operand.<no memory space> [shape: f32[1,1], index: 4, kind: input, shape index: {}]
  %s5 = inlined_call_operand.vmem [shape: f32[2,64], index: 5, kind: output, shape index: {}]
  %s6 = sld [smem:[#allocation0]]
  $region30: #{idisc_erp_forward.31} parent=0
    _
  %s8 = ssub.s32 1, %s6
  %s9 = scalar_select 0, %s8, %s6
  %v10 = vstv %s4
  %11 = vst [vmem:[#allocation2] sm:$0x1] %v10
  // Predicated region
  $region2: #{idisc_erp_forward.31} parent=0 // pred_check
    _
  $region3: #{idisc_erp_forward.31} parent=0 // pred_check_branch
    %13 = sbr.rel (0) target = $region5
  $region4: #{idisc_erp_forward.31} parent=0 // pred_region
    _
  $region5: #{idisc_erp_forward.31} parent=0 // pred_fallthru
    _
  // Predicated region
  $region6: #{idisc_erp_forward.31} parent=0 // pred_check
    _
  $region7: #{idisc_erp_forward.31} parent=0 // pred_check_branch
    %15 = sbr.rel (0) target = $region9
  $region8: #{idisc_erp_forward.31} parent=0 // pred_region
    _
  $region9: #{idisc_erp_forward.31} parent=0 // pred_fallthru
    _
  // Predicated region
  $region10: #{idisc_erp_forward.31} parent=0 // pred_check
    _
  $region11: #{idisc_erp_forward.31} parent=0 // pred_check_branch
    %17 = sbr.rel (0) target = $region13
  $region12: #{idisc_erp_forward.31} parent=0 // pred_region
    _
  $region13: #{idisc_erp_forward.31} parent=0 // pred_fallthru
    _
  // Predicated region
  $region14: #{idisc_erp_forward.31} parent=0 // pred_check
    _
  $region15: #{idisc_erp_forward.31} parent=0 // pred_check_branch
    %19 = sbr.rel (0) target = $region17
  $region16: #{idisc_erp_forward.31} parent=0 // pred_region
    _
  $region17: #{idisc_erp_forward.31} parent=0 // pred_fallthru
    _
  // Predicated region
  $region18: #{idisc_erp_forward.31} parent=0 // pred_check
    _
  $region19: #{idisc_erp_forward.31} parent=0 // pred_check_branch
    %21 = sbr.rel (0) target = $region21
  $region20: #{idisc_erp_forward.31} parent=0 // pred_region
    _
  $region21: #{idisc_erp_forward.31} parent=0 // pred_fallthru
    _
  %v23 = vld [vmem:[%s0] sm:$0xf]
  %v24 = vld [vmem:[%s0 + $0x4] sm:$0xf]
  %v25 = vld [vmem:[%s0 + $0x8] sm:$0xf]
  %v26 = vld [vmem:[%s0 + $0xc] sm:$0xf]
  %v27 = vld [vmem:[%s0 + $0x10] sm:$0xf]
  %v28 = vld [vmem:[%s0 + $0x14] sm:$0xf]
  %v29 = vld [vmem:[%s0 + $0x18] sm:$0xf]
  %v30 = vld [vmem:[%s0 + $0x1c] sm:$0xf]
  %v31 = vld [vmem:[%s0 + $0x20] sm:$0xf]
  %v32 = vld [vmem:[%s0 + $0x24] sm:$0xf]
  %v33 = vld [vmem:[%s0 + $0x28] sm:$0xf]
  %v34 = vld [vmem:[%s0 + $0x2c] sm:$0xf]
  %v35 = vld [vmem:[%s0 + $0x30] sm:$0xf]
  %v36 = vld [vmem:[%s0 + $0x34] sm:$0xf]
  %v37 = vld [vmem:[%s0 + $0x38] sm:$0xf]
  %v38 = vld [vmem:[%s0 + $0x3c] sm:$0xf]
  %v39 = vunpack.c.l.bf16 %v23
  %v40 = vunpack.c.l.bf16 %v24
  %v41 = vunpack.c.l.bf16 %v25
  %v42 = vunpack.c.l.bf16 %v26
  %v43 = vunpack.c.l.bf16 %v27
  %v44 = vunpack.c.l.bf16 %v28
  %v45 = vunpack.c.l.bf16 %v29
  %v46 = vunpack.c.l.bf16 %v30
  %v47 = vunpack.c.l.bf16 %v31
  %v48 = vunpack.c.l.bf16 %v32
  %v49 = vunpack.c.l.bf16 %v33
  %v50 = vunpack.c.l.bf16 %v34
  %v51 = vunpack.c.l.bf16 %v35
  %v52 = vunpack.c.l.bf16 %v36
  %v53 = vunpack.c.l.bf16 %v37
  %v54 = vunpack.c.l.bf16 %v38
  %v55 = vld [vmem:[%s1] sm:$0x1]
  %v56 = vld [vmem:[%s1 + $0x1] sm:$0x1]
  %v59 = vlaneseq
  %v60 = vshrl.u32 %v59, 7
  %v61 = vsub.s32 0, %v60
  %v62 = vrot.slane %v55, %v61
  %v63 = vlaneseq
  %v64 = vshrl.u32 %v63, 7
  %v65 = vsub.s32 0, %v64
  %v66 = vrot.slane %v56, %v65
  %v69 = vadd.f32 %v39, %v62
  %v70 = vadd.f32 %v40, %v62
  %v71 = vadd.f32 %v41, %v62
  %v72 = vadd.f32 %v42, %v62
  %v73 = vadd.f32 %v43, %v62
  %v74 = vadd.f32 %v44, %v62
  %v75 = vadd.f32 %v45, %v62
  %v76 = vadd.f32 %v46, %v62
  %v77 = vadd.f32 %v47, %v66
  %v78 = vadd.f32 %v48, %v66
  %v79 = vadd.f32 %v49, %v66
  %v80 = vadd.f32 %v50, %v66
  %v81 = vadd.f32 %v51, %v66
  %v82 = vadd.f32 %v52, %v66
  %v83 = vadd.f32 %v53, %v66
  %v84 = vadd.f32 %v54, %v66
  %v85 = vld [vmem:[%s2] sm:$0xf]
  %v86 = vld [vmem:[%s2 + $0x4] sm:$0xf]
  %v87 = vpack.c.bf16 %v70, %v69
  %v88 = vpack.c.bf16 %v72, %v71
  %v89 = vpack.c.bf16 %v74, %v73
  %v90 = vpack.c.bf16 %v76, %v75
  %v91 = vpack.c.bf16 %v78, %v77
  %v92 = vpack.c.bf16 %v80, %v79
  %v93 = vpack.c.bf16 %v82, %v81
  %v94 = vpack.c.bf16 %v84, %v83
  %vm95 = vcmask 261120
  %v97 = vsel %vm95, %v87, 0
  %v100 = vsel %vm95, %v88, 0
  %v103 = vsel %vm95, %v89, 0
  %v106 = vsel %vm95, %v90, 0
  %v109 = vsel %vm95, %v85, 0
  %111 = vmatprep.subr.bf16.mxu0 0
  %112 = vmatpush1.bf16.xpose.msra.mxu0 %v109
  %113 = vmatprep.subr.bf16.mxu0 0
  %114 = vmatpush1.bf16.xpose.msra.mxu0 0
  %115 = vmatprep.subr.bf16.mxu0 0
  %116 = vmatpush1.bf16.xpose.msra.mxu0 0
  %117 = vmatprep.subr.bf16.mxu0 0
  %118 = vmatpush1.bf16.xpose.msra.mxu0 0
  %119 = vmatprep.subr.bf16.mxu0 0
  %120 = vmatpush1.bf16.xpose.msra.mxu0 0
  %121 = vmatprep.subr.bf16.mxu0 0
  %122 = vmatpush1.bf16.xpose.msra.mxu0 0
  %123 = vmatprep.subr.bf16.mxu0 0
  %124 = vmatpush1.bf16.xpose.msra.mxu0 0
  %125 = vmatprep.subr.bf16.mxu0 0
  %126 = vmatpush1.bf16.xpose.msra.mxu0 0
  %127 = vmatprep.subr.bf16.mxu0 0
  %128 = vmatpush1.bf16.xpose.msra.mxu0 0
  %129 = vmatprep.subr.bf16.mxu0 0
  %130 = vmatpush1.bf16.xpose.msra.mxu0 0
  %131 = vmatprep.subr.bf16.mxu0 0
  %132 = vmatpush1.bf16.xpose.msra.mxu0 0
  %133 = vmatprep.subr.bf16.mxu0 0
  %134 = vmatpush1.bf16.xpose.msra.mxu0 0
  %135 = vmatprep.subr.bf16.mxu0 0
  %136 = vmatpush1.bf16.xpose.msra.mxu0 0
  %137 = vmatprep.subr.bf16.mxu0 0
  %138 = vmatpush1.bf16.xpose.msra.mxu0 0
  %139 = vmatprep.subr.bf16.mxu0 0
  %140 = vmatpush1.bf16.xpose.msra.mxu0 0
  %141 = vmatprep.subr.bf16.mxu0 0
  %142 = vmatpush1.bf16.xpose.msra.mxu0 0
  %143 = vmatprep.mubr.bf16.mxu0 0
  %144 = vmatmul.mubr.bf16.gmra.mrb[0].mxu0 %v97
  %v145 = vpop.f32.mrb[0].mxu0
  %v146 = vadd.f32 0.0, %v145
  %v147 = vpop.f32.mrb[0].mxu0
  %v148 = vpop.f32.mrb[0].mxu0
  %v149 = vadd.f32 0.0, %v148
  %v150 = vpop.f32.mrb[0].mxu0
  %151 = vmatprep.mubr.bf16.mxu0 0
  %152 = vmatmul.mubr.bf16.gmra.mrb[0].mxu0 %v100
  %v153 = vpop.f32.mrb[0].mxu0
  %v154 = vadd.f32 0.0, %v153
  %v155 = vpop.f32.mrb[0].mxu0
  %v156 = vpop.f32.mrb[0].mxu0
  %v157 = vadd.f32 0.0, %v156
  %v158 = vpop.f32.mrb[0].mxu0
  %159 = vmatprep.mubr.bf16.mxu0 0
  %160 = vmatmul.mubr.bf16.gmra.mrb[0].mxu0 %v103
  %v161 = vpop.f32.mrb[0].mxu0
  %v162 = vadd.f32 0.0, %v161
  %v163 = vpop.f32.mrb[0].mxu0
  %v164 = vpop.f32.mrb[0].mxu0
  %v165 = vadd.f32 0.0, %v164
  %v166 = vpop.f32.mrb[0].mxu0
  %167 = vmatprep.mubr.bf16.mxu0 0
  %168 = vmatmul.mubr.bf16.gmra.mrb[0].mxu0 %v106
  %v169 = vpop.f32.mrb[0].mxu0
  %v170 = vadd.f32 0.0, %v169
  %v171 = vpop.f32.mrb[0].mxu0
  %v172 = vpop.f32.mrb[0].mxu0
  %v173 = vadd.f32 0.0, %v172
  %v174 = vpop.f32.mrb[0].mxu0
  %175 = vdwg.mxu0
  %v177 = vsel %vm95, %v91, 0
  %v180 = vsel %vm95, %v92, 0
  %v183 = vsel %vm95, %v93, 0
  %v186 = vsel %vm95, %v94, 0
  %v189 = vsel %vm95, %v86, 0
  %191 = vmatprep.subr.bf16.mxu0 0
  %192 = vmatpush1.bf16.xpose.msra.mxu0 %v189
  %193 = vmatprep.subr.bf16.mxu0 0
  %194 = vmatpush1.bf16.xpose.msra.mxu0 0
  %195 = vmatprep.subr.bf16.mxu0 0
  %196 = vmatpush1.bf16.xpose.msra.mxu0 0
  %197 = vmatprep.subr.bf16.mxu0 0
  %198 = vmatpush1.bf16.xpose.msra.mxu0 0
  %199 = vmatprep.subr.bf16.mxu0 0
  %200 = vmatpush1.bf16.xpose.msra.mxu0 0
  %201 = vmatprep.subr.bf16.mxu0 0
  %202 = vmatpush1.bf16.xpose.msra.mxu0 0
  %203 = vmatprep.subr.bf16.mxu0 0
  %204 = vmatpush1.bf16.xpose.msra.mxu0 0
  %205 = vmatprep.subr.bf16.mxu0 0
  %206 = vmatpush1.bf16.xpose.msra.mxu0 0
  %207 = vmatprep.subr.bf16.mxu0 0
  %208 = vmatpush1.bf16.xpose.msra.mxu0 0
  %209 = vmatprep.subr.bf16.mxu0 0
  %210 = vmatpush1.bf16.xpose.msra.mxu0 0
  %211 = vmatprep.subr.bf16.mxu0 0
  %212 = vmatpush1.bf16.xpose.msra.mxu0 0
  %213 = vmatprep.subr.bf16.mxu0 0
  %214 = vmatpush1.bf16.xpose.msra.mxu0 0
  %215 = vmatprep.subr.bf16.mxu0 0
  %216 = vmatpush1.bf16.xpose.msra.mxu0 0
  %217 = vmatprep.subr.bf16.mxu0 0
  %218 = vmatpush1.bf16.xpose.msra.mxu0 0
  %219 = vmatprep.subr.bf16.mxu0 0
  %220 = vmatpush1.bf16.xpose.msra.mxu0 0
  %221 = vmatprep.subr.bf16.mxu0 0
  %222 = vmatpush1.bf16.xpose.msra.mxu0 0
  %223 = vmatprep.mubr.bf16.mxu0 0
  %224 = vmatmul.mubr.bf16.gmra.mrb[0].mxu0 %v177
  %v225 = vpop.f32.mrb[0].mxu0
  %v226 = vadd.f32 0.0, %v225
  %v227 = vpop.f32.mrb[0].mxu0
  %v228 = vpop.f32.mrb[0].mxu0
  %v229 = vadd.f32 0.0, %v228
  %v230 = vpop.f32.mrb[0].mxu0
  %231 = vmatprep.mubr.bf16.mxu0 0
  %232 = vmatmul.mubr.bf16.gmra.mrb[0].mxu0 %v180
  %v233 = vpop.f32.mrb[0].mxu0
  %v234 = vadd.f32 0.0, %v233
  %v235 = vpop.f32.mrb[0].mxu0
  %v236 = vpop.f32.mrb[0].mxu0
  %v237 = vadd.f32 0.0, %v236
  %v238 = vpop.f32.mrb[0].mxu0
  %239 = vmatprep.mubr.bf16.mxu0 0
  %240 = vmatmul.mubr.bf16.gmra.mrb[0].mxu0 %v183
  %v241 = vpop.f32.mrb[0].mxu0
  %v242 = vadd.f32 0.0, %v241
  %v243 = vpop.f32.mrb[0].mxu0
  %v244 = vpop.f32.mrb[0].mxu0
  %v245 = vadd.f32 0.0, %v244
  %v246 = vpop.f32.mrb[0].mxu0
  %247 = vmatprep.mubr.bf16.mxu0 0
  %248 = vmatmul.mubr.bf16.gmra.mrb[0].mxu0 %v186
  %v249 = vpop.f32.mrb[0].mxu0
  %v250 = vadd.f32 0.0, %v249
  %v251 = vpop.f32.mrb[0].mxu0
  %v252 = vpop.f32.mrb[0].mxu0
  %v253 = vadd.f32 0.0, %v252
  %v254 = vpop.f32.mrb[0].mxu0
  %255 = vdwg.mxu0
  %v256 = vmul.f32 %v146, 0.17677669
  %v257 = vmul.f32 %v149, 0.17677669
  %v258 = vmul.f32 %v154, 0.17677669
  %v259 = vmul.f32 %v157, 0.17677669
  %v260 = vmul.f32 %v162, 0.17677669
  %v261 = vmul.f32 %v165, 0.17677669
  %v262 = vmul.f32 %v170, 0.17677669
  %v263 = vmul.f32 %v173, 0.17677669
  %v264 = vmul.f32 %v226, 0.17677669
  %v265 = vmul.f32 %v229, 0.17677669
  %v266 = vmul.f32 %v234, 0.17677669
  %v267 = vmul.f32 %v237, 0.17677669
  %v268 = vmul.f32 %v242, 0.17677669
  %v269 = vmul.f32 %v245, 0.17677669
  %v270 = vmul.f32 %v250, 0.17677669
  %v271 = vmul.f32 %v253, 0.17677669
  %vm272 = vcmask 64512
  %v273 = vsel %vm272, %v256, -inf
  %274 = vmax.xlane.f32.xlu0 %v273
  %v275 = vpop.xlane.xlu0 %274
  %v276 = vsel %vm272, %v257, -inf
  %277 = vmax.xlane.f32.xlu0 %v276
  %v278 = vpop.xlane.xlu0 %277
  %v279 = vsel %vm272, %v258, -inf
  %280 = vmax.xlane.f32.xlu0 %v279
  %v281 = vpop.xlane.xlu0 %280
  %v282 = vsel %vm272, %v259, -inf
  %283 = vmax.xlane.f32.xlu0 %v282
  %v284 = vpop.xlane.xlu0 %283
  %v285 = vsel %vm272, %v260, -inf
  %286 = vmax.xlane.f32.xlu0 %v285
  %v287 = vpop.xlane.xlu0 %286
  %v288 = vsel %vm272, %v261, -inf
  %289 = vmax.xlane.f32.xlu0 %v288
  %v290 = vpop.xlane.xlu0 %289
  %v291 = vsel %vm272, %v262, -inf
  %292 = vmax.xlane.f32.xlu0 %v291
  %v293 = vpop.xlane.xlu0 %292
  %v294 = vsel %vm272, %v263, -inf
  %295 = vmax.xlane.f32.xlu0 %v294
  %v296 = vpop.xlane.xlu0 %295
  %v297 = vsel %vm272, %v264, -inf
  %298 = vmax.xlane.f32.xlu0 %v297
  %v299 = vpop.xlane.xlu0 %298
  %v300 = vsel %vm272, %v265, -inf
  %301 = vmax.xlane.f32.xlu0 %v300
  %v302 = vpop.xlane.xlu0 %301
  %v303 = vsel %vm272, %v266, -inf
  %304 = vmax.xlane.f32.xlu0 %v303
  %v305 = vpop.xlane.xlu0 %304
  %v306 = vsel %vm272, %v267, -inf
  %307 = vmax.xlane.f32.xlu0 %v306
  %v308 = vpop.xlane.xlu0 %307
  %v309 = vsel %vm272, %v268, -inf
  %310 = vmax.xlane.f32.xlu0 %v309
  %v311 = vpop.xlane.xlu0 %310
  %v312 = vsel %vm272, %v269, -inf
  %313 = vmax.xlane.f32.xlu0 %v312
  %v314 = vpop.xlane.xlu0 %313
  %v315 = vsel %vm272, %v270, -inf
  %316 = vmax.xlane.f32.xlu0 %v315
  %v317 = vpop.xlane.xlu0 %316
  %v318 = vsel %vm272, %v271, -inf
  %319 = vmax.xlane.f32.xlu0 %v318
  %v320 = vpop.xlane.xlu0 %319
  %v321 = vsub.f32 %v256, %v275
  %v322 = vsub.f32 %v257, %v278
  %v323 = vsub.f32 %v258, %v281
  %v324 = vsub.f32 %v259, %v284
  %v325 = vsub.f32 %v260, %v287
  %v326 = vsub.f32 %v261, %v290
  %v327 = vsub.f32 %v262, %v293
  %v328 = vsub.f32 %v263, %v296
  %v329 = vsub.f32 %v264, %v299
  %v330 = vsub.f32 %v265, %v302
  %v331 = vsub.f32 %v266, %v305
  %v332 = vsub.f32 %v267, %v308
  %v333 = vsub.f32 %v268, %v311
  %v334 = vsub.f32 %v269, %v314
  %v335 = vsub.f32 %v270, %v317
  %v336 = vsub.f32 %v271, %v320
  %v337 = vmul.f32 %v321, 1.442695
  %v338 = vpow.pop %v337
  %v339 = vmul.f32 %v322, 1.442695
  %v340 = vpow.pop %v339
  %v341 = vmul.f32 %v323, 1.442695
  %v342 = vpow.pop %v341
  %v343 = vmul.f32 %v324, 1.442695
  %v344 = vpow.pop %v343
  %v345 = vmul.f32 %v325, 1.442695
  %v346 = vpow.pop %v345
  %v347 = vmul.f32 %v326, 1.442695
  %v348 = vpow.pop %v347
  %v349 = vmul.f32 %v327, 1.442695
  %v350 = vpow.pop %v349
  %v351 = vmul.f32 %v328, 1.442695
  %v352 = vpow.pop %v351
  %v353 = vmul.f32 %v329, 1.442695
  %v354 = vpow.pop %v353
  %v355 = vmul.f32 %v330, 1.442695
  %v356 = vpow.pop %v355
  %v357 = vmul.f32 %v331, 1.442695
  %v358 = vpow.pop %v357
  %v359 = vmul.f32 %v332, 1.442695
  %v360 = vpow.pop %v359
  %v361 = vmul.f32 %v333, 1.442695
  %v362 = vpow.pop %v361
  %v363 = vmul.f32 %v334, 1.442695
  %v364 = vpow.pop %v363
  %v365 = vmul.f32 %v335, 1.442695
  %v366 = vpow.pop %v365
  %v367 = vmul.f32 %v336, 1.442695
  %v368 = vpow.pop %v367
  %v369 = vsel %vm272, %v338, 0.0
  %370 = vadd.xlane.f32.xlu0 %v369
  %v371 = vpop.xlane.xlu0 %370
  %v372 = vsel %vm272, %v340, 0.0
  %373 = vadd.xlane.f32.xlu0 %v372
  %v374 = vpop.xlane.xlu0 %373
  %v375 = vsel %vm272, %v342, 0.0
  %376 = vadd.xlane.f32.xlu0 %v375
  %v377 = vpop.xlane.xlu0 %376
  %v378 = vsel %vm272, %v344, 0.0
  %379 = vadd.xlane.f32.xlu0 %v378
  %v380 = vpop.xlane.xlu0 %379
  %v381 = vsel %vm272, %v346, 0.0
  %382 = vadd.xlane.f32.xlu0 %v381
  %v383 = vpop.xlane.xlu0 %382
  %v384 = vsel %vm272, %v348, 0.0
  %385 = vadd.xlane.f32.xlu0 %v384
  %v386 = vpop.xlane.xlu0 %385
  %v387 = vsel %vm272, %v350, 0.0
  %388 = vadd.xlane.f32.xlu0 %v387
  %v389 = vpop.xlane.xlu0 %388
  %v390 = vsel %vm272, %v352, 0.0
  %391 = vadd.xlane.f32.xlu0 %v390
  %v392 = vpop.xlane.xlu0 %391
  %v393 = vsel %vm272, %v354, 0.0
  %394 = vadd.xlane.f32.xlu0 %v393
  %v395 = vpop.xlane.xlu0 %394
  %v396 = vsel %vm272, %v356, 0.0
  %397 = vadd.xlane.f32.xlu0 %v396
  %v398 = vpop.xlane.xlu0 %397
  %v399 = vsel %vm272, %v358, 0.0
  %400 = vadd.xlane.f32.xlu0 %v399
  %v401 = vpop.xlane.xlu0 %400
  %v402 = vsel %vm272, %v360, 0.0
  %403 = vadd.xlane.f32.xlu0 %v402
  %v404 = vpop.xlane.xlu0 %403
  %v405 = vsel %vm272, %v362, 0.0
  %406 = vadd.xlane.f32.xlu0 %v405
  %v407 = vpop.xlane.xlu0 %406
  %v408 = vsel %vm272, %v364, 0.0
  %409 = vadd.xlane.f32.xlu0 %v408
  %v410 = vpop.xlane.xlu0 %409
  %v411 = vsel %vm272, %v366, 0.0
  %412 = vadd.xlane.f32.xlu0 %v411
  %v413 = vpop.xlane.xlu0 %412
  %v414 = vsel %vm272, %v368, 0.0
  %415 = vadd.xlane.f32.xlu0 %v414
  %v416 = vpop.xlane.xlu0 %415
  %v417 = vpack.c.bf16 %v340, %v338
  %v418 = vpack.c.bf16 %v344, %v342
  %v419 = vpack.c.bf16 %v348, %v346
  %v420 = vpack.c.bf16 %v352, %v350
  %v421 = vpack.c.bf16 %v356, %v354
  %v422 = vpack.c.bf16 %v360, %v358
  %v423 = vpack.c.bf16 %v364, %v362
  %v424 = vpack.c.bf16 %v368, %v366
  %v426 = vsel %vm272, %v417, 0
  %v429 = vsel %vm272, %v418, 0
  %v432 = vsel %vm272, %v419, 0
  %v435 = vsel %vm272, %v420, 0
  %vm437 = vcmask 1043456
  %v438 = vsel %vm437, %v85, 0
  %440 = vmatprep.subr.bf16.mxu0 0
  %441 = vmatpush1.bf16.msra.mxu0 %v438
  %442 = vmatprep.subr.bf16.mxu0 0
  %443 = vmatpush1.bf16.msra.mxu0 0
  %444 = vmatprep.subr.bf16.mxu0 0
  %445 = vmatpush1.bf16.msra.mxu0 0
  %446 = vmatprep.subr.bf16.mxu0 0
  %447 = vmatpush1.bf16.msra.mxu0 0
  %448 = vmatprep.subr.bf16.mxu0 0
  %449 = vmatpush1.bf16.msra.mxu0 0
  %450 = vmatprep.subr.bf16.mxu0 0
  %451 = vmatpush1.bf16.msra.mxu0 0
  %452 = vmatprep.subr.bf16.mxu0 0
  %453 = vmatpush1.bf16.msra.mxu0 0
  %454 = vmatprep.subr.bf16.mxu0 0
  %455 = vmatpush1.bf16.msra.mxu0 0
  %456 = vmatprep.subr.bf16.mxu0 0
  %457 = vmatpush1.bf16.msra.mxu0 0
  %458 = vmatprep.subr.bf16.mxu0 0
  %459 = vmatpush1.bf16.msra.mxu0 0
  %460 = vmatprep.subr.bf16.mxu0 0
  %461 = vmatpush1.bf16.msra.mxu0 0
  %462 = vmatprep.subr.bf16.mxu0 0
  %463 = vmatpush1.bf16.msra.mxu0 0
  %464 = vmatprep.subr.bf16.mxu0 0
  %465 = vmatpush1.bf16.msra.mxu0 0
  %466 = vmatprep.subr.bf16.mxu0 0
  %467 = vmatpush1.bf16.msra.mxu0 0
  %468 = vmatprep.subr.bf16.mxu0 0
  %469 = vmatpush1.bf16.msra.mxu0 0
  %470 = vmatprep.subr.bf16.mxu0 0
  %471 = vmatpush1.bf16.msra.mxu0 0
  %472 = vmatprep.mubr.bf16.mxu0 0
  %473 = vmatmul.mubr.bf16.gmra.mrb[0].mxu0 %v426
  %v474 = vpop.f32.mrb[0].mxu0
  %v475 = vadd.f32 0.0, %v474
  %v476 = vpop.f32.mrb[0].mxu0
  %v477 = vpop.f32.mrb[0].mxu0
  %v478 = vadd.f32 0.0, %v477
  %v479 = vpop.f32.mrb[0].mxu0
  %480 = vmatprep.mubr.bf16.mxu0 0
  %481 = vmatmul.mubr.bf16.gmra.mrb[0].mxu0 %v429
  %v482 = vpop.f32.mrb[0].mxu0
  %v483 = vadd.f32 0.0, %v482
  %v484 = vpop.f32.mrb[0].mxu0
  %v485 = vpop.f32.mrb[0].mxu0
  %v486 = vadd.f32 0.0, %v485
  %v487 = vpop.f32.mrb[0].mxu0
  %488 = vmatprep.mubr.bf16.mxu0 0
  %489 = vmatmul.mubr.bf16.gmra.mrb[0].mxu0 %v432
  %v490 = vpop.f32.mrb[0].mxu0
  %v491 = vadd.f32 0.0, %v490
  %v492 = vpop.f32.mrb[0].mxu0
  %v493 = vpop.f32.mrb[0].mxu0
  %v494 = vadd.f32 0.0, %v493
  %v495 = vpop.f32.mrb[0].mxu0
  %496 = vmatprep.mubr.bf16.mxu0 0
  %497 = vmatmul.mubr.bf16.gmra.mrb[0].mxu0 %v435
  %v498 = vpop.f32.mrb[0].mxu0
  %v499 = vadd.f32 0.0, %v498
  %v500 = vpop.f32.mrb[0].mxu0
  %v501 = vpop.f32.mrb[0].mxu0
  %v502 = vadd.f32 0.0, %v501
  %v503 = vpop.f32.mrb[0].mxu0
  %504 = vdwg.mxu0
  %v506 = vsel %vm272, %v421, 0
  %v509 = vsel %vm272, %v422, 0
  %v512 = vsel %vm272, %v423, 0
  %v515 = vsel %vm272, %v424, 0
  %v517 = vsel %vm437, %v86, 0
  %519 = vmatprep.subr.bf16.mxu0 0
  %520 = vmatpush1.bf16.msra.mxu0 %v517
  %521 = vmatprep.subr.bf16.mxu0 0
  %522 = vmatpush1.bf16.msra.mxu0 0
  %523 = vmatprep.subr.bf16.mxu0 0
  %524 = vmatpush1.bf16.msra.mxu0 0
  %525 = vmatprep.subr.bf16.mxu0 0
  %526 = vmatpush1.bf16.msra.mxu0 0
  %527 = vmatprep.subr.bf16.mxu0 0
  %528 = vmatpush1.bf16.msra.mxu0 0
  %529 = vmatprep.subr.bf16.mxu0 0
  %530 = vmatpush1.bf16.msra.mxu0 0
  %531 = vmatprep.subr.bf16.mxu0 0
  %532 = vmatpush1.bf16.msra.mxu0 0
  %533 = vmatprep.subr.bf16.mxu0 0
  %534 = vmatpush1.bf16.msra.mxu0 0
  %535 = vmatprep.subr.bf16.mxu0 0
  %536 = vmatpush1.bf16.msra.mxu0 0
  %537 = vmatprep.subr.bf16.mxu0 0
  %538 = vmatpush1.bf16.msra.mxu0 0
  %539 = vmatprep.subr.bf16.mxu0 0
  %540 = vmatpush1.bf16.msra.mxu0 0
  %541 = vmatprep.subr.bf16.mxu0 0
  %542 = vmatpush1.bf16.msra.mxu0 0
  %543 = vmatprep.subr.bf16.mxu0 0
  %544 = vmatpush1.bf16.msra.mxu0 0
  %545 = vmatprep.subr.bf16.mxu0 0
  %546 = vmatpush1.bf16.msra.mxu0 0
  %547 = vmatprep.subr.bf16.mxu0 0
  %548 = vmatpush1.bf16.msra.mxu0 0
  %549 = vmatprep.subr.bf16.mxu0 0
  %550 = vmatpush1.bf16.msra.mxu0 0
  %551 = vmatprep.mubr.bf16.mxu0 0
  %552 = vmatmul.mubr.bf16.gmra.mrb[0].mxu0 %v506
  %v553 = vpop.f32.mrb[0].mxu0
  %v554 = vadd.f32 0.0, %v553
  %v555 = vpop.f32.mrb[0].mxu0
  %v556 = vpop.f32.mrb[0].mxu0
  %v557 = vadd.f32 0.0, %v556
  %v558 = vpop.f32.mrb[0].mxu0
  %559 = vmatprep.mubr.bf16.mxu0 0
  %560 = vmatmul.mubr.bf16.gmra.mrb[0].mxu0 %v509
  %v561 = vpop.f32.mrb[0].mxu0
  %v562 = vadd.f32 0.0, %v561
  %v563 = vpop.f32.mrb[0].mxu0
  %v564 = vpop.f32.mrb[0].mxu0
  %v565 = vadd.f32 0.0, %v564
  %v566 = vpop.f32.mrb[0].mxu0
  %567 = vmatprep.mubr.bf16.mxu0 0
  %568 = vmatmul.mubr.bf16.gmra.mrb[0].mxu0 %v512
  %v569 = vpop.f32.mrb[0].mxu0
  %v570 = vadd.f32 0.0, %v569
  %v571 = vpop.f32.mrb[0].mxu0
  %v572 = vpop.f32.mrb[0].mxu0
  %v573 = vadd.f32 0.0, %v572
  %v574 = vpop.f32.mrb[0].mxu0
  %575 = vmatprep.mubr.bf16.mxu0 0
  %576 = vmatmul.mubr.bf16.gmra.mrb[0].mxu0 %v515
  %v577 = vpop.f32.mrb[0].mxu0
  %v578 = vadd.f32 0.0, %v577
  %v579 = vpop.f32.mrb[0].mxu0
  %v580 = vpop.f32.mrb[0].mxu0
  %v581 = vadd.f32 0.0, %v580
  %v582 = vpop.f32.mrb[0].mxu0
  %583 = vdwg.mxu0
  %v584 = vrcp.pop %v371
  %v585 = vrcp.pop %v374
  %v586 = vrcp.pop %v377
  %v587 = vrcp.pop %v380
  %v588 = vrcp.pop %v383
  %v589 = vrcp.pop %v386
  %v590 = vrcp.pop %v389
  %v591 = vrcp.pop %v392
  %v592 = vrcp.pop %v395
  %v593 = vrcp.pop %v398
  %v594 = vrcp.pop %v401
  %v595 = vrcp.pop %v404
  %v596 = vrcp.pop %v407
  %v597 = vrcp.pop %v410
  %v598 = vrcp.pop %v413
  %v599 = vrcp.pop %v416
  %v600 = vmul.f32 %v475, %v584
  %v601 = vmul.f32 %v478, %v585
  %v602 = vmul.f32 %v483, %v586
  %v603 = vmul.f32 %v486, %v587
  %v604 = vmul.f32 %v491, %v588
  %v605 = vmul.f32 %v494, %v589
  %v606 = vmul.f32 %v499, %v590
  %v607 = vmul.f32 %v502, %v591
  %v608 = vmul.f32 %v554, %v592
  %v609 = vmul.f32 %v557, %v593
  %v610 = vmul.f32 %v562, %v594
  %v611 = vmul.f32 %v565, %v595
  %v612 = vmul.f32 %v570, %v596
  %v613 = vmul.f32 %v573, %v597
  %v614 = vmul.f32 %v578, %v598
  %v615 = vmul.f32 %v581, %v599
  %v616 = vadd.f32 %v69, %v600
  %v617 = vadd.f32 %v70, %v601
  %v618 = vadd.f32 %v71, %v602
  %v619 = vadd.f32 %v72, %v603
  %v620 = vadd.f32 %v73, %v604
  %v621 = vadd.f32 %v74, %v605
  %v622 = vadd.f32 %v75, %v606
  %v623 = vadd.f32 %v76, %v607
  %v624 = vadd.f32 %v77, %v608
  %v625 = vadd.f32 %v78, %v609
  %v626 = vadd.f32 %v79, %v610
  %v627 = vadd.f32 %v80, %v611
  %v628 = vadd.f32 %v81, %v612
  %v629 = vadd.f32 %v82, %v613
  %v630 = vadd.f32 %v83, %v614
  %v631 = vadd.f32 %v84, %v615
  %v632 = vld [vmem:[%s3] sm:$0x1]
  %v634 = vlaneseq
  %v635 = vshrl.u32 %v634, 7
  %v636 = vsub.s32 0, %v635
  %v637 = vrot.slane %v632, %v636
  %v639 = vmul.f32 %v616, %v637
  %v640 = vmul.f32 %v617, %v637
  %v641 = vmul.f32 %v618, %v637
  %v642 = vmul.f32 %v619, %v637
  %v643 = vmul.f32 %v620, %v637
  %v644 = vmul.f32 %v621, %v637
  %v645 = vmul.f32 %v622, %v637
  %v646 = vmul.f32 %v623, %v637
  %v647 = vmul.f32 %v624, %v637
  %v648 = vmul.f32 %v625, %v637
  %v649 = vmul.f32 %v626, %v637
  %v650 = vmul.f32 %v627, %v637
  %v651 = vmul.f32 %v628, %v637
  %v652 = vmul.f32 %v629, %v637
  %v653 = vmul.f32 %v630, %v637
  %v654 = vmul.f32 %v631, %v637
  %v655 = vsel %vm95, %v639, 0.0
  %656 = vadd.xlane.f32.xlu0 %v655
  %v657 = vpop.xlane.xlu0 %656
  %v658 = vsel %vm95, %v640, 0.0
  %659 = vadd.xlane.f32.xlu0 %v658
  %v660 = vpop.xlane.xlu0 %659
  %v661 = vsel %vm95, %v641, 0.0
  %662 = vadd.xlane.f32.xlu0 %v661
  %v663 = vpop.xlane.xlu0 %662
  %v664 = vsel %vm95, %v642, 0.0
  %665 = vadd.xlane.f32.xlu0 %v664
  %v666 = vpop.xlane.xlu0 %665
  %v667 = vsel %vm95, %v643, 0.0
  %668 = vadd.xlane.f32.xlu0 %v667
  %v669 = vpop.xlane.xlu0 %668
  %v670 = vsel %vm95, %v644, 0.0
  %671 = vadd.xlane.f32.xlu0 %v670
  %v672 = vpop.xlane.xlu0 %671
  %v673 = vsel %vm95, %v645, 0.0
  %674 = vadd.xlane.f32.xlu0 %v673
  %v675 = vpop.xlane.xlu0 %674
  %v676 = vsel %vm95, %v646, 0.0
  %677 = vadd.xlane.f32.xlu0 %v676
  %v678 = vpop.xlane.xlu0 %677
  %v679 = vsel %vm95, %v647, 0.0
  %680 = vadd.xlane.f32.xlu0 %v679
  %v681 = vpop.xlane.xlu0 %680
  %v682 = vsel %vm95, %v648, 0.0
  %683 = vadd.xlane.f32.xlu0 %v682
  %v684 = vpop.xlane.xlu0 %683
  %v685 = vsel %vm95, %v649, 0.0
  %686 = vadd.xlane.f32.xlu0 %v685
  %v687 = vpop.xlane.xlu0 %686
  %v688 = vsel %vm95, %v650, 0.0
  %689 = vadd.xlane.f32.xlu0 %v688
  %v690 = vpop.xlane.xlu0 %689
  %v691 = vsel %vm95, %v651, 0.0
  %692 = vadd.xlane.f32.xlu0 %v691
  %v693 = vpop.xlane.xlu0 %692
  %v694 = vsel %vm95, %v652, 0.0
  %695 = vadd.xlane.f32.xlu0 %v694
  %v696 = vpop.xlane.xlu0 %695
  %v697 = vsel %vm95, %v653, 0.0
  %698 = vadd.xlane.f32.xlu0 %v697
  %v699 = vpop.xlane.xlu0 %698
  %v700 = vsel %vm95, %v654, 0.0
  %701 = vadd.xlane.f32.xlu0 %v700
  %v702 = vpop.xlane.xlu0 %701
  %v703 = vld [vmem:[#allocation2] sm:$0x1]
  %v705 = vlaneseq
  %v706 = vshrl.u32 %v705, 7
  %v707 = vsub.s32 0, %v706
  %v708 = vrot.slane %v703, %v707
  %709 = vset.pattern.permute.xlu0 0
  %710 = vperm.xlu0 %709, %v708
  %v711 = vpop.permute.xlu0 %710
  %v713 = vadd.f32 %v657, %v711
  %v714 = vadd.f32 %v660, %v711
  %v715 = vadd.f32 %v663, %v711
  %v716 = vadd.f32 %v666, %v711
  %v717 = vadd.f32 %v669, %v711
  %v718 = vadd.f32 %v672, %v711
  %v719 = vadd.f32 %v675, %v711
  %v720 = vadd.f32 %v678, %v711
  %v721 = vadd.f32 %v681, %v711
  %v722 = vadd.f32 %v684, %v711
  %v723 = vadd.f32 %v687, %v711
  %v724 = vadd.f32 %v690, %v711
  %v725 = vadd.f32 %v693, %v711
  %v726 = vadd.f32 %v696, %v711
  %v727 = vadd.f32 %v699, %v711
  %v728 = vadd.f32 %v702, %v711
  %v745 = vlaneseq
  %v746 = vand.u32 %v745, 127
  %v747 = vlaneseq
  %v748 = vshrl.u32 %v747, 7
  %v749 = vsub.s32 %v746, %v748
  %v750 = vrot.slane %v713, %v749
  %v751 = vadd.s32 %v746, 4294967288
  %v752 = vlaneseq
  %v753 = vshrl.u32 %v752, 7
  %v754 = vsub.s32 %v751, %v753
  %v755 = vrot.slane %v714, %v754
  %vm756 = vcmask 130112
  %v757 = vsel %vm756, %v755, %v750
  %v758 = vadd.s32 %v746, 4294967280
  %v759 = vlaneseq
  %v760 = vshrl.u32 %v759, 7
  %v761 = vsub.s32 %v758, %v760
  %v762 = vrot.slane %v715, %v761
  %vm763 = vcmask 195712
  %v764 = vsel %vm763, %v762, %v757
  %v765 = vadd.s32 %v746, 4294967272
  %v766 = vlaneseq
  %v767 = vshrl.u32 %v766, 7
  %v768 = vsub.s32 %v765, %v767
  %v769 = vrot.slane %v716, %v768
  %vm770 = vcmask 261312
  %v771 = vsel %vm770, %v769, %v764
  %v772 = vadd.s32 %v746, 4294967264
  %v773 = vlaneseq
  %v774 = vshrl.u32 %v773, 7
  %v775 = vsub.s32 %v772, %v774
  %v776 = vrot.slane %v717, %v775
  %vm777 = vcmask 326912
  %v778 = vsel %vm777, %v776, %v771
  %v779 = vadd.s32 %v746, 4294967256
  %v780 = vlaneseq
  %v781 = vshrl.u32 %v780, 7
  %v782 = vsub.s32 %v779, %v781
  %v783 = vrot.slane %v718, %v782
  %vm784 = vcmask 392512
  %v785 = vsel %vm784, %v783, %v778
  %v786 = vadd.s32 %v746, 4294967248
  %v787 = vlaneseq
  %v788 = vshrl.u32 %v787, 7
  %v789 = vsub.s32 %v786, %v788
  %v790 = vrot.slane %v719, %v789
  %vm791 = vcmask 458112
  %v792 = vsel %vm791, %v790, %v785
  %v793 = vadd.s32 %v746, 4294967240
  %v794 = vlaneseq
  %v795 = vshrl.u32 %v794, 7
  %v796 = vsub.s32 %v793, %v795
  %v797 = vrot.slane %v720, %v796
  %vm798 = vcmask 523712
  %v799 = vsel %vm798, %v797, %v792
  %v800 = vlaneseq
  %v801 = vshrl.u32 %v800, 7
  %v802 = vsub.s32 %v746, %v801
  %v803 = vrot.slane %v721, %v802
  %v804 = vlaneseq
  %v805 = vshrl.u32 %v804, 7
  %v806 = vsub.s32 %v751, %v805
  %v807 = vrot.slane %v722, %v806
  %v808 = vsel %vm756, %v807, %v803
  %v809 = vlaneseq
  %v810 = vshrl.u32 %v809, 7
  %v811 = vsub.s32 %v758, %v810
  %v812 = vrot.slane %v723, %v811
  %v813 = vsel %vm763, %v812, %v808
  %v814 = vlaneseq
  %v815 = vshrl.u32 %v814, 7
  %v816 = vsub.s32 %v765, %v815
  %v817 = vrot.slane %v724, %v816
  %v818 = vsel %vm770, %v817, %v813
  %v819 = vlaneseq
  %v820 = vshrl.u32 %v819, 7
  %v821 = vsub.s32 %v772, %v820
  %v822 = vrot.slane %v725, %v821
  %v823 = vsel %vm777, %v822, %v818
  %v824 = vlaneseq
  %v825 = vshrl.u32 %v824, 7
  %v826 = vsub.s32 %v779, %v825
  %v827 = vrot.slane %v726, %v826
  %v828 = vsel %vm784, %v827, %v823
  %v829 = vlaneseq
  %v830 = vshrl.u32 %v829, 7
  %v831 = vsub.s32 %v786, %v830
  %v832 = vrot.slane %v727, %v831
  %v833 = vsel %vm791, %v832, %v828
  %v834 = vlaneseq
  %v835 = vshrl.u32 %v834, 7
  %v836 = vsub.s32 %v793, %v835
  %v837 = vrot.slane %v728, %v836
  %v838 = vsel %vm798, %v837, %v833
  %vm839 = vcmask 1041409
  %v840 = vsel %vm839, %v838, %v799
  %vm842 = vcmask 517120
  %843 = vst.msk [vmem:[%s5] sm:$0x3] %vm842, %v840
  // Predicated region
  $region22: #{idisc_erp_forward.31} parent=0 // pred_check
    _
  $region23: #{idisc_erp_forward.31} parent=0 // pred_check_branch
    %845 = sbr.rel (0) target = $region25
  $region24: #{idisc_erp_forward.31} parent=0 // pred_region
    _
  $region25: #{idisc_erp_forward.31} parent=0 // pred_fallthru
    _
  // Predicated region
  $region26: #{idisc_erp_forward.31} parent=0 // pred_check
    _
  $region27: #{idisc_erp_forward.31} parent=0 // pred_check_branch
    %847 = sbr.rel (0) target = $region29
  $region28: #{idisc_erp_forward.31} parent=0 // pred_region
    _
  $region29: #{idisc_erp_forward.31} parent=0 // pred_fallthru
    _

// kernel: idisc_erp_forward.35
$region0: #{idisc_erp_forward.35}
  #allocation0 [shape = 'u32[]', space=smem, size = 0x4, offset = 0x4, fixed_abs, tag = 'smem constant byte address 0x4 - core index']
  #allocation1 [shape = 'u32[144,128]{1,0:T(1,128)}', space=vmem, size = 0x12000, scoped, tag = 'internal scratch']
  %s0 = inlined_call_operand.vmem [shape: bf16[16,8], index: 0, kind: input, shape index: {}]
  %s1 = inlined_call_operand.vmem [shape: bf16[8,8], index: 1, kind: input, shape index: {}]
  %s2 = inlined_call_operand.vmem [shape: f32[1,8], index: 2, kind: input, shape index: {}]
  %s3 = inlined_call_operand.vmem [shape: f32[16,8], index: 3, kind: output, shape index: {}]
  %s4 = sld [smem:[#allocation0]]
  $region22: #{idisc_erp_forward.35} parent=0
    _
  %s6 = ssub.s32 1, %s4
  %s7 = scalar_select 0, %s6, %s4
  // Predicated region
  $region2: #{idisc_erp_forward.35} parent=0 // pred_check
    _
  $region3: #{idisc_erp_forward.35} parent=0 // pred_check_branch
    %9 = sbr.rel (0) target = $region5
  $region4: #{idisc_erp_forward.35} parent=0 // pred_region
    _
  $region5: #{idisc_erp_forward.35} parent=0 // pred_fallthru
    _
  // Predicated region
  $region6: #{idisc_erp_forward.35} parent=0 // pred_check
    _
  $region7: #{idisc_erp_forward.35} parent=0 // pred_check_branch
    %11 = sbr.rel (0) target = $region9
  $region8: #{idisc_erp_forward.35} parent=0 // pred_region
    _
  $region9: #{idisc_erp_forward.35} parent=0 // pred_fallthru
    _
  // Predicated region
  $region10: #{idisc_erp_forward.35} parent=0 // pred_check
    _
  $region11: #{idisc_erp_forward.35} parent=0 // pred_check_branch
    %13 = sbr.rel (0) target = $region13
  $region12: #{idisc_erp_forward.35} parent=0 // pred_region
    _
  $region13: #{idisc_erp_forward.35} parent=0 // pred_fallthru
    _
  %v15 = vld [vmem:[%s0] sm:$0xf]
  %v16 = vld [vmem:[%s0 + $0x4] sm:$0xf]
  %v17 = vld [vmem:[%s1] sm:$0xf]
  %v18 = vld [vmem:[%s2] sm:$0x1]
  %v20 = vlaneseq
  %v21 = vshrl.u32 %v20, 7
  %v22 = vsub.s32 0, %v21
  %v23 = vrot.slane %v18, %v22
  %v27 = vunpack.c.l.b16 %v15
  %v28 = vunpack.c.l.b16 %v16
  %v29 = vpack.c.b16 %v28, %v27
  %vm30 = vcmask 64512
  %v32 = vsel %vm30, %v29, 0
  %vm34 = vcmask 1043456
  %v36 = vsel %vm34, %v17, 0
  %38 = vmatprep.subr.bf16.mxu0 0
  %39 = vmatpush1.bf16.msra.mxu0 %v36
  %40 = vmatprep.subr.bf16.mxu0 0
  %41 = vmatpush1.bf16.msra.mxu0 0
  %42 = vmatprep.subr.bf16.mxu0 0
  %43 = vmatpush1.bf16.msra.mxu0 0
  %44 = vmatprep.subr.bf16.mxu0 0
  %45 = vmatpush1.bf16.msra.mxu0 0
  %46 = vmatprep.subr.bf16.mxu0 0
  %47 = vmatpush1.bf16.msra.mxu0 0
  %48 = vmatprep.subr.bf16.mxu0 0
  %49 = vmatpush1.bf16.msra.mxu0 0
  %50 = vmatprep.subr.bf16.mxu0 0
  %51 = vmatpush1.bf16.msra.mxu0 0
  %52 = vmatprep.subr.bf16.mxu0 0
  %53 = vmatpush1.bf16.msra.mxu0 0
  %54 = vmatprep.subr.bf16.mxu0 0
  %55 = vmatpush1.bf16.msra.mxu0 0
  %56 = vmatprep.subr.bf16.mxu0 0
  %57 = vmatpush1.bf16.msra.mxu0 0
  %58 = vmatprep.subr.bf16.mxu0 0
  %59 = vmatpush1.bf16.msra.mxu0 0
  %60 = vmatprep.subr.bf16.mxu0 0
  %61 = vmatpush1.bf16.msra.mxu0 0
  %62 = vmatprep.subr.bf16.mxu0 0
  %63 = vmatpush1.bf16.msra.mxu0 0
  %64 = vmatprep.subr.bf16.mxu0 0
  %65 = vmatpush1.bf16.msra.mxu0 0
  %66 = vmatprep.subr.bf16.mxu0 0
  %67 = vmatpush1.bf16.msra.mxu0 0
  %68 = vmatprep.subr.bf16.mxu0 0
  %69 = vmatpush1.bf16.msra.mxu0 0
  %70 = vmatprep.mubr.bf16.mxu0 0
  %71 = vmatmul.mubr.bf16.gmra.mrb[0].mxu0 %v32
  %v72 = vpop.f32.mrb[0].mxu0
  %v73 = vadd.f32 %v23, %v72
  %v74 = vpop.f32.mrb[0].mxu0
  %v75 = vpop.f32.mrb[0].mxu0
  %v76 = vadd.f32 %v23, %v75
  %v77 = vpop.f32.mrb[0].mxu0
  %78 = vdwg.mxu0
  %79 = vst.msk [vmem:[%s3] sm:$0xff] %vm30, %v73
  %80 = vst.msk [vmem:[%s3 + $0x8] sm:$0xff] %vm30, %v76
  // Predicated region
  $region14: #{idisc_erp_forward.35} parent=0 // pred_check
    _
  $region15: #{idisc_erp_forward.35} parent=0 // pred_check_branch
    %82 = sbr.rel (0) target = $region17
  $region16: #{idisc_erp_forward.35} parent=0 // pred_region
    _
  $region17: #{idisc_erp_forward.35} parent=0 // pred_fallthru
    _
  // Predicated region
  $region18: #{idisc_erp_forward.35} parent=0 // pred_check
    _
  $region19: #{idisc_erp_forward.35} parent=0 // pred_check_branch
    %84 = sbr.rel (0) target = $region21
  $region20: #{idisc_erp_forward.35} parent=0 // pred_region
    _
  $region21: #{idisc_erp_forward.35} parent=0 // pred_fallthru
    _

// kernel: idisc_erp_forward.36
$region0: #{idisc_erp_forward.36}
  #allocation0 [shape = 'u32[]', space=smem, size = 0x4, offset = 0x4, fixed_abs, tag = 'smem constant byte address 0x4 - core index']
  #allocation1 [shape = 'u32[144,128]{1,0:T(1,128)}', space=vmem, size = 0x12000, scoped, tag = 'internal scratch']
  %s0 = inlined_call_operand.vmem [shape: bf16[16,8], index: 0, kind: input, shape index: {}]
  %s1 = inlined_call_operand.vmem [shape: f32[8,128], index: 1, kind: input, shape index: {}]
  %s2 = inlined_call_operand.vmem [shape: f32[16,128], index: 2, kind: output, shape index: {}]
  %s3 = sld [smem:[#allocation0]]
  $region18: #{idisc_erp_forward.36} parent=0
    _
  %s5 = ssub.s32 1, %s3
  %s6 = scalar_select 0, %s5, %s3
  // Predicated region
  $region2: #{idisc_erp_forward.36} parent=0 // pred_check
    _
  $region3: #{idisc_erp_forward.36} parent=0 // pred_check_branch
    %8 = sbr.rel (0) target = $region5
  $region4: #{idisc_erp_forward.36} parent=0 // pred_region
    _
  $region5: #{idisc_erp_forward.36} parent=0 // pred_fallthru
    _
  // Predicated region
  $region6: #{idisc_erp_forward.36} parent=0 // pred_check
    _
  $region7: #{idisc_erp_forward.36} parent=0 // pred_check_branch
    %10 = sbr.rel (0) target = $region9
  $region8: #{idisc_erp_forward.36} parent=0 // pred_region
    _
  $region9: #{idisc_erp_forward.36} parent=0 // pred_fallthru
    _
  %v12 = vld [vmem:[%s1] sm:$0xff]
  %v13 = vld [vmem:[%s0] sm:$0xf]
  %v14 = vld [vmem:[%s0 + $0x4] sm:$0xf]
  %v15 = vpack.c.bf16 %v12, %v12
  %v18 = vunpack.c.l.b16 %v13
  %v19 = vunpack.c.l.b16 %v14
  %v20 = vpack.c.b16 %v19, %v18
  %vm21 = vcmask 64512
  %v23 = vsel %vm21, %v20, 0
  %vm25 = vcmask 1043456
  %v27 = vsel %vm25, %v15, 0
  %29 = vmatprep.subr.bf16.mxu0 0
  %30 = vmatpush1.bf16.msra.mxu0 %v27
  %31 = vmatprep.subr.bf16.mxu0 0
  %32 = vmatpush1.bf16.msra.mxu0 0
  %33 = vmatprep.subr.bf16.mxu0 0
  %34 = vmatpush1.bf16.msra.mxu0 0
  %35 = vmatprep.subr.bf16.mxu0 0
  %36 = vmatpush1.bf16.msra.mxu0 0
  %37 = vmatprep.subr.bf16.mxu0 0
  %38 = vmatpush1.bf16.msra.mxu0 0
  %39 = vmatprep.subr.bf16.mxu0 0
  %40 = vmatpush1.bf16.msra.mxu0 0
  %41 = vmatprep.subr.bf16.mxu0 0
  %42 = vmatpush1.bf16.msra.mxu0 0
  %43 = vmatprep.subr.bf16.mxu0 0
  %44 = vmatpush1.bf16.msra.mxu0 0
  %45 = vmatprep.subr.bf16.mxu0 0
  %46 = vmatpush1.bf16.msra.mxu0 0
  %47 = vmatprep.subr.bf16.mxu0 0
  %48 = vmatpush1.bf16.msra.mxu0 0
  %49 = vmatprep.subr.bf16.mxu0 0
  %50 = vmatpush1.bf16.msra.mxu0 0
  %51 = vmatprep.subr.bf16.mxu0 0
  %52 = vmatpush1.bf16.msra.mxu0 0
  %53 = vmatprep.subr.bf16.mxu0 0
  %54 = vmatpush1.bf16.msra.mxu0 0
  %55 = vmatprep.subr.bf16.mxu0 0
  %56 = vmatpush1.bf16.msra.mxu0 0
  %57 = vmatprep.subr.bf16.mxu0 0
  %58 = vmatpush1.bf16.msra.mxu0 0
  %59 = vmatprep.subr.bf16.mxu0 0
  %60 = vmatpush1.bf16.msra.mxu0 0
  %61 = vmatprep.mubr.bf16.mxu0 0
  %62 = vmatmul.mubr.bf16.gmra.mrb[0].mxu0 %v23
  %v63 = vpop.f32.mrb[0].mxu0
  %v64 = vadd.f32 0.0, %v63
  %v65 = vpop.f32.mrb[0].mxu0
  %v66 = vpop.f32.mrb[0].mxu0
  %v67 = vadd.f32 0.0, %v66
  %v68 = vpop.f32.mrb[0].mxu0
  %69 = vdwg.mxu0
  %70 = vst [vmem:[%s2] sm:$0xff] %v64
  %71 = vst [vmem:[%s2 + $0x8] sm:$0xff] %v67
  // Predicated region
  $region10: #{idisc_erp_forward.36} parent=0 // pred_check
    _
  $region11: #{idisc_erp_forward.36} parent=0 // pred_check_branch
    %73 = sbr.rel (0) target = $region13
  $region12: #{idisc_erp_forward.36} parent=0 // pred_region
    _
  $region13: #{idisc_erp_forward.36} parent=0 // pred_fallthru
    _
  // Predicated region
  $region14: #{idisc_erp_forward.36} parent=0 // pred_check
    _
  $region15: #{idisc_erp_forward.36} parent=0 // pred_check_branch
    %75 = sbr.rel (0) target = $region17
  $region16: #{idisc_erp_forward.36} parent=0 // pred_region
    _
  $region17: #{idisc_erp_forward.36} parent=0 // pred_fallthru
    _

// kernel: idisc_erp_forward.37
$region0: #{idisc_erp_forward.37}
  #allocation0 [shape = 'u32[]', space=smem, size = 0x4, offset = 0x4, fixed_abs, tag = 'smem constant byte address 0x4 - core index']
  #allocation1 [shape = 'u32[144,128]{1,0:T(1,128)}', space=vmem, size = 0x12000, scoped, tag = 'internal scratch']
  %s0 = inlined_call_operand.vmem [shape: bf16[32,8], index: 0, kind: input, shape index: {}]
  %s1 = inlined_call_operand.vmem [shape: bf16[8,16], index: 1, kind: input, shape index: {}]
  %s2 = inlined_call_operand.vmem [shape: f32[1,16], index: 2, kind: input, shape index: {}]
  %s3 = inlined_call_operand.hbm [shape: f32[32,16], index: 3, kind: output, shape index: {}]
  %s4 = sld [smem:[#allocation0]]
  $region22: #{idisc_erp_forward.37} parent=0
    _
  %s6 = ssub.s32 1, %s4
  %s7 = scalar_select 0, %s6, %s4
  $region1: #{idisc_erp_forward.37} parent=0
    #allocation2 [shape = 'u8[16384]{0}', space=vmem, size = 0x4000, scoped, tag = 'output window, operand 0, single buffered']
    #allocation3 [shape = 's32[1]{0}', space=sflag, size = 0x4, scoped, tag = 'scoped memory for idisc_erp_forward.37']
    %8 = vsyncpa [#allocation3], 0
    // Predicated region
    $region2: #{idisc_erp_forward.37} parent=1 // pred_check
      _
    $region3: #{idisc_erp_forward.37} parent=1 // pred_check_branch
      %10 = sbr.rel (0) target = $region5
    $region4: #{idisc_erp_forward.37} parent=1 // pred_region
      _
    $region5: #{idisc_erp_forward.37} parent=1 // pred_fallthru
      _
    // Predicated region
    $region6: #{idisc_erp_forward.37} parent=1 // pred_check
      _
    $region7: #{idisc_erp_forward.37} parent=1 // pred_check_branch
      %12 = sbr.rel (0) target = $region9
    $region8: #{idisc_erp_forward.37} parent=1 // pred_region
      _
    $region9: #{idisc_erp_forward.37} parent=1 // pred_fallthru
      _
    // Predicated region
    $region10: #{idisc_erp_forward.37} parent=1 // pred_check
      _
    $region11: #{idisc_erp_forward.37} parent=1 // pred_check_branch
      %14 = sbr.rel (0) target = $region13
    $region12: #{idisc_erp_forward.37} parent=1 // pred_region
      _
    $region13: #{idisc_erp_forward.37} parent=1 // pred_fallthru
      _
    %v16 = vld [vmem:[%s0] sm:$0xf]
    %v17 = vld [vmem:[%s0 + $0x4] sm:$0xf]
    %v18 = vld [vmem:[%s0 + $0x8] sm:$0xf]
    %v19 = vld [vmem:[%s0 + $0xc] sm:$0xf]
    %v20 = vld [vmem:[%s1] sm:$0xf]
    %v21 = vld [vmem:[%s2] sm:$0x1]
    %v23 = vlaneseq
    %v24 = vshrl.u32 %v23, 7
    %v25 = vsub.s32 0, %v24
    %v26 = vrot.slane %v21, %v25
    %v32 = vunpack.c.l.b16 %v16
    %v33 = vunpack.c.l.b16 %v17
    %v34 = vunpack.c.l.b16 %v18
    %v35 = vunpack.c.l.b16 %v19
    %v36 = vpack.c.b16 %v33, %v32
    %v37 = vpack.c.b16 %v35, %v34
    %vm38 = vcmask 64512
    %v40 = vsel %vm38, %v36, 0
    %v43 = vsel %vm38, %v37, 0
    %vm45 = vcmask 1043456
    %v47 = vsel %vm45, %v20, 0
    %49 = vmatprep.subr.bf16.mxu0 0
    %50 = vmatpush1.bf16.msra.mxu0 %v47
    %51 = vmatprep.subr.bf16.mxu0 0
    %52 = vmatpush1.bf16.msra.mxu0 0
    %53 = vmatprep.subr.bf16.mxu0 0
    %54 = vmatpush1.bf16.msra.mxu0 0
    %55 = vmatprep.subr.bf16.mxu0 0
    %56 = vmatpush1.bf16.msra.mxu0 0
    %57 = vmatprep.subr.bf16.mxu0 0
    %58 = vmatpush1.bf16.msra.mxu0 0
    %59 = vmatprep.subr.bf16.mxu0 0
    %60 = vmatpush1.bf16.msra.mxu0 0
    %61 = vmatprep.subr.bf16.mxu0 0
    %62 = vmatpush1.bf16.msra.mxu0 0
    %63 = vmatprep.subr.bf16.mxu0 0
    %64 = vmatpush1.bf16.msra.mxu0 0
    %65 = vmatprep.subr.bf16.mxu0 0
    %66 = vmatpush1.bf16.msra.mxu0 0
    %67 = vmatprep.subr.bf16.mxu0 0
    %68 = vmatpush1.bf16.msra.mxu0 0
    %69 = vmatprep.subr.bf16.mxu0 0
    %70 = vmatpush1.bf16.msra.mxu0 0
    %71 = vmatprep.subr.bf16.mxu0 0
    %72 = vmatpush1.bf16.msra.mxu0 0
    %73 = vmatprep.subr.bf16.mxu0 0
    %74 = vmatpush1.bf16.msra.mxu0 0
    %75 = vmatprep.subr.bf16.mxu0 0
    %76 = vmatpush1.bf16.msra.mxu0 0
    %77 = vmatprep.subr.bf16.mxu0 0
    %78 = vmatpush1.bf16.msra.mxu0 0
    %79 = vmatprep.subr.bf16.mxu0 0
    %80 = vmatpush1.bf16.msra.mxu0 0
    %81 = vmatprep.mubr.bf16.mxu0 0
    %82 = vmatmul.mubr.bf16.gmra.mrb[0].mxu0 %v40
    %v83 = vpop.f32.mrb[0].mxu0
    %v84 = vadd.f32 %v26, %v83
    %v85 = vpop.f32.mrb[0].mxu0
    %v86 = vpop.f32.mrb[0].mxu0
    %v87 = vadd.f32 %v26, %v86
    %v88 = vpop.f32.mrb[0].mxu0
    %89 = vmatprep.mubr.bf16.mxu0 0
    %90 = vmatmul.mubr.bf16.gmra.mrb[0].mxu0 %v43
    %v91 = vpop.f32.mrb[0].mxu0
    %v92 = vadd.f32 %v26, %v91
    %v93 = vpop.f32.mrb[0].mxu0
    %v94 = vpop.f32.mrb[0].mxu0
    %v95 = vadd.f32 %v26, %v94
    %v96 = vpop.f32.mrb[0].mxu0
    %97 = vdwg.mxu0
    %vm98 = vcmask 130048
    %99 = vst.msk [vmem:[#allocation2] sm:$0xff] %vm98, %v84
    %100 = vst.msk [vmem:[#allocation2 + $0x8] sm:$0xff] %vm98, %v87
    %101 = vst.msk [vmem:[#allocation2 + $0x10] sm:$0xff] %vm98, %v92
    %102 = vst.msk [vmem:[#allocation2 + $0x18] sm:$0xff] %vm98, %v95
    // Predicated region
    $region14: #{idisc_erp_forward.37} parent=1 // pred_check
      _
    $region15: #{idisc_erp_forward.37} parent=1 // pred_check_branch
      %104 = sbr.rel (0) target = $region17
    $region16: #{idisc_erp_forward.37} parent=1 // pred_region
      %s106 = ssub.s32 512, 512
      %107 = vsyncadd [#allocation3], %s106
      %s108 = sshll.u32 [#allocation2], 4
      %s109 = int_to_ptr.vmem [resolvable:$true] %s108
      %114 = dma.vmem_to_hbm [thread:$0]  %s109, 512, %s3, [#allocation3], 128, 128, 8
    $region17: #{idisc_erp_forward.37} parent=1 // pred_fallthru
      _
    // Predicated region
    $region18: #{idisc_erp_forward.37} parent=1 // pred_check
      _
    $region19: #{idisc_erp_forward.37} parent=1 // pred_check_branch
      %116 = sbr.rel (0) target = $region21
    $region20: #{idisc_erp_forward.37} parent=1 // pred_region
      %117 = dma.done [#allocation3], 512
    $region21: #{idisc_erp_forward.37} parent=1 // pred_fallthru
      _
    %118 = vsyncpa [#allocation3], 1

</llo_original>
